<compile_context>
chip_gen: v6e
topology: v6e:2x2x1
jax: 0.10.0
libtpu: 0.0.40
codegen_flags: <defaults>
</compile_context>

<pallas_src>
import functools

import jax
import jax.numpy as jnp
from jax.experimental import pallas as pl
from jax.experimental.pallas import tpu as pltpu

EPS = 1e-10
F32 = jnp.float32
BF16 = jnp.bfloat16

_ROW_ALIGN = 16  # sublane alignment safe for bf16 (packed) blocks


# ----------------------------------------------------------------------------
# tiling / padding helpers
# ----------------------------------------------------------------------------
def _round_up(x, m):
    return (x + m - 1) // m * m


def _row_tiling(n, cap=512):
    """Pick (row_tile, padded_rows).

    row_tile is a multiple of _ROW_ALIGN and <= cap, padded_rows % row_tile == 0.
    When n is large enough we always produce >= 2 blocks so
    dimension_semantics=('parallel',) can shard across v7x's two TensorCores.
    If no good divisor exists we pad rows up (padded rows are sliced off by the
    caller) instead of collapsing to a single giant block.
    """
    a = _ROW_ALIGN
    n_a = _round_up(max(n, a), a)
    cap_a = max(a, cap - cap % a)
    if n_a <= cap_a:
        if n_a >= 32:
            half = _round_up((n_a + 1) // 2, a)
            return half, 2 * half          # two parallel blocks
        return n_a, n_a                    # too small to split
    t = cap_a
    best = a
    while t >= a:
        if n_a % t == 0:
            best = t
            break
        t -= a
    if best >= cap_a // 2:
        return best, n_a                   # good divisor, no padding
    return cap_a, _round_up(n_a, cap_a)    # pad up to near-cap tiles


def _pad_rows(x, n_pad):
    n = x.shape[0]
    if n == n_pad:
        return x
    pad = [(0, n_pad - n)] + [(0, 0)] * (x.ndim - 1)
    return jnp.pad(x, pad)


def _rep_spec(shape):
    nd = len(shape)
    return pl.BlockSpec(shape, lambda i, _nd=nd: (0,) * _nd)


# ----------------------------------------------------------------------------
# Kernel 1: fused 2-layer MLP (Linear -> ReLU -> Linear), row-tiled
# ----------------------------------------------------------------------------
def _mlp2_kernel(x_ref, w1_ref, b1_ref, w2_ref, b2_ref, o_ref):
    x = x_ref[...]                                                  # (tn, K) bf16
    h = jnp.dot(x, w1_ref[...], preferred_element_type=F32) + b1_ref[...]
    h = jnp.maximum(h, 0.0)
    y = jnp.dot(h.astype(BF16), w2_ref[...], preferred_element_type=F32) + b2_ref[...]
    o_ref[...] = y.astype(o_ref.dtype)


def mlp2(x, p, *, row_cap=1024):
    """x: (N, K) bf16 -> (N, M) bf16 with p = {w1 (K,H) bf16, b1, w2 (H,M) bf16, b2}."""
    n, k = x.shape
    h = p["w1"].shape[1]
    m = p["w2"].shape[1]
    tn, n_pad = _row_tiling(n, row_cap)
    xp = _pad_rows(x, n_pad)

    flops = 2 * n_pad * (k * h + h * m)
    bytes_accessed = 2 * n_pad * (k + m) + 2 * (k * h + h * m) + 4 * (h + m)

    out = pl.pallas_call(
        _mlp2_kernel,
        grid=(n_pad // tn,),
        in_specs=[
            pl.BlockSpec((tn, k), lambda i: (i, 0)),
            _rep_spec((k, h)),
            _rep_spec((1, h)),
            _rep_spec((h, m)),
            _rep_spec((1, m)),
        ],
        out_specs=pl.BlockSpec((tn, m), lambda i: (i, 0)),
        out_shape=jax.ShapeDtypeStruct((n_pad, m), BF16),
        compiler_params=pltpu.CompilerParams(dimension_semantics=("parallel",)),
        cost_estimate=pl.CostEstimate(flops=flops, transcendentals=0,
                                      bytes_accessed=bytes_accessed),
    )(xp, p["w1"], p["b1"], p["w2"], p["b2"])
    return out[:n]


# ----------------------------------------------------------------------------
# Kernel 2: fused attention + normalization + weighted sum + Aggregator(Linear+ReLU)
#   score = MLP2_attn([feats, ctx])     (single K=2D matmul, lane concat)
#   w     = exp(score)*mask / (sum_L exp(score)*mask + eps)   (stabilised, exact)
#   out   = ReLU( (sum_L w * feats) @ Wg + bg )
# Scores (lane widths 1 / L) never leave VMEM.  Row-tiled over N.
# ----------------------------------------------------------------------------
def _attn_aggr_kernel(f_ref, c_ref, m_ref, wa1_ref, ba1_ref, wa2_ref, ba2_ref,
                      wg_ref, bg_ref, o_ref):
    tn, l, d = f_ref.shape
    hdim = wa1_ref.shape[1]

    # bf16 DMA'd; f32 inside for layout-friendly reshapes & exact VPU math.
    f = f_ref[...].astype(F32)                                      # (tn, L, D)
    c = c_ref[...].astype(F32)                                      # (tn, L, D)

    f2 = f.reshape(tn * l, d)
    c2 = c.reshape(tn * l, d)
    fc = jnp.concatenate([f2, c2], axis=-1)                         # (tn*L, 2D)

    # attention hidden: one K=2D matmul (2D = 64 <= 128 lanes)
    h = jnp.dot(fc.astype(BF16), wa1_ref[...], preferred_element_type=F32)
    h = jnp.maximum(h + ba1_ref[...], 0.0)                          # (tn*L, H)

    # Linear(H, 1) as a lane reduction (stays in vregs; no lane-1 store)
    s = jnp.sum(h.reshape(tn, l, hdim) * wa2_ref[...], axis=-1) + ba2_ref[...]  # (tn, L)

    m = m_ref[...]                                                  # (tn, L) f32 in {0,1}
    # exact, stabilised rewrite of  exp(s)*m / (sum(exp(s)*m) + eps)
    smax = jnp.maximum(jnp.max(s, axis=-1, keepdims=True), 0.0)
    w = jnp.exp(s - smax) * m
    denom = jnp.sum(w, axis=-1, keepdims=True) + EPS * jnp.exp(-smax)
    w = w / denom

    agg = jnp.sum(w[:, :, None] * f, axis=1)                        # (tn, D) f32

    y = jnp.dot(agg.astype(BF16), wg_ref[...], preferred_element_type=F32) + bg_ref[...]
    o_ref[...] = jnp.maximum(y, 0.0).astype(o_ref.dtype)


def attn_aggregate(feats, ctx, mask, attn_p, aggr_p, *, row_cap=256):
    """feats, ctx: (N, L, D) bf16; mask: (N, L) f32.  Returns (N, D) bf16."""
    n, l, d = feats.shape
    hdim = attn_p["w1"].shape[1]
    tn, n_pad = _row_tiling(n, row_cap)
    fp = _pad_rows(feats, n_pad)
    cp = _pad_rows(ctx, n_pad)
    mp = _pad_rows(mask, n_pad)

    flops = (2 * n_pad * l * (2 * d) * hdim + 2 * n_pad * l * hdim
             + 4 * n_pad * l * d + 2 * n_pad * d * d)
    transcendentals = n_pad * (l + 1)
    bytes_accessed = (2 * (2 * n_pad * l * d + n_pad * d) + 4 * n_pad * l
                      + 2 * (2 * d * hdim + d * d) + 4 * (2 * hdim + d + 2))

    out = pl.pallas_call(
        _attn_aggr_kernel,
        grid=(n_pad // tn,),
        in_specs=[
            pl.BlockSpec((tn, l, d), lambda i: (i, 0, 0)),
            pl.BlockSpec((tn, l, d), lambda i: (i, 0, 0)),
            pl.BlockSpec((tn, l), lambda i: (i, 0)),
            _rep_spec((2 * d, hdim)),       # attn w1 (bf16)
            _rep_spec((1, hdim)),           # attn b1
            _rep_spec((1, hdim)),           # attn w2 as a row (f32)
            _rep_spec((1, 1)),              # attn b2
            _rep_spec((d, d)),              # aggregator w (bf16)
            _rep_spec((1, d)),              # aggregator b
        ],
        out_specs=pl.BlockSpec((tn, d), lambda i: (i, 0)),
        out_shape=jax.ShapeDtypeStruct((n_pad, d), BF16),
        compiler_params=pltpu.CompilerParams(dimension_semantics=("parallel",)),
        cost_estimate=pl.CostEstimate(flops=flops, transcendentals=transcendentals,
                                      bytes_accessed=bytes_accessed),
    )(fp, cp, mp, attn_p["w1"], attn_p["b1"], attn_p["w2"], attn_p["b2"],
      aggr_p["w"], aggr_p["b"])
    return out[:n]


# ----------------------------------------------------------------------------
# Kernel 3: fused final chain — user MLP (3x Linear+ReLU) + prediction head
#           (Linear+ReLU, Linear+ReLU, Linear(D,1)).  Intermediates in vregs.
# ----------------------------------------------------------------------------
def _final_mlp_kernel(hiI_ref, hiS_ref, zj_ref,
                      uw1_ref, ub1_ref, uw2_ref, ub2_ref, uw3_ref, ub3_ref,
                      hw1_ref, hb1_ref, hw2_ref, hb2_ref, hw3_ref, hb3_ref,
                      o_ref):
    a = hiI_ref[...]                                                # (tn, D) bf16
    b = hiS_ref[...]
    z = zj_ref[...]

    # user MLP: single K=2D matmul on lane-concat of [h_iI, h_iS]
    x = jnp.concatenate([a, b], axis=-1)                            # (tn, 2D) bf16
    h = jnp.maximum(jnp.dot(x, uw1_ref[...], preferred_element_type=F32)
                    + ub1_ref[...], 0.0)
    h = jnp.maximum(jnp.dot(h.astype(BF16), uw2_ref[...],
                            preferred_element_type=F32) + ub2_ref[...], 0.0)
    h_i = jnp.maximum(jnp.dot(h.astype(BF16), uw3_ref[...],
                              preferred_element_type=F32) + ub3_ref[...], 0.0)

    # head: single K=2D matmul on lane-concat of [h_i, z_j]
    g = jnp.concatenate([h_i.astype(BF16), z], axis=-1)
    g = jnp.maximum(jnp.dot(g, hw1_ref[...], preferred_element_type=F32)
                    + hb1_ref[...], 0.0)
    g = jnp.maximum(jnp.dot(g.astype(BF16), hw2_ref[...],
                            preferred_element_type=F32) + hb2_ref[...], 0.0)

    # final Linear(D, 1) as a lane reduction (avoids a width-1 matmul)
    r = jnp.sum(g * hw3_ref[...], axis=-1, keepdims=True) + hb3_ref[...]
    o_ref[...] = r


def final_mlp(h_iI, h_iS, z_j, ump, hp, *, row_cap=1024):
    b_, d = h_iI.shape
    tn, n_pad = _row_tiling(b_, row_cap)
    args = (_pad_rows(h_iI, n_pad), _pad_rows(h_iS, n_pad), _pad_rows(z_j, n_pad),
            ump["w1"], ump["b1"], ump["w2"], ump["b2"], ump["w3"], ump["b3"],
            hp["w1"], hp["b1"], hp["w2"], hp["b2"], hp["w3"], hp["b3"])
    row_spec = pl.BlockSpec((tn, d), lambda i: (i, 0))
    in_specs = [row_spec, row_spec, row_spec] + [_rep_spec(a.shape) for a in args[3:]]

    flops = 2 * n_pad * (2 * d * d + 3 * d * d + 2 * d * d + d)
    bytes_accessed = 2 * (3 * n_pad * d) + 4 * n_pad + 2 * (7 * d * d) + 4 * (6 * d + 2)

    out = pl.pallas_call(
        _final_mlp_kernel,
        grid=(n_pad // tn,),
        in_specs=in_specs,
        out_specs=pl.BlockSpec((tn, 1), lambda i: (i, 0)),
        out_shape=jax.ShapeDtypeStruct((n_pad, 1), F32),
        compiler_params=pltpu.CompilerParams(dimension_semantics=("parallel",)),
        cost_estimate=pl.CostEstimate(flops=flops, transcendentals=0,
                                      bytes_accessed=bytes_accessed),
    )(*args)
    return out[:b_]


# ----------------------------------------------------------------------------
# Parameter initialization (PyTorch-Linear-like) and one-time kernel prep
# ----------------------------------------------------------------------------
def init_linear(key, fan_in, fan_out):
    kw, kb = jax.random.split(key)
    bound = 1.0 / jnp.sqrt(jnp.float32(fan_in))
    w = jax.random.uniform(kw, (fan_in, fan_out), F32, -bound, bound)
    b = jax.random.uniform(kb, (1, fan_out), F32, -bound, bound)
    return w, b


def init_mlp2(key, in_dim, out_dim):
    k1, k2 = jax.random.split(key)
    w1, b1 = init_linear(k1, in_dim, in_dim // 2)
    w2, b2 = init_linear(k2, in_dim // 2, out_dim)
    return {"w1": w1, "b1": b1, "w2": w2, "b2": b2}


def init_aggr(key, in_dim, out_dim):
    w, b = init_linear(key, in_dim, out_dim)
    return {"w": w, "b": b}


def init_params(key, n_users, n_items, n_ratings, d):
    ks = jax.random.split(key, 20)
    params = {}
    ue = jax.random.normal(ks[0], (n_users, d), F32)
    ie = jax.random.normal(ks[1], (n_items, d), F32)
    re = jax.random.normal(ks[2], (n_ratings, d), F32)
    params["user_emb"] = ue.at[0].set(0.0)      # padding_idx=0
    params["item_emb"] = ie.at[0].set(0.0)
    params["rating_emb"] = re.at[0].set(0.0)
    # UserModel
    params["g_v"] = init_mlp2(ks[3], 2 * d, d)
    params["user_item_attn"] = init_mlp2(ks[4], 2 * d, 1)
    params["aggr_items"] = init_aggr(ks[5], d, d)
    params["user_user_attn"] = init_mlp2(ks[6], 2 * d, 1)
    params["aggr_neighbors"] = init_aggr(ks[7], d, d)
    um_w1, um_b1 = init_linear(ks[8], 2 * d, d)
    um_w2, um_b2 = init_linear(ks[9], d, d)
    um_w3, um_b3 = init_linear(ks[10], d, d)
    params["user_mlp"] = {"w1": um_w1, "b1": um_b1, "w2": um_w2, "b2": um_b2,
                          "w3": um_w3, "b3": um_b3}
    # ItemModel
    params["g_u"] = init_mlp2(ks[11], 2 * d, d)
    params["item_users_attn"] = init_mlp2(ks[12], 2 * d, 1)
    params["aggr_users"] = init_aggr(ks[13], d, d)
    # GraphRec head
    gr_w1, gr_b1 = init_linear(ks[14], 2 * d, d)
    gr_w2, gr_b2 = init_linear(ks[15], d, d)
    gr_w3, gr_b3 = init_linear(ks[16], d, 1)
    params["head"] = {"w1": gr_w1, "b1": gr_b1, "w2": gr_w2, "b2": gr_b2,
                      "w3": gr_w3, "b3": gr_b3}
    return params


def prepare_params(p):
    """One-time dtype/layout prep: bf16 weights & embedding tables, Linear(*,1)
    weights laid out as (1, H)/(1, D) f32 rows for in-kernel lane reductions."""
    def mlp2_w(m):
        return {"w1": m["w1"].astype(BF16), "b1": m["b1"],
                "w2": m["w2"].astype(BF16), "b2": m["b2"]}

    def attn_w(m):
        return {"w1": m["w1"].astype(BF16), "b1": m["b1"],
                "w2": m["w2"].reshape(1, -1), "b2": m["b2"].reshape(1, 1)}

    def aggr_w(m):
        return {"w": m["w"].astype(BF16), "b": m["b"]}

    q = {
        "user_emb": p["user_emb"].astype(BF16),
        "item_emb": p["item_emb"].astype(BF16),
        "rating_emb": p["rating_emb"].astype(BF16),
        "g_v": mlp2_w(p["g_v"]),
        "g_u": mlp2_w(p["g_u"]),
        "user_item_attn": attn_w(p["user_item_attn"]),
        "user_user_attn": attn_w(p["user_user_attn"]),
        "item_users_attn": attn_w(p["item_users_attn"]),
        "aggr_items": aggr_w(p["aggr_items"]),
        "aggr_neighbors": aggr_w(p["aggr_neighbors"]),
        "aggr_users": aggr_w(p["aggr_users"]),
    }
    um = p["user_mlp"]
    q["user_mlp"] = {"w1": um["w1"].astype(BF16), "b1": um["b1"],
                     "w2": um["w2"].astype(BF16), "b2": um["b2"],
                     "w3": um["w3"].astype(BF16), "b3": um["b3"]}
    hd = p["head"]
    q["head"] = {"w1": hd["w1"].astype(BF16), "b1": hd["b1"],
                 "w2": hd["w2"].astype(BF16), "b2": hd["b2"],
                 "w3": hd["w3"].reshape(1, -1), "b3": hd["b3"].reshape(1, 1)}
    return q


# ----------------------------------------------------------------------------
# Model forward (mirrors the PyTorch forward, including the torch.cat(dim=2)
# + .view(-1, 2D) behaviour on the 4-D tensors in UserModel)
# ----------------------------------------------------------------------------
def user_model(params, d, uids, u_item_pad, u_user_pad, u_user_item_pad):
    user_emb = params["user_emb"]          # bf16 tables (gathers stay in XLA)
    item_emb = params["item_emb"]
    rating_emb = params["rating_emb"]
    B, P1, _ = u_item_pad.shape
    _, P2, P3, _ = u_user_item_pad.shape

    # --- g_v inputs (plain-JAX gathers/concats, bf16 at rest) ---
    q_a = item_emb[u_item_pad[:, :, 0]]                        # (B, P1, D)
    u_item_er = rating_emb[u_item_pad[:, :, 1]]                # (B, P1, D)
    gv_in_items = jnp.concatenate([q_a, u_item_er], axis=2).reshape(-1, 2 * d)

    q_a_s = item_emb[u_user_item_pad[:, :, :, 0]]              # (B, P2, P3, D)
    er_s = rating_emb[u_user_item_pad[:, :, :, 1]]             # (B, P2, P3, D)
    # NOTE: reproduces the original torch.cat(dim=2) on 4-D tensors followed by
    # .view(-1, 2*emb_dim) exactly (row-major flatten semantics preserved).
    gv_in_social = jnp.concatenate([q_a_s, er_s], axis=2).reshape(-1, 2 * d)

    # --- one batched g_v MLP over both sites (shared weights, one launch) ---
    n_item_rows = B * P1
    gv_out = mlp2(jnp.concatenate([gv_in_items, gv_in_social], axis=0),
                  params["g_v"])
    x_ia = gv_out[:n_item_rows].reshape(B, P1, d)
    x_ia_s = gv_out[n_item_rows:].reshape(B, P2, P3, d)

    # --- contexts & masks ---
    mask_u = (u_item_pad[:, :, 0] > 0).astype(F32)             # (B, P1)
    p_i = mask_u.astype(BF16)[:, :, None] * user_emb[uids][:, None, :]

    mask_s = (u_user_item_pad[:, :, :, 0] > 0).astype(F32)     # (B, P2, P3)
    u_neigh_emb = user_emb[u_user_pad]                         # (B, P2, D) bf16
    p_i_s = mask_s.astype(BF16)[..., None] * u_neigh_emb[:, :, None, :]

    # --- batched attention: user-item rows + social-inner rows share the
    #     user_item_attn / aggr_items weights and (when P1 == P3) one launch ---
    if P1 == P3:
        feats = jnp.concatenate([x_ia, x_ia_s.reshape(B * P2, P3, d)], axis=0)
        ctxs = jnp.concatenate([p_i, p_i_s.reshape(B * P2, P3, d)], axis=0)
        masks = jnp.concatenate([mask_u, mask_s.reshape(B * P2, P3)], axis=0)
        both = attn_aggregate(feats, ctxs, masks,
                              params["user_item_attn"], params["aggr_items"])
        h_iI = both[:B]                                        # (B, D) bf16
        h_oI = both[B:].reshape(B, P2, d)                      # (B, P2, D) bf16
    else:
        h_iI = attn_aggregate(x_ia, p_i, mask_u,
                              params["user_item_attn"], params["aggr_items"])
        h_oI = attn_aggregate(x_ia_s.reshape(B * P2, P3, d),
                              p_i_s.reshape(B * P2, P3, d),
                              mask_s.reshape(B * P2, P3),
                              params["user_item_attn"],
                              params["aggr_items"]).reshape(B, P2, d)

    # --- social outer: attn over neighbors + aggr_neighbors -> h_iS ---
    mask_su = (u_user_pad > 0).astype(F32)                     # (B, P2)
    h_iS = attn_aggregate(h_oI, u_neigh_emb, mask_su,
                          params["user_user_attn"], params["aggr_neighbors"])
    return h_iI, h_iS


def item_model(params, d, iids, i_user_pad):
    user_emb = params["user_emb"]
    item_emb = params["item_emb"]
    rating_emb = params["rating_emb"]
    B, P4, _ = i_user_pad.shape

    p_t = user_emb[i_user_pad[:, :, 0]]                        # (B, P4, D)
    i_user_er = rating_emb[i_user_pad[:, :, 1]]                # (B, P4, D)
    f_jt = mlp2(jnp.concatenate([p_t, i_user_er], axis=2).reshape(-1, 2 * d),
                params["g_u"]).reshape(B, P4, d)
    mask_i = (i_user_pad[:, :, 0] > 0).astype(F32)             # (B, P4)
    q_j = mask_i.astype(BF16)[:, :, None] * item_emb[iids][:, None, :]
    z_j = attn_aggregate(f_jt, q_j, mask_i,
                         params["item_users_attn"], params["aggr_users"])
    return z_j


def graphrec_forward(params, d, uids, iids, u_item_pad, u_user_pad,
                     u_user_item_pad, i_user_pad):
    h_iI, h_iS = user_model(params, d, uids, u_item_pad, u_user_pad,
                            u_user_item_pad)
    z_j = item_model(params, d, iids, i_user_pad)
    # fused: user 3-layer MLP + prediction head in one kernel
    r_ij = final_mlp(h_iI, h_iS, z_j, params["user_mlp"], params["head"])
    return r_ij


# ----------------------------------------------------------------------------
# Main
# ----------------------------------------------------------------------------
if __name__ == "__main__":
    n_users, n_items, n_ratings = 20, 24, 6
    emb_dim = 32
    B, P_ITEMS, P_NEIGH, P_NEIGH_ITEMS, P_USERS = 4, 8, 8, 8, 8

    key = jax.random.PRNGKey(0)
    k_par, k_u, k_i, k_uip, k_uup, k_uuip, k_iup = jax.random.split(key, 7)

    params = prepare_params(init_params(k_par, n_users, n_items, n_ratings, emb_dim))

    uids = jax.random.randint(k_u, (B,), 1, n_users, dtype=jnp.int32)
    iids = jax.random.randint(k_i, (B,), 1, n_items, dtype=jnp.int32)
    # padded neighbor lists (0 = padding index)
    u_item_pad = jnp.stack(
        [jax.random.randint(k_uip, (B, P_ITEMS), 0, n_items, dtype=jnp.int32),
         jax.random.randint(jax.random.fold_in(k_uip, 1), (B, P_ITEMS), 0, n_ratings, dtype=jnp.int32)],
        axis=2)
    u_user_pad = jax.random.randint(k_uup, (B, P_NEIGH), 0, n_users, dtype=jnp.int32)
    u_user_item_pad = jnp.stack(
        [jax.random.randint(k_uuip, (B, P_NEIGH, P_NEIGH_ITEMS), 0, n_items, dtype=jnp.int32),
         jax.random.randint(jax.random.fold_in(k_uuip, 1), (B, P_NEIGH, P_NEIGH_ITEMS), 0, n_ratings, dtype=jnp.int32)],
        axis=3)
    i_user_pad = jnp.stack(
        [jax.random.randint(k_iup, (B, P_USERS), 0, n_users, dtype=jnp.int32),
         jax.random.randint(jax.random.fold_in(k_iup, 1), (B, P_USERS), 0, n_ratings, dtype=jnp.int32)],
        axis=2)

    fwd = jax.jit(functools.partial(graphrec_forward, params, emb_dim))
    r_ij = fwd(uids, iids, u_item_pad, u_user_pad, u_user_item_pad, i_user_pad)
    r_ij = jax.block_until_ready(r_ij)
    assert r_ij.shape == (B, 1) and r_ij.dtype == jnp.float32
    print("KERNEL_OK")
</pallas_src>

<mosaic_0001>
module attributes {stable_mosaic.version = 11 : i64} {
  func.func @_mlp2_kernel(%arg0: i32, %arg1: memref<16x64xbf16, #tpu.memory_space<vmem>>, %arg2: memref<64x32xbf16, #tpu.memory_space<vmem>>, %arg3: memref<1x32xf32, #tpu.memory_space<vmem>>, %arg4: memref<32x32xbf16, #tpu.memory_space<vmem>>, %arg5: memref<1x32xf32, #tpu.memory_space<vmem>>, %arg6: memref<16x32xbf16, #tpu.memory_space<vmem>>) attributes {dimension_semantics = [#tpu.dimension_semantics<parallel>], iteration_bounds = array<i64: 2>, scalar_prefetch = 0 : i64, scratch_operands = 0 : i64, tpu.core_type = #tpu.core_type<tc>, window_params = [{transform_indices = @transform_0, window_bounds = array<i64: 16, 64>}, {pipeline_mode = #tpu.pipeline_mode<synchronous>, transform_indices = @transform_1, window_bounds = array<i64: 64, 32>}, {pipeline_mode = #tpu.pipeline_mode<synchronous>, transform_indices = @transform_2, window_bounds = array<i64: 1, 32>}, {pipeline_mode = #tpu.pipeline_mode<synchronous>, transform_indices = @transform_3, window_bounds = array<i64: 32, 32>}, {pipeline_mode = #tpu.pipeline_mode<synchronous>, transform_indices = @transform_4, window_bounds = array<i64: 1, 32>}, {transform_indices = @transform_5, window_bounds = array<i64: 16, 32>}]} {
    %c0 = arith.constant 0 : index
    %c0_0 = arith.constant 0 : index
    %0 = vector.load %arg1[%c0, %c0_0] : memref<16x64xbf16, #tpu.memory_space<vmem>>, vector<16x64xbf16>
    %c0_1 = arith.constant 0 : index
    %c0_2 = arith.constant 0 : index
    %1 = vector.load %arg2[%c0_1, %c0_2] : memref<64x32xbf16, #tpu.memory_space<vmem>>, vector<64x32xbf16>
    %cst = arith.constant dense<0.000000e+00> : vector<16x32xf32>
    %2 = tpu.matmul %0, %1, %cst {dimension_numbers = #tpu.dot_dimension_numbers<[1], [0], [0], [1], [0, 0, 1, 1], [], []>} : vector<16x64xbf16>, vector<64x32xbf16>, vector<16x32xf32> -> vector<16x32xf32>
    %c0_3 = arith.constant 0 : index
    %c0_4 = arith.constant 0 : index
    %3 = vector.load %arg3[%c0_3, %c0_4] : memref<1x32xf32, #tpu.memory_space<vmem>>, vector<1x32xf32>
    %4 = vector.broadcast %3 : vector<1x32xf32> to vector<16x32xf32>
    %5 = arith.addf %2, %4 : vector<16x32xf32>
    %cst_5 = arith.constant 0.000000e+00 : f32
    %6 = vector.broadcast %cst_5 : f32 to vector<16x32xf32>
    %7 = arith.maximumf %5, %6 : vector<16x32xf32>
    %8 = arith.truncf %7 : vector<16x32xf32> to vector<16x32xbf16>
    %c0_6 = arith.constant 0 : index
    %c0_7 = arith.constant 0 : index
    %9 = vector.load %arg4[%c0_6, %c0_7] : memref<32x32xbf16, #tpu.memory_space<vmem>>, vector<32x32xbf16>
    %cst_8 = arith.constant dense<0.000000e+00> : vector<16x32xf32>
    %10 = tpu.matmul %8, %9, %cst_8 {dimension_numbers = #tpu.dot_dimension_numbers<[1], [0], [0], [1], [0, 0, 1, 1], [], []>} : vector<16x32xbf16>, vector<32x32xbf16>, vector<16x32xf32> -> vector<16x32xf32>
    %c0_9 = arith.constant 0 : index
    %c0_10 = arith.constant 0 : index
    %11 = vector.load %arg5[%c0_9, %c0_10] : memref<1x32xf32, #tpu.memory_space<vmem>>, vector<1x32xf32>
    %12 = vector.broadcast %11 : vector<1x32xf32> to vector<16x32xf32>
    %13 = arith.addf %10, %12 : vector<16x32xf32>
    %14 = arith.truncf %13 : vector<16x32xf32> to vector<16x32xbf16>
    %c0_11 = arith.constant 0 : index
    %c0_12 = arith.constant 0 : index
    %15 = vector.load %arg6[%c0_11, %c0_12] : memref<16x32xbf16, #tpu.memory_space<vmem>>, vector<16x32xbf16>
    tpu.vector_store %arg6[%c0_11, %c0_12], %14 {strides = array<i32>} : memref<16x32xbf16, #tpu.memory_space<vmem>>, vector<16x32xbf16>,
    return
  }
  func.func @transform_0(%arg0: i32) -> (i32, i32) {
    %c0_i32 = arith.constant 0 : i32
    %c0_i32_0 = arith.constant 0 : i32
    return %arg0, %c0_i32 : i32, i32
  }
  func.func @transform_1(%arg0: i32) -> (i32, i32) {
    %c0_i32 = arith.constant 0 : i32
    %c0_i32_0 = arith.constant 0 : i32
    %c0_i32_1 = arith.constant 0 : i32
    return %c0_i32, %c0_i32_0 : i32, i32
  }
  func.func @transform_2(%arg0: i32) -> (i32, i32) {
    %c0_i32 = arith.constant 0 : i32
    %c0_i32_0 = arith.constant 0 : i32
    %c0_i32_1 = arith.constant 0 : i32
    return %c0_i32, %c0_i32_0 : i32, i32
  }
  func.func @transform_3(%arg0: i32) -> (i32, i32) {
    %c0_i32 = arith.constant 0 : i32
    %c0_i32_0 = arith.constant 0 : i32
    %c0_i32_1 = arith.constant 0 : i32
    return %c0_i32, %c0_i32_0 : i32, i32
  }
  func.func @transform_4(%arg0: i32) -> (i32, i32) {
    %c0_i32 = arith.constant 0 : i32
    %c0_i32_0 = arith.constant 0 : i32
    %c0_i32_1 = arith.constant 0 : i32
    return %c0_i32, %c0_i32_0 : i32, i32
  }
  func.func @transform_5(%arg0: i32) -> (i32, i32) {
    %c0_i32 = arith.constant 0 : i32
    %c0_i32_0 = arith.constant 0 : i32
    return %arg0, %c0_i32 : i32, i32
  }
}

module attributes {stable_mosaic.version = 11 : i64} {
  func.func @_attn_aggr_kernel(%arg0: i32, %arg1: memref<16x8x32xbf16, #tpu.memory_space<vmem>>, %arg2: memref<16x8x32xbf16, #tpu.memory_space<vmem>>, %arg3: memref<16x8xf32, #tpu.memory_space<vmem>>, %arg4: memref<64x32xbf16, #tpu.memory_space<vmem>>, %arg5: memref<1x32xf32, #tpu.memory_space<vmem>>, %arg6: memref<1x32xf32, #tpu.memory_space<vmem>>, %arg7: memref<1x1xf32, #tpu.memory_space<vmem>>, %arg8: memref<32x32xbf16, #tpu.memory_space<vmem>>, %arg9: memref<1x32xf32, #tpu.memory_space<vmem>>, %arg10: memref<16x32xbf16, #tpu.memory_space<vmem>>) attributes {dimension_semantics = [#tpu.dimension_semantics<parallel>], iteration_bounds = array<i64: 1>, scalar_prefetch = 0 : i64, scratch_operands = 0 : i64, tpu.core_type = #tpu.core_type<tc>, window_params = [{transform_indices = @transform_0, window_bounds = array<i64: 16, 8, 32>}, {transform_indices = @transform_1, window_bounds = array<i64: 16, 8, 32>}, {transform_indices = @transform_2, window_bounds = array<i64: 16, 8>}, {pipeline_mode = #tpu.pipeline_mode<synchronous>, transform_indices = @transform_3, window_bounds = array<i64: 64, 32>}, {pipeline_mode = #tpu.pipeline_mode<synchronous>, transform_indices = @transform_4, window_bounds = array<i64: 1, 32>}, {pipeline_mode = #tpu.pipeline_mode<synchronous>, transform_indices = @transform_5, window_bounds = array<i64: 1, 32>}, {pipeline_mode = #tpu.pipeline_mode<synchronous>, transform_indices = @transform_6, window_bounds = array<i64: 1, 1>}, {pipeline_mode = #tpu.pipeline_mode<synchronous>, transform_indices = @transform_7, window_bounds = array<i64: 32, 32>}, {pipeline_mode = #tpu.pipeline_mode<synchronous>, transform_indices = @transform_8, window_bounds = array<i64: 1, 32>}, {transform_indices = @transform_9, window_bounds = array<i64: 16, 32>}]} {
    %c0 = arith.constant 0 : index
    %c0_0 = arith.constant 0 : index
    %c0_1 = arith.constant 0 : index
    %0 = vector.load %arg1[%c0, %c0_0, %c0_1] : memref<16x8x32xbf16, #tpu.memory_space<vmem>>, vector<16x8x32xbf16>
    %1 = arith.extf %0 : vector<16x8x32xbf16> to vector<16x8x32xf32>
    %c0_2 = arith.constant 0 : index
    %c0_3 = arith.constant 0 : index
    %c0_4 = arith.constant 0 : index
    %2 = vector.load %arg2[%c0_2, %c0_3, %c0_4] : memref<16x8x32xbf16, #tpu.memory_space<vmem>>, vector<16x8x32xbf16>
    %3 = arith.extf %2 : vector<16x8x32xbf16> to vector<16x8x32xf32>
    %4 = vector.shape_cast %1 : vector<16x8x32xf32> to vector<128x32xf32>
    %5 = vector.shape_cast %3 : vector<16x8x32xf32> to vector<128x32xf32>
    %6 = tpu.concatenate %4, %5 in 1 : vector<128x32xf32>, vector<128x32xf32> -> vector<128x64xf32>
    %7 = arith.truncf %6 : vector<128x64xf32> to vector<128x64xbf16>
    %c0_5 = arith.constant 0 : index
    %c0_6 = arith.constant 0 : index
    %8 = vector.load %arg4[%c0_5, %c0_6] : memref<64x32xbf16, #tpu.memory_space<vmem>>, vector<64x32xbf16>
    %cst = arith.constant dense<0.000000e+00> : vector<128x32xf32>
    %9 = tpu.matmul %7, %8, %cst {dimension_numbers = #tpu.dot_dimension_numbers<[1], [0], [0], [1], [0, 0, 1, 1], [], []>} : vector<128x64xbf16>, vector<64x32xbf16>, vector<128x32xf32> -> vector<128x32xf32>
    %c0_7 = arith.constant 0 : index
    %c0_8 = arith.constant 0 : index
    %10 = vector.load %arg5[%c0_7, %c0_8] : memref<1x32xf32, #tpu.memory_space<vmem>>, vector<1x32xf32>
    %11 = vector.broadcast %10 : vector<1x32xf32> to vector<128x32xf32>
    %12 = arith.addf %9, %11 : vector<128x32xf32>
    %cst_9 = arith.constant 0.000000e+00 : f32
    %13 = vector.broadcast %cst_9 : f32 to vector<128x32xf32>
    %14 = arith.maximumf %12, %13 : vector<128x32xf32>
    %15 = vector.shape_cast %14 : vector<128x32xf32> to vector<16x8x32xf32>
    %c0_10 = arith.constant 0 : index
    %c0_11 = arith.constant 0 : index
    %16 = vector.load %arg6[%c0_10, %c0_11] : memref<1x32xf32, #tpu.memory_space<vmem>>, vector<1x32xf32>
    %17 = vector.shape_cast %16 : vector<1x32xf32> to vector<1x1x32xf32>
    %18 = vector.broadcast %17 : vector<1x1x32xf32> to vector<16x8x32xf32>
    %19 = arith.mulf %15, %18 : vector<16x8x32xf32>
    %cst_12 = arith.constant dense<0.000000e+00> : vector<16x8xf32>
    %20 = vector.multi_reduction <add>, %19, %cst_12 [2] : vector<16x8x32xf32> to vector<16x8xf32>
    %c0_13 = arith.constant 0 : index
    %c0_14 = arith.constant 0 : index
    %21 = vector.load %arg7[%c0_13, %c0_14] : memref<1x1xf32, #tpu.memory_space<vmem>>, vector<1x1xf32>
    %22 = vector.broadcast %21 : vector<1x1xf32> to vector<16x8xf32>
    %23 = arith.addf %20, %22 : vector<16x8xf32>
    %c0_15 = arith.constant 0 : index
    %c0_16 = arith.constant 0 : index
    %24 = vector.load %arg3[%c0_15, %c0_16] : memref<16x8xf32, #tpu.memory_space<vmem>>, vector<16x8xf32>
    %cst_17 = arith.constant dense<0xFF800000> : vector<16xf32>
    %25 = vector.multi_reduction <maximumf>, %23, %cst_17 [1] : vector<16x8xf32> to vector<16xf32>
    %26 = vector.shape_cast %25 : vector<16xf32> to vector<16x1xf32>
    %cst_18 = arith.constant 0.000000e+00 : f32
    %27 = vector.broadcast %cst_18 : f32 to vector<16x1xf32>
    %28 = arith.maximumf %26, %27 : vector<16x1xf32>
    %29 = vector.broadcast %28 : vector<16x1xf32> to vector<16x8xf32>
    %30 = arith.subf %23, %29 : vector<16x8xf32>
    %31 = math.exp %30 : vector<16x8xf32>
    %32 = arith.mulf %31, %24 : vector<16x8xf32>
    %cst_19 = arith.constant dense<0.000000e+00> : vector<16xf32>
    %33 = vector.multi_reduction <add>, %32, %cst_19 [1] : vector<16x8xf32> to vector<16xf32>
    %34 = vector.shape_cast %33 : vector<16xf32> to vector<16x1xf32>
    %cst_20 = arith.constant 0.000000e+00 : f32
    %35 = vector.broadcast %cst_20 : f32 to vector<16x1xf32>
    %36 = arith.subf %35, %28 : vector<16x1xf32>
    %37 = math.exp %36 : vector<16x1xf32>
    %cst_21 = arith.constant 1.000000e-10 : f32
    %38 = vector.broadcast %cst_21 : f32 to vector<16x1xf32>
    %39 = arith.mulf %38, %37 : vector<16x1xf32>
    %40 = arith.addf %34, %39 : vector<16x1xf32>
    %41 = vector.broadcast %40 : vector<16x1xf32> to vector<16x8xf32>
    %42 = arith.divf %32, %41 : vector<16x8xf32>
    %43 = vector.shape_cast %42 : vector<16x8xf32> to vector<16x8x1xf32>
    %44 = vector.broadcast %43 : vector<16x8x1xf32> to vector<16x8x32xf32>
    %45 = arith.mulf %44, %1 : vector<16x8x32xf32>
    %cst_22 = arith.constant dense<0.000000e+00> : vector<16x32xf32>
    %46 = vector.multi_reduction <add>, %45, %cst_22 [1] : vector<16x8x32xf32> to vector<16x32xf32>
    %47 = arith.truncf %46 : vector<16x32xf32> to vector<16x32xbf16>
    %c0_23 = arith.constant 0 : index
    %c0_24 = arith.constant 0 : index
    %48 = vector.load %arg8[%c0_23, %c0_24] : memref<32x32xbf16, #tpu.memory_space<vmem>>, vector<32x32xbf16>
    %cst_25 = arith.constant dense<0.000000e+00> : vector<16x32xf32>
    %49 = tpu.matmul %47, %48, %cst_25 {dimension_numbers = #tpu.dot_dimension_numbers<[1], [0], [0], [1], [0, 0, 1, 1], [], []>} : vector<16x32xbf16>, vector<32x32xbf16>, vector<16x32xf32> -> vector<16x32xf32>
    %c0_26 = arith.constant 0 : index
    %c0_27 = arith.constant 0 : index
    %50 = vector.load %arg9[%c0_26, %c0_27] : memref<1x32xf32, #tpu.memory_space<vmem>>, vector<1x32xf32>
    %51 = vector.broadcast %50 : vector<1x32xf32> to vector<16x32xf32>
    %52 = arith.addf %49, %51 : vector<16x32xf32>
    %cst_28 = arith.constant 0.000000e+00 : f32
    %53 = vector.broadcast %cst_28 : f32 to vector<16x32xf32>
    %54 = arith.maximumf %52, %53 : vector<16x32xf32>
    %55 = arith.truncf %54 : vector<16x32xf32> to vector<16x32xbf16>
    %c0_29 = arith.constant 0 : index
    %c0_30 = arith.constant 0 : index
    %56 = vector.load %arg10[%c0_29, %c0_30] : memref<16x32xbf16, #tpu.memory_space<vmem>>, vector<16x32xbf16>
    tpu.vector_store %arg10[%c0_29, %c0_30], %55 {strides = array<i32>} : memref<16x32xbf16, #tpu.memory_space<vmem>>, vector<16x32xbf16>,
    return
  }
  func.func @transform_0(%arg0: i32) -> (i32, i32, i32) {
    %c0_i32 = arith.constant 0 : i32
    %c0_i32_0 = arith.constant 0 : i32
    %c0_i32_1 = arith.constant 0 : i32
    return %arg0, %c0_i32, %c0_i32_0 : i32, i32, i32
  }
  func.func @transform_1(%arg0: i32) -> (i32, i32, i32) {
    %c0_i32 = arith.constant 0 : i32
    %c0_i32_0 = arith.constant 0 : i32
    %c0_i32_1 = arith.constant 0 : i32
    return %arg0, %c0_i32, %c0_i32_0 : i32, i32, i32
  }
  func.func @transform_2(%arg0: i32) -> (i32, i32) {
    %c0_i32 = arith.constant 0 : i32
    %c0_i32_0 = arith.constant 0 : i32
    return %arg0, %c0_i32 : i32, i32
  }
  func.func @transform_3(%arg0: i32) -> (i32, i32) {
    %c0_i32 = arith.constant 0 : i32
    %c0_i32_0 = arith.constant 0 : i32
    %c0_i32_1 = arith.constant 0 : i32
    return %c0_i32, %c0_i32_0 : i32, i32
  }
  func.func @transform_4(%arg0: i32) -> (i32, i32) {
    %c0_i32 = arith.constant 0 : i32
    %c0_i32_0 = arith.constant 0 : i32
    %c0_i32_1 = arith.constant 0 : i32
    return %c0_i32, %c0_i32_0 : i32, i32
  }
  func.func @transform_5(%arg0: i32) -> (i32, i32) {
    %c0_i32 = arith.constant 0 : i32
    %c0_i32_0 = arith.constant 0 : i32
    %c0_i32_1 = arith.constant 0 : i32
    return %c0_i32, %c0_i32_0 : i32, i32
  }
  func.func @transform_6(%arg0: i32) -> (i32, i32) {
    %c0_i32 = arith.constant 0 : i32
    %c0_i32_0 = arith.constant 0 : i32
    %c0_i32_1 = arith.constant 0 : i32
    return %c0_i32, %c0_i32_0 : i32, i32
  }
  func.func @transform_7(%arg0: i32) -> (i32, i32) {
    %c0_i32 = arith.constant 0 : i32
    %c0_i32_0 = arith.constant 0 : i32
    %c0_i32_1 = arith.constant 0 : i32
    return %c0_i32, %c0_i32_0 : i32, i32
  }
  func.func @transform_8(%arg0: i32) -> (i32, i32) {
    %c0_i32 = arith.constant 0 : i32
    %c0_i32_0 = arith.constant 0 : i32
    %c0_i32_1 = arith.constant 0 : i32
    return %c0_i32, %c0_i32_0 : i32, i32
  }
  func.func @transform_9(%arg0: i32) -> (i32, i32) {
    %c0_i32 = arith.constant 0 : i32
    %c0_i32_0 = arith.constant 0 : i32
    return %arg0, %c0_i32 : i32, i32
  }
}

module attributes {stable_mosaic.version = 11 : i64} {
  func.func @_mlp2_kernel(%arg0: i32, %arg1: memref<144x64xbf16, #tpu.memory_space<vmem>>, %arg2: memref<64x32xbf16, #tpu.memory_space<vmem>>, %arg3: memref<1x32xf32, #tpu.memory_space<vmem>>, %arg4: memref<32x32xbf16, #tpu.memory_space<vmem>>, %arg5: memref<1x32xf32, #tpu.memory_space<vmem>>, %arg6: memref<144x32xbf16, #tpu.memory_space<vmem>>) attributes {dimension_semantics = [#tpu.dimension_semantics<parallel>], iteration_bounds = array<i64: 2>, scalar_prefetch = 0 : i64, scratch_operands = 0 : i64, tpu.core_type = #tpu.core_type<tc>, window_params = [{transform_indices = @transform_0, window_bounds = array<i64: 144, 64>}, {pipeline_mode = #tpu.pipeline_mode<synchronous>, transform_indices = @transform_1, window_bounds = array<i64: 64, 32>}, {pipeline_mode = #tpu.pipeline_mode<synchronous>, transform_indices = @transform_2, window_bounds = array<i64: 1, 32>}, {pipeline_mode = #tpu.pipeline_mode<synchronous>, transform_indices = @transform_3, window_bounds = array<i64: 32, 32>}, {pipeline_mode = #tpu.pipeline_mode<synchronous>, transform_indices = @transform_4, window_bounds = array<i64: 1, 32>}, {transform_indices = @transform_5, window_bounds = array<i64: 144, 32>}]} {
    %c0 = arith.constant 0 : index
    %c0_0 = arith.constant 0 : index
    %0 = vector.load %arg1[%c0, %c0_0] : memref<144x64xbf16, #tpu.memory_space<vmem>>, vector<144x64xbf16>
    %c0_1 = arith.constant 0 : index
    %c0_2 = arith.constant 0 : index
    %1 = vector.load %arg2[%c0_1, %c0_2] : memref<64x32xbf16, #tpu.memory_space<vmem>>, vector<64x32xbf16>
    %cst = arith.constant dense<0.000000e+00> : vector<144x32xf32>
    %2 = tpu.matmul %0, %1, %cst {dimension_numbers = #tpu.dot_dimension_numbers<[1], [0], [0], [1], [0, 0, 1, 1], [], []>} : vector<144x64xbf16>, vector<64x32xbf16>, vector<144x32xf32> -> vector<144x32xf32>
    %c0_3 = arith.constant 0 : index
    %c0_4 = arith.constant 0 : index
    %3 = vector.load %arg3[%c0_3, %c0_4] : memref<1x32xf32, #tpu.memory_space<vmem>>, vector<1x32xf32>
    %4 = vector.broadcast %3 : vector<1x32xf32> to vector<144x32xf32>
    %5 = arith.addf %2, %4 : vector<144x32xf32>
    %cst_5 = arith.constant 0.000000e+00 : f32
    %6 = vector.broadcast %cst_5 : f32 to vector<144x32xf32>
    %7 = arith.maximumf %5, %6 : vector<144x32xf32>
    %8 = arith.truncf %7 : vector<144x32xf32> to vector<144x32xbf16>
    %c0_6 = arith.constant 0 : index
    %c0_7 = arith.constant 0 : index
    %9 = vector.load %arg4[%c0_6, %c0_7] : memref<32x32xbf16, #tpu.memory_space<vmem>>, vector<32x32xbf16>
    %cst_8 = arith.constant dense<0.000000e+00> : vector<144x32xf32>
    %10 = tpu.matmul %8, %9, %cst_8 {dimension_numbers = #tpu.dot_dimension_numbers<[1], [0], [0], [1], [0, 0, 1, 1], [], []>} : vector<144x32xbf16>, vector<32x32xbf16>, vector<144x32xf32> -> vector<144x32xf32>
    %c0_9 = arith.constant 0 : index
    %c0_10 = arith.constant 0 : index
    %11 = vector.load %arg5[%c0_9, %c0_10] : memref<1x32xf32, #tpu.memory_space<vmem>>, vector<1x32xf32>
    %12 = vector.broadcast %11 : vector<1x32xf32> to vector<144x32xf32>
    %13 = arith.addf %10, %12 : vector<144x32xf32>
    %14 = arith.truncf %13 : vector<144x32xf32> to vector<144x32xbf16>
    %c0_11 = arith.constant 0 : index
    %c0_12 = arith.constant 0 : index
    %15 = vector.load %arg6[%c0_11, %c0_12] : memref<144x32xbf16, #tpu.memory_space<vmem>>, vector<144x32xbf16>
    tpu.vector_store %arg6[%c0_11, %c0_12], %14 {strides = array<i32>} : memref<144x32xbf16, #tpu.memory_space<vmem>>, vector<144x32xbf16>,
    return
  }
  func.func @transform_0(%arg0: i32) -> (i32, i32) {
    %c0_i32 = arith.constant 0 : i32
    %c0_i32_0 = arith.constant 0 : i32
    return %arg0, %c0_i32 : i32, i32
  }
  func.func @transform_1(%arg0: i32) -> (i32, i32) {
    %c0_i32 = arith.constant 0 : i32
    %c0_i32_0 = arith.constant 0 : i32
    %c0_i32_1 = arith.constant 0 : i32
    return %c0_i32, %c0_i32_0 : i32, i32
  }
  func.func @transform_2(%arg0: i32) -> (i32, i32) {
    %c0_i32 = arith.constant 0 : i32
    %c0_i32_0 = arith.constant 0 : i32
    %c0_i32_1 = arith.constant 0 : i32
    return %c0_i32, %c0_i32_0 : i32, i32
  }
  func.func @transform_3(%arg0: i32) -> (i32, i32) {
    %c0_i32 = arith.constant 0 : i32
    %c0_i32_0 = arith.constant 0 : i32
    %c0_i32_1 = arith.constant 0 : i32
    return %c0_i32, %c0_i32_0 : i32, i32
  }
  func.func @transform_4(%arg0: i32) -> (i32, i32) {
    %c0_i32 = arith.constant 0 : i32
    %c0_i32_0 = arith.constant 0 : i32
    %c0_i32_1 = arith.constant 0 : i32
    return %c0_i32, %c0_i32_0 : i32, i32
  }
  func.func @transform_5(%arg0: i32) -> (i32, i32) {
    %c0_i32 = arith.constant 0 : i32
    %c0_i32_0 = arith.constant 0 : i32
    return %arg0, %c0_i32 : i32, i32
  }
}

module attributes {stable_mosaic.version = 11 : i64} {
  func.func @_attn_aggr_kernel(%arg0: i32, %arg1: memref<32x8x32xbf16, #tpu.memory_space<vmem>>, %arg2: memref<32x8x32xbf16, #tpu.memory_space<vmem>>, %arg3: memref<32x8xf32, #tpu.memory_space<vmem>>, %arg4: memref<64x32xbf16, #tpu.memory_space<vmem>>, %arg5: memref<1x32xf32, #tpu.memory_space<vmem>>, %arg6: memref<1x32xf32, #tpu.memory_space<vmem>>, %arg7: memref<1x1xf32, #tpu.memory_space<vmem>>, %arg8: memref<32x32xbf16, #tpu.memory_space<vmem>>, %arg9: memref<1x32xf32, #tpu.memory_space<vmem>>, %arg10: memref<32x32xbf16, #tpu.memory_space<vmem>>) attributes {dimension_semantics = [#tpu.dimension_semantics<parallel>], iteration_bounds = array<i64: 2>, scalar_prefetch = 0 : i64, scratch_operands = 0 : i64, tpu.core_type = #tpu.core_type<tc>, window_params = [{transform_indices = @transform_0, window_bounds = array<i64: 32, 8, 32>}, {transform_indices = @transform_1, window_bounds = array<i64: 32, 8, 32>}, {transform_indices = @transform_2, window_bounds = array<i64: 32, 8>}, {pipeline_mode = #tpu.pipeline_mode<synchronous>, transform_indices = @transform_3, window_bounds = array<i64: 64, 32>}, {pipeline_mode = #tpu.pipeline_mode<synchronous>, transform_indices = @transform_4, window_bounds = array<i64: 1, 32>}, {pipeline_mode = #tpu.pipeline_mode<synchronous>, transform_indices = @transform_5, window_bounds = array<i64: 1, 32>}, {pipeline_mode = #tpu.pipeline_mode<synchronous>, transform_indices = @transform_6, window_bounds = array<i64: 1, 1>}, {pipeline_mode = #tpu.pipeline_mode<synchronous>, transform_indices = @transform_7, window_bounds = array<i64: 32, 32>}, {pipeline_mode = #tpu.pipeline_mode<synchronous>, transform_indices = @transform_8, window_bounds = array<i64: 1, 32>}, {transform_indices = @transform_9, window_bounds = array<i64: 32, 32>}]} {
    %c0 = arith.constant 0 : index
    %c0_0 = arith.constant 0 : index
    %c0_1 = arith.constant 0 : index
    %0 = vector.load %arg1[%c0, %c0_0, %c0_1] : memref<32x8x32xbf16, #tpu.memory_space<vmem>>, vector<32x8x32xbf16>
    %1 = arith.extf %0 : vector<32x8x32xbf16> to vector<32x8x32xf32>
    %c0_2 = arith.constant 0 : index
    %c0_3 = arith.constant 0 : index
    %c0_4 = arith.constant 0 : index
    %2 = vector.load %arg2[%c0_2, %c0_3, %c0_4] : memref<32x8x32xbf16, #tpu.memory_space<vmem>>, vector<32x8x32xbf16>
    %3 = arith.extf %2 : vector<32x8x32xbf16> to vector<32x8x32xf32>
    %4 = vector.shape_cast %1 : vector<32x8x32xf32> to vector<256x32xf32>
    %5 = vector.shape_cast %3 : vector<32x8x32xf32> to vector<256x32xf32>
    %6 = tpu.concatenate %4, %5 in 1 : vector<256x32xf32>, vector<256x32xf32> -> vector<256x64xf32>
    %7 = arith.truncf %6 : vector<256x64xf32> to vector<256x64xbf16>
    %c0_5 = arith.constant 0 : index
    %c0_6 = arith.constant 0 : index
    %8 = vector.load %arg4[%c0_5, %c0_6] : memref<64x32xbf16, #tpu.memory_space<vmem>>, vector<64x32xbf16>
    %cst = arith.constant dense<0.000000e+00> : vector<256x32xf32>
    %9 = tpu.matmul %7, %8, %cst {dimension_numbers = #tpu.dot_dimension_numbers<[1], [0], [0], [1], [0, 0, 1, 1], [], []>} : vector<256x64xbf16>, vector<64x32xbf16>, vector<256x32xf32> -> vector<256x32xf32>
    %c0_7 = arith.constant 0 : index
    %c0_8 = arith.constant 0 : index
    %10 = vector.load %arg5[%c0_7, %c0_8] : memref<1x32xf32, #tpu.memory_space<vmem>>, vector<1x32xf32>
    %11 = vector.broadcast %10 : vector<1x32xf32> to vector<256x32xf32>
    %12 = arith.addf %9, %11 : vector<256x32xf32>
    %cst_9 = arith.constant 0.000000e+00 : f32
    %13 = vector.broadcast %cst_9 : f32 to vector<256x32xf32>
    %14 = arith.maximumf %12, %13 : vector<256x32xf32>
    %15 = vector.shape_cast %14 : vector<256x32xf32> to vector<32x8x32xf32>
    %c0_10 = arith.constant 0 : index
    %c0_11 = arith.constant 0 : index
    %16 = vector.load %arg6[%c0_10, %c0_11] : memref<1x32xf32, #tpu.memory_space<vmem>>, vector<1x32xf32>
    %17 = vector.shape_cast %16 : vector<1x32xf32> to vector<1x1x32xf32>
    %18 = vector.broadcast %17 : vector<1x1x32xf32> to vector<32x8x32xf32>
    %19 = arith.mulf %15, %18 : vector<32x8x32xf32>
    %cst_12 = arith.constant dense<0.000000e+00> : vector<32x8xf32>
    %20 = vector.multi_reduction <add>, %19, %cst_12 [2] : vector<32x8x32xf32> to vector<32x8xf32>
    %c0_13 = arith.constant 0 : index
    %c0_14 = arith.constant 0 : index
    %21 = vector.load %arg7[%c0_13, %c0_14] : memref<1x1xf32, #tpu.memory_space<vmem>>, vector<1x1xf32>
    %22 = vector.broadcast %21 : vector<1x1xf32> to vector<32x8xf32>
    %23 = arith.addf %20, %22 : vector<32x8xf32>
    %c0_15 = arith.constant 0 : index
    %c0_16 = arith.constant 0 : index
    %24 = vector.load %arg3[%c0_15, %c0_16] : memref<32x8xf32, #tpu.memory_space<vmem>>, vector<32x8xf32>
    %cst_17 = arith.constant dense<0xFF800000> : vector<32xf32>
    %25 = vector.multi_reduction <maximumf>, %23, %cst_17 [1] : vector<32x8xf32> to vector<32xf32>
    %26 = vector.shape_cast %25 : vector<32xf32> to vector<32x1xf32>
    %cst_18 = arith.constant 0.000000e+00 : f32
    %27 = vector.broadcast %cst_18 : f32 to vector<32x1xf32>
    %28 = arith.maximumf %26, %27 : vector<32x1xf32>
    %29 = vector.broadcast %28 : vector<32x1xf32> to vector<32x8xf32>
    %30 = arith.subf %23, %29 : vector<32x8xf32>
    %31 = math.exp %30 : vector<32x8xf32>
    %32 = arith.mulf %31, %24 : vector<32x8xf32>
    %cst_19 = arith.constant dense<0.000000e+00> : vector<32xf32>
    %33 = vector.multi_reduction <add>, %32, %cst_19 [1] : vector<32x8xf32> to vector<32xf32>
    %34 = vector.shape_cast %33 : vector<32xf32> to vector<32x1xf32>
    %cst_20 = arith.constant 0.000000e+00 : f32
    %35 = vector.broadcast %cst_20 : f32 to vector<32x1xf32>
    %36 = arith.subf %35, %28 : vector<32x1xf32>
    %37 = math.exp %36 : vector<32x1xf32>
    %cst_21 = arith.constant 1.000000e-10 : f32
    %38 = vector.broadcast %cst_21 : f32 to vector<32x1xf32>
    %39 = arith.mulf %38, %37 : vector<32x1xf32>
    %40 = arith.addf %34, %39 : vector<32x1xf32>
    %41 = vector.broadcast %40 : vector<32x1xf32> to vector<32x8xf32>
    %42 = arith.divf %32, %41 : vector<32x8xf32>
    %43 = vector.shape_cast %42 : vector<32x8xf32> to vector<32x8x1xf32>
    %44 = vector.broadcast %43 : vector<32x8x1xf32> to vector<32x8x32xf32>
    %45 = arith.mulf %44, %1 : vector<32x8x32xf32>
    %cst_22 = arith.constant dense<0.000000e+00> : vector<32x32xf32>
    %46 = vector.multi_reduction <add>, %45, %cst_22 [1] : vector<32x8x32xf32> to vector<32x32xf32>
    %47 = arith.truncf %46 : vector<32x32xf32> to vector<32x32xbf16>
    %c0_23 = arith.constant 0 : index
    %c0_24 = arith.constant 0 : index
    %48 = vector.load %arg8[%c0_23, %c0_24] : memref<32x32xbf16, #tpu.memory_space<vmem>>, vector<32x32xbf16>
    %cst_25 = arith.constant dense<0.000000e+00> : vector<32x32xf32>
    %49 = tpu.matmul %47, %48, %cst_25 {dimension_numbers = #tpu.dot_dimension_numbers<[1], [0], [0], [1], [0, 0, 1, 1], [], []>} : vector<32x32xbf16>, vector<32x32xbf16>, vector<32x32xf32> -> vector<32x32xf32>
    %c0_26 = arith.constant 0 : index
    %c0_27 = arith.constant 0 : index
    %50 = vector.load %arg9[%c0_26, %c0_27] : memref<1x32xf32, #tpu.memory_space<vmem>>, vector<1x32xf32>
    %51 = vector.broadcast %50 : vector<1x32xf32> to vector<32x32xf32>
    %52 = arith.addf %49, %51 : vector<32x32xf32>
    %cst_28 = arith.constant 0.000000e+00 : f32
    %53 = vector.broadcast %cst_28 : f32 to vector<32x32xf32>
    %54 = arith.maximumf %52, %53 : vector<32x32xf32>
    %55 = arith.truncf %54 : vector<32x32xf32> to vector<32x32xbf16>
    %c0_29 = arith.constant 0 : index
    %c0_30 = arith.constant 0 : index
    %56 = vector.load %arg10[%c0_29, %c0_30] : memref<32x32xbf16, #tpu.memory_space<vmem>>, vector<32x32xbf16>
    tpu.vector_store %arg10[%c0_29, %c0_30], %55 {strides = array<i32>} : memref<32x32xbf16, #tpu.memory_space<vmem>>, vector<32x32xbf16>,
    return
  }
  func.func @transform_0(%arg0: i32) -> (i32, i32, i32) {
    %c0_i32 = arith.constant 0 : i32
    %c0_i32_0 = arith.constant 0 : i32
    %c0_i32_1 = arith.constant 0 : i32
    return %arg0, %c0_i32, %c0_i32_0 : i32, i32, i32
  }
  func.func @transform_1(%arg0: i32) -> (i32, i32, i32) {
    %c0_i32 = arith.constant 0 : i32
    %c0_i32_0 = arith.constant 0 : i32
    %c0_i32_1 = arith.constant 0 : i32
    return %arg0, %c0_i32, %c0_i32_0 : i32, i32, i32
  }
  func.func @transform_2(%arg0: i32) -> (i32, i32) {
    %c0_i32 = arith.constant 0 : i32
    %c0_i32_0 = arith.constant 0 : i32
    return %arg0, %c0_i32 : i32, i32
  }
  func.func @transform_3(%arg0: i32) -> (i32, i32) {
    %c0_i32 = arith.constant 0 : i32
    %c0_i32_0 = arith.constant 0 : i32
    %c0_i32_1 = arith.constant 0 : i32
    return %c0_i32, %c0_i32_0 : i32, i32
  }
  func.func @transform_4(%arg0: i32) -> (i32, i32) {
    %c0_i32 = arith.constant 0 : i32
    %c0_i32_0 = arith.constant 0 : i32
    %c0_i32_1 = arith.constant 0 : i32
    return %c0_i32, %c0_i32_0 : i32, i32
  }
  func.func @transform_5(%arg0: i32) -> (i32, i32) {
    %c0_i32 = arith.constant 0 : i32
    %c0_i32_0 = arith.constant 0 : i32
    %c0_i32_1 = arith.constant 0 : i32
    return %c0_i32, %c0_i32_0 : i32, i32
  }
  func.func @transform_6(%arg0: i32) -> (i32, i32) {
    %c0_i32 = arith.constant 0 : i32
    %c0_i32_0 = arith.constant 0 : i32
    %c0_i32_1 = arith.constant 0 : i32
    return %c0_i32, %c0_i32_0 : i32, i32
  }
  func.func @transform_7(%arg0: i32) -> (i32, i32) {
    %c0_i32 = arith.constant 0 : i32
    %c0_i32_0 = arith.constant 0 : i32
    %c0_i32_1 = arith.constant 0 : i32
    return %c0_i32, %c0_i32_0 : i32, i32
  }
  func.func @transform_8(%arg0: i32) -> (i32, i32) {
    %c0_i32 = arith.constant 0 : i32
    %c0_i32_0 = arith.constant 0 : i32
    %c0_i32_1 = arith.constant 0 : i32
    return %c0_i32, %c0_i32_0 : i32, i32
  }
  func.func @transform_9(%arg0: i32) -> (i32, i32) {
    %c0_i32 = arith.constant 0 : i32
    %c0_i32_0 = arith.constant 0 : i32
    return %arg0, %c0_i32 : i32, i32
  }
}

module attributes {stable_mosaic.version = 11 : i64} {
  func.func @_final_mlp_kernel(%arg0: i32, %arg1: memref<16x32xbf16, #tpu.memory_space<vmem>>, %arg2: memref<16x32xbf16, #tpu.memory_space<vmem>>, %arg3: memref<16x32xbf16, #tpu.memory_space<vmem>>, %arg4: memref<64x32xbf16, #tpu.memory_space<vmem>>, %arg5: memref<1x32xf32, #tpu.memory_space<vmem>>, %arg6: memref<32x32xbf16, #tpu.memory_space<vmem>>, %arg7: memref<1x32xf32, #tpu.memory_space<vmem>>, %arg8: memref<32x32xbf16, #tpu.memory_space<vmem>>, %arg9: memref<1x32xf32, #tpu.memory_space<vmem>>, %arg10: memref<64x32xbf16, #tpu.memory_space<vmem>>, %arg11: memref<1x32xf32, #tpu.memory_space<vmem>>, %arg12: memref<32x32xbf16, #tpu.memory_space<vmem>>, %arg13: memref<1x32xf32, #tpu.memory_space<vmem>>, %arg14: memref<1x32xf32, #tpu.memory_space<vmem>>, %arg15: memref<1x1xf32, #tpu.memory_space<vmem>>, %arg16: memref<16x1xf32, #tpu.memory_space<vmem>>) attributes {dimension_semantics = [#tpu.dimension_semantics<parallel>], iteration_bounds = array<i64: 1>, scalar_prefetch = 0 : i64, scratch_operands = 0 : i64, tpu.core_type = #tpu.core_type<tc>, window_params = [{transform_indices = @transform_0, window_bounds = array<i64: 16, 32>}, {transform_indices = @transform_1, window_bounds = array<i64: 16, 32>}, {transform_indices = @transform_2, window_bounds = array<i64: 16, 32>}, {pipeline_mode = #tpu.pipeline_mode<synchronous>, transform_indices = @transform_3, window_bounds = array<i64: 64, 32>}, {pipeline_mode = #tpu.pipeline_mode<synchronous>, transform_indices = @transform_4, window_bounds = array<i64: 1, 32>}, {pipeline_mode = #tpu.pipeline_mode<synchronous>, transform_indices = @transform_5, window_bounds = array<i64: 32, 32>}, {pipeline_mode = #tpu.pipeline_mode<synchronous>, transform_indices = @transform_6, window_bounds = array<i64: 1, 32>}, {pipeline_mode = #tpu.pipeline_mode<synchronous>, transform_indices = @transform_7, window_bounds = array<i64: 32, 32>}, {pipeline_mode = #tpu.pipeline_mode<synchronous>, transform_indices = @transform_8, window_bounds = array<i64: 1, 32>}, {pipeline_mode = #tpu.pipeline_mode<synchronous>, transform_indices = @transform_9, window_bounds = array<i64: 64, 32>}, {pipeline_mode = #tpu.pipeline_mode<synchronous>, transform_indices = @transform_10, window_bounds = array<i64: 1, 32>}, {pipeline_mode = #tpu.pipeline_mode<synchronous>, transform_indices = @transform_11, window_bounds = array<i64: 32, 32>}, {pipeline_mode = #tpu.pipeline_mode<synchronous>, transform_indices = @transform_12, window_bounds = array<i64: 1, 32>}, {pipeline_mode = #tpu.pipeline_mode<synchronous>, transform_indices = @transform_13, window_bounds = array<i64: 1, 32>}, {pipeline_mode = #tpu.pipeline_mode<synchronous>, transform_indices = @transform_14, window_bounds = array<i64: 1, 1>}, {transform_indices = @transform_15, window_bounds = array<i64: 16, 1>}]} {
    %c0 = arith.constant 0 : index
    %c0_0 = arith.constant 0 : index
    %0 = vector.load %arg1[%c0, %c0_0] : memref<16x32xbf16, #tpu.memory_space<vmem>>, vector<16x32xbf16>
    %c0_1 = arith.constant 0 : index
    %c0_2 = arith.constant 0 : index
    %1 = vector.load %arg2[%c0_1, %c0_2] : memref<16x32xbf16, #tpu.memory_space<vmem>>, vector<16x32xbf16>
    %c0_3 = arith.constant 0 : index
    %c0_4 = arith.constant 0 : index
    %2 = vector.load %arg3[%c0_3, %c0_4] : memref<16x32xbf16, #tpu.memory_space<vmem>>, vector<16x32xbf16>
    %3 = tpu.concatenate %0, %1 in 1 : vector<16x32xbf16>, vector<16x32xbf16> -> vector<16x64xbf16>
    %c0_5 = arith.constant 0 : index
    %c0_6 = arith.constant 0 : index
    %4 = vector.load %arg4[%c0_5, %c0_6] : memref<64x32xbf16, #tpu.memory_space<vmem>>, vector<64x32xbf16>
    %cst = arith.constant dense<0.000000e+00> : vector<16x32xf32>
    %5 = tpu.matmul %3, %4, %cst {dimension_numbers = #tpu.dot_dimension_numbers<[1], [0], [0], [1], [0, 0, 1, 1], [], []>} : vector<16x64xbf16>, vector<64x32xbf16>, vector<16x32xf32> -> vector<16x32xf32>
    %c0_7 = arith.constant 0 : index
    %c0_8 = arith.constant 0 : index
    %6 = vector.load %arg5[%c0_7, %c0_8] : memref<1x32xf32, #tpu.memory_space<vmem>>, vector<1x32xf32>
    %7 = vector.broadcast %6 : vector<1x32xf32> to vector<16x32xf32>
    %8 = arith.addf %5, %7 : vector<16x32xf32>
    %cst_9 = arith.constant 0.000000e+00 : f32
    %9 = vector.broadcast %cst_9 : f32 to vector<16x32xf32>
    %10 = arith.maximumf %8, %9 : vector<16x32xf32>
    %11 = arith.truncf %10 : vector<16x32xf32> to vector<16x32xbf16>
    %c0_10 = arith.constant 0 : index
    %c0_11 = arith.constant 0 : index
    %12 = vector.load %arg6[%c0_10, %c0_11] : memref<32x32xbf16, #tpu.memory_space<vmem>>, vector<32x32xbf16>
    %cst_12 = arith.constant dense<0.000000e+00> : vector<16x32xf32>
    %13 = tpu.matmul %11, %12, %cst_12 {dimension_numbers = #tpu.dot_dimension_numbers<[1], [0], [0], [1], [0, 0, 1, 1], [], []>} : vector<16x32xbf16>, vector<32x32xbf16>, vector<16x32xf32> -> vector<16x32xf32>
    %c0_13 = arith.constant 0 : index
    %c0_14 = arith.constant 0 : index
    %14 = vector.load %arg7[%c0_13, %c0_14] : memref<1x32xf32, #tpu.memory_space<vmem>>, vector<1x32xf32>
    %15 = vector.broadcast %14 : vector<1x32xf32> to vector<16x32xf32>
    %16 = arith.addf %13, %15 : vector<16x32xf32>
    %cst_15 = arith.constant 0.000000e+00 : f32
    %17 = vector.broadcast %cst_15 : f32 to vector<16x32xf32>
    %18 = arith.maximumf %16, %17 : vector<16x32xf32>
    %19 = arith.truncf %18 : vector<16x32xf32> to vector<16x32xbf16>
    %c0_16 = arith.constant 0 : index
    %c0_17 = arith.constant 0 : index
    %20 = vector.load %arg8[%c0_16, %c0_17] : memref<32x32xbf16, #tpu.memory_space<vmem>>, vector<32x32xbf16>
    %cst_18 = arith.constant dense<0.000000e+00> : vector<16x32xf32>
    %21 = tpu.matmul %19, %20, %cst_18 {dimension_numbers = #tpu.dot_dimension_numbers<[1], [0], [0], [1], [0, 0, 1, 1], [], []>} : vector<16x32xbf16>, vector<32x32xbf16>, vector<16x32xf32> -> vector<16x32xf32>
    %c0_19 = arith.constant 0 : index
    %c0_20 = arith.constant 0 : index
    %22 = vector.load %arg9[%c0_19, %c0_20] : memref<1x32xf32, #tpu.memory_space<vmem>>, vector<1x32xf32>
    %23 = vector.broadcast %22 : vector<1x32xf32> to vector<16x32xf32>
    %24 = arith.addf %21, %23 : vector<16x32xf32>
    %cst_21 = arith.constant 0.000000e+00 : f32
    %25 = vector.broadcast %cst_21 : f32 to vector<16x32xf32>
    %26 = arith.maximumf %24, %25 : vector<16x32xf32>
    %27 = arith.truncf %26 : vector<16x32xf32> to vector<16x32xbf16>
    %28 = tpu.concatenate %27, %2 in 1 : vector<16x32xbf16>, vector<16x32xbf16> -> vector<16x64xbf16>
    %c0_22 = arith.constant 0 : index
    %c0_23 = arith.constant 0 : index
    %29 = vector.load %arg10[%c0_22, %c0_23] : memref<64x32xbf16, #tpu.memory_space<vmem>>, vector<64x32xbf16>
    %cst_24 = arith.constant dense<0.000000e+00> : vector<16x32xf32>
    %30 = tpu.matmul %28, %29, %cst_24 {dimension_numbers = #tpu.dot_dimension_numbers<[1], [0], [0], [1], [0, 0, 1, 1], [], []>} : vector<16x64xbf16>, vector<64x32xbf16>, vector<16x32xf32> -> vector<16x32xf32>
    %c0_25 = arith.constant 0 : index
    %c0_26 = arith.constant 0 : index
    %31 = vector.load %arg11[%c0_25, %c0_26] : memref<1x32xf32, #tpu.memory_space<vmem>>, vector<1x32xf32>
    %32 = vector.broadcast %31 : vector<1x32xf32> to vector<16x32xf32>
    %33 = arith.addf %30, %32 : vector<16x32xf32>
    %cst_27 = arith.constant 0.000000e+00 : f32
    %34 = vector.broadcast %cst_27 : f32 to vector<16x32xf32>
    %35 = arith.maximumf %33, %34 : vector<16x32xf32>
    %36 = arith.truncf %35 : vector<16x32xf32> to vector<16x32xbf16>
    %c0_28 = arith.constant 0 : index
    %c0_29 = arith.constant 0 : index
    %37 = vector.load %arg12[%c0_28, %c0_29] : memref<32x32xbf16, #tpu.memory_space<vmem>>, vector<32x32xbf16>
    %cst_30 = arith.constant dense<0.000000e+00> : vector<16x32xf32>
    %38 = tpu.matmul %36, %37, %cst_30 {dimension_numbers = #tpu.dot_dimension_numbers<[1], [0], [0], [1], [0, 0, 1, 1], [], []>} : vector<16x32xbf16>, vector<32x32xbf16>, vector<16x32xf32> -> vector<16x32xf32>
    %c0_31 = arith.constant 0 : index
    %c0_32 = arith.constant 0 : index
    %39 = vector.load %arg13[%c0_31, %c0_32] : memref<1x32xf32, #tpu.memory_space<vmem>>, vector<1x32xf32>
    %40 = vector.broadcast %39 : vector<1x32xf32> to vector<16x32xf32>
    %41 = arith.addf %38, %40 : vector<16x32xf32>
    %cst_33 = arith.constant 0.000000e+00 : f32
    %42 = vector.broadcast %cst_33 : f32 to vector<16x32xf32>
    %43 = arith.maximumf %41, %42 : vector<16x32xf32>
    %c0_34 = arith.constant 0 : index
    %c0_35 = arith.constant 0 : index
    %44 = vector.load %arg14[%c0_34, %c0_35] : memref<1x32xf32, #tpu.memory_space<vmem>>, vector<1x32xf32>
    %45 = vector.broadcast %44 : vector<1x32xf32> to vector<16x32xf32>
    %46 = arith.mulf %43, %45 : vector<16x32xf32>
    %cst_36 = arith.constant dense<0.000000e+00> : vector<16xf32>
    %47 = vector.multi_reduction <add>, %46, %cst_36 [1] : vector<16x32xf32> to vector<16xf32>
    %48 = vector.shape_cast %47 : vector<16xf32> to vector<16x1xf32>
    %c0_37 = arith.constant 0 : index
    %c0_38 = arith.constant 0 : index
    %49 = vector.load %arg15[%c0_37, %c0_38] : memref<1x1xf32, #tpu.memory_space<vmem>>, vector<1x1xf32>
    %50 = vector.broadcast %49 : vector<1x1xf32> to vector<16x1xf32>
    %51 = arith.addf %48, %50 : vector<16x1xf32>
    %c0_39 = arith.constant 0 : index
    %c0_40 = arith.constant 0 : index
    %52 = vector.load %arg16[%c0_39, %c0_40] : memref<16x1xf32, #tpu.memory_space<vmem>>, vector<16x1xf32>
    tpu.vector_store %arg16[%c0_39, %c0_40], %51 {strides = array<i32>} : memref<16x1xf32, #tpu.memory_space<vmem>>, vector<16x1xf32>,
    return
  }
  func.func @transform_0(%arg0: i32) -> (i32, i32) {
    %c0_i32 = arith.constant 0 : i32
    %c0_i32_0 = arith.constant 0 : i32
    return %arg0, %c0_i32 : i32, i32
  }
  func.func @transform_1(%arg0: i32) -> (i32, i32) {
    %c0_i32 = arith.constant 0 : i32
    %c0_i32_0 = arith.constant 0 : i32
    return %arg0, %c0_i32 : i32, i32
  }
  func.func @transform_2(%arg0: i32) -> (i32, i32) {
    %c0_i32 = arith.constant 0 : i32
    %c0_i32_0 = arith.constant 0 : i32
    return %arg0, %c0_i32 : i32, i32
  }
  func.func @transform_3(%arg0: i32) -> (i32, i32) {
    %c0_i32 = arith.constant 0 : i32
    %c0_i32_0 = arith.constant 0 : i32
    %c0_i32_1 = arith.constant 0 : i32
    return %c0_i32, %c0_i32_0 : i32, i32
  }
  func.func @transform_4(%arg0: i32) -> (i32, i32) {
    %c0_i32 = arith.constant 0 : i32
    %c0_i32_0 = arith.constant 0 : i32
    %c0_i32_1 = arith.constant 0 : i32
    return %c0_i32, %c0_i32_0 : i32, i32
  }
  func.func @transform_5(%arg0: i32) -> (i32, i32) {
    %c0_i32 = arith.constant 0 : i32
    %c0_i32_0 = arith.constant 0 : i32
    %c0_i32_1 = arith.constant 0 : i32
    return %c0_i32, %c0_i32_0 : i32, i32
  }
  func.func @transform_6(%arg0: i32) -> (i32, i32) {
    %c0_i32 = arith.constant 0 : i32
    %c0_i32_0 = arith.constant 0 : i32
    %c0_i32_1 = arith.constant 0 : i32
    return %c0_i32, %c0_i32_0 : i32, i32
  }
  func.func @transform_7(%arg0: i32) -> (i32, i32) {
    %c0_i32 = arith.constant 0 : i32
    %c0_i32_0 = arith.constant 0 : i32
    %c0_i32_1 = arith.constant 0 : i32
    return %c0_i32, %c0_i32_0 : i32, i32
  }
  func.func @transform_8(%arg0: i32) -> (i32, i32) {
    %c0_i32 = arith.constant 0 : i32
    %c0_i32_0 = arith.constant 0 : i32
    %c0_i32_1 = arith.constant 0 : i32
    return %c0_i32, %c0_i32_0 : i32, i32
  }
  func.func @transform_9(%arg0: i32) -> (i32, i32) {
    %c0_i32 = arith.constant 0 : i32
    %c0_i32_0 = arith.constant 0 : i32
    %c0_i32_1 = arith.constant 0 : i32
    return %c0_i32, %c0_i32_0 : i32, i32
  }
  func.func @transform_10(%arg0: i32) -> (i32, i32) {
    %c0_i32 = arith.constant 0 : i32
    %c0_i32_0 = arith.constant 0 : i32
    %c0_i32_1 = arith.constant 0 : i32
    return %c0_i32, %c0_i32_0 : i32, i32
  }
  func.func @transform_11(%arg0: i32) -> (i32, i32) {
    %c0_i32 = arith.constant 0 : i32
    %c0_i32_0 = arith.constant 0 : i32
    %c0_i32_1 = arith.constant 0 : i32
    return %c0_i32, %c0_i32_0 : i32, i32
  }
  func.func @transform_12(%arg0: i32) -> (i32, i32) {
    %c0_i32 = arith.constant 0 : i32
    %c0_i32_0 = arith.constant 0 : i32
    %c0_i32_1 = arith.constant 0 : i32
    return %c0_i32, %c0_i32_0 : i32, i32
  }
  func.func @transform_13(%arg0: i32) -> (i32, i32) {
    %c0_i32 = arith.constant 0 : i32
    %c0_i32_0 = arith.constant 0 : i32
    %c0_i32_1 = arith.constant 0 : i32
    return %c0_i32, %c0_i32_0 : i32, i32
  }
  func.func @transform_14(%arg0: i32) -> (i32, i32) {
    %c0_i32 = arith.constant 0 : i32
    %c0_i32_0 = arith.constant 0 : i32
    %c0_i32_1 = arith.constant 0 : i32
    return %c0_i32, %c0_i32_0 : i32, i32
  }
  func.func @transform_15(%arg0: i32) -> (i32, i32) {
    %c0_i32 = arith.constant 0 : i32
    %c0_i32_0 = arith.constant 0 : i32
    return %arg0, %c0_i32 : i32, i32
  }
}

</mosaic_0001>

<llo_original>
// kernel: graphrec_forward.9
$region0: #{graphrec_forward.9}
  #allocation0 [shape = 'u32[]', space=smem, size = 0x4, offset = 0x4, fixed_abs, tag = 'smem constant byte address 0x4 - core index']
  #allocation1 [shape = 'u32[144,128]{1,0:T(1,128)}', space=vmem, size = 0x12000, scoped, tag = 'internal scratch']
  %s0 = inlined_call_operand.vmem [shape: bf16[32,64], index: 0, kind: input, shape index: {}]
  %s1 = inlined_call_operand.vmem [shape: bf16[64,32], index: 1, kind: input, shape index: {}]
  %s2 = inlined_call_operand.vmem [shape: f32[1,32], index: 2, kind: input, shape index: {}]
  %s3 = inlined_call_operand.vmem [shape: bf16[32,32], index: 3, kind: input, shape index: {}]
  %s4 = inlined_call_operand.vmem [shape: f32[1,32], index: 4, kind: input, shape index: {}]
  %s5 = inlined_call_operand.vmem [shape: bf16[32,32], index: 5, kind: output, shape index: {}]
  %s6 = sld [smem:[#allocation0]]
  $region53: #{graphrec_forward.9} parent=0
    _
  %s8 = ssub.s32 1, %s6
  %s9 = scalar_select 0, %s8, %s6
  loop: start=0, step=1, limit=4
  $region2: #{graphrec_forward.9} parent=0 // loop_pre_header
    _
  $region3: #{graphrec_forward.9} parent=0 // loop_header
    %s11 = sphi 0, %s15
    %p12 = scmp.ge.s32.totalorder %s11, 4
    %s21 = sphi 0, %s23
    %s24 = sphi 0, %s21
    %s25 = sphi 0, %s24
    %s41 = sphi 0, %s25
    %s45 = sphi 0, %s45
    %s47 = sphi 0, %s45
    %s48 = sphi 0, %s47
    %s62 = sphi 0, %s48
    %s66 = sphi 0, %s66
    %s68 = sphi 0, %s66
    %s69 = sphi 0, %s68
    %s83 = sphi 0, %s69
    %s87 = sphi 0, %s87
    %s89 = sphi 0, %s87
    %s90 = sphi 0, %s89
    %s104 = sphi 0, %s90
    %s108 = sphi 0, %s108
    %s110 = sphi 0, %s108
    %s111 = sphi 0, %s110
    %s125 = sphi 0, %s111
    %s131 = sphi 0, %s133
    %s134 = sphi 0, %s131
    %s135 = sphi 0, %s134
    %s151 = sphi 0, %s135
  $region4: #{graphrec_forward.9} parent=0 // loop_header_branch
    %14 = sbr.rel (%p12) target = $region8
  $region5: #{graphrec_forward.9} parent=0 // loop_body
    %s16 = ssub.s32 %s11, 1
    %s17 = ssub.s32 %s11, 2
    %s18 = sadd.s32 %s11, 1
    %s19 = ssub.s32 %s11, %s18
    %p20 = scmp.eq.s32.totalorder %s19, 0
    %s22 = sadd.s32 %s21, 1
    %s23 = scalar_select %p20, %s21, %s22
    %p26 = pneg %p20
    %p27 = scmp.eq.s32.totalorder %s11, 1
    %p28 = por %p26, %p27
    %p29 = scmp.ne.s32.totalorder %s21, %s24
    %p30 = scmp.eq.s32.totalorder %s11, 0
    %p31 = por %p29, %p30
    %p32 = scmp.ne.s32.totalorder %s21, %s24
    %p33 = scmp.eq.s32.totalorder %s16, 1
    %p34 = por %p32, %p33
    %p35 = scmp.ne.s32.totalorder %s24, %s25
    %p36 = scmp.eq.s32.totalorder %s16, 0
    %p37 = por %p35, %p36
    %p38 = scmp.ne.s32.totalorder %s24, %s25
    %p39 = scmp.eq.s32.totalorder %s17, 1
    %p40 = por %p38, %p39
    %p42 = scmp.ne.s32.totalorder %s25, %s41
    %p43 = scmp.eq.s32.totalorder %s17, 0
    %p44 = por %p42, %p43
    %s46 = sadd.s32 %s45, 1
    %p49 = scmp.eq.s32.totalorder %s11, 1
    %p50 = scmp.ne.s32.totalorder %s45, %s47
    %p51 = scmp.eq.s32.totalorder %s11, 0
    %p52 = por %p50, %p51
    %p53 = scmp.ne.s32.totalorder %s45, %s47
    %p54 = scmp.eq.s32.totalorder %s16, 1
    %p55 = por %p53, %p54
    %p56 = scmp.ne.s32.totalorder %s47, %s48
    %p57 = scmp.eq.s32.totalorder %s16, 0
    %p58 = por %p56, %p57
    %p59 = scmp.ne.s32.totalorder %s47, %s48
    %p60 = scmp.eq.s32.totalorder %s17, 1
    %p61 = por %p59, %p60
    %p63 = scmp.ne.s32.totalorder %s48, %s62
    %p64 = scmp.eq.s32.totalorder %s17, 0
    %p65 = por %p63, %p64
    %s67 = sadd.s32 %s66, 1
    %p70 = scmp.eq.s32.totalorder %s11, 1
    %p71 = scmp.ne.s32.totalorder %s66, %s68
    %p72 = scmp.eq.s32.totalorder %s11, 0
    %p73 = por %p71, %p72
    %p74 = scmp.ne.s32.totalorder %s66, %s68
    %p75 = scmp.eq.s32.totalorder %s16, 1
    %p76 = por %p74, %p75
    %p77 = scmp.ne.s32.totalorder %s68, %s69
    %p78 = scmp.eq.s32.totalorder %s16, 0
    %p79 = por %p77, %p78
    %p80 = scmp.ne.s32.totalorder %s68, %s69
    %p81 = scmp.eq.s32.totalorder %s17, 1
    %p82 = por %p80, %p81
    %p84 = scmp.ne.s32.totalorder %s69, %s83
    %p85 = scmp.eq.s32.totalorder %s17, 0
    %p86 = por %p84, %p85
    %s88 = sadd.s32 %s87, 1
    %p91 = scmp.eq.s32.totalorder %s11, 1
    %p92 = scmp.ne.s32.totalorder %s87, %s89
    %p93 = scmp.eq.s32.totalorder %s11, 0
    %p94 = por %p92, %p93
    %p95 = scmp.ne.s32.totalorder %s87, %s89
    %p96 = scmp.eq.s32.totalorder %s16, 1
    %p97 = por %p95, %p96
    %p98 = scmp.ne.s32.totalorder %s89, %s90
    %p99 = scmp.eq.s32.totalorder %s16, 0
    %p100 = por %p98, %p99
    %p101 = scmp.ne.s32.totalorder %s89, %s90
    %p102 = scmp.eq.s32.totalorder %s17, 1
    %p103 = por %p101, %p102
    %p105 = scmp.ne.s32.totalorder %s90, %s104
    %p106 = scmp.eq.s32.totalorder %s17, 0
    %p107 = por %p105, %p106
    %s109 = sadd.s32 %s108, 1
    %p112 = scmp.eq.s32.totalorder %s11, 1
    %p113 = scmp.ne.s32.totalorder %s108, %s110
    %p114 = scmp.eq.s32.totalorder %s11, 0
    %p115 = por %p113, %p114
    %p116 = scmp.ne.s32.totalorder %s108, %s110
    %p117 = scmp.eq.s32.totalorder %s16, 1
    %p118 = por %p116, %p117
    %p119 = scmp.ne.s32.totalorder %s110, %s111
    %p120 = scmp.eq.s32.totalorder %s16, 0
    %p121 = por %p119, %p120
    %p122 = scmp.ne.s32.totalorder %s110, %s111
    %p123 = scmp.eq.s32.totalorder %s17, 1
    %p124 = por %p122, %p123
    %p126 = scmp.ne.s32.totalorder %s111, %s125
    %p127 = scmp.eq.s32.totalorder %s17, 0
    %p128 = por %p126, %p127
    %s129 = ssub.s32 %s11, %s18
    %p130 = scmp.eq.s32.totalorder %s129, 0
    %s132 = sadd.s32 %s131, 1
    %s133 = scalar_select %p130, %s131, %s132
    %p136 = pneg %p130
    %p137 = scmp.eq.s32.totalorder %s11, 1
    %p138 = por %p136, %p137
    %p139 = scmp.ne.s32.totalorder %s131, %s134
    %p140 = scmp.eq.s32.totalorder %s11, 0
    %p141 = por %p139, %p140
    %p142 = scmp.ne.s32.totalorder %s131, %s134
    %p143 = scmp.eq.s32.totalorder %s16, 1
    %p144 = por %p142, %p143
    %p145 = scmp.ne.s32.totalorder %s134, %s135
    %p146 = scmp.eq.s32.totalorder %s16, 0
    %p147 = por %p145, %p146
    %p148 = scmp.ne.s32.totalorder %s134, %s135
    %p149 = scmp.eq.s32.totalorder %s17, 1
    %p150 = por %p148, %p149
    %p152 = scmp.ne.s32.totalorder %s135, %s151
    %p153 = scmp.eq.s32.totalorder %s17, 0
    %p154 = por %p152, %p153
    %p155 = scmp.le.s32.totalorder 1, %s11
    %p156 = scmp.lt.s32.totalorder %s11, 3
    %p157 = pnand %p155, %p156
    %p158 = pneg %p157
    // Predicated region
    $region9: #{graphrec_forward.9} parent=5 // pred_check
      _
    $region10: #{graphrec_forward.9} parent=5 // pred_check_branch
      %160 = sbr.rel (%p157) target = $region12
    $region11: #{graphrec_forward.9} parent=5 // pred_region
      %s161 = ssub.s32 %s11, 1
      // Predicated region
      $region13: #{graphrec_forward.9} parent=11 // pred_check
        %p162 = pneg %p58
      $region14: #{graphrec_forward.9} parent=11 // pred_check_branch
        %164 = sbr.rel (%p162) target = $region16
      $region15: #{graphrec_forward.9} parent=11 // pred_region
        _
      $region16: #{graphrec_forward.9} parent=11 // pred_fallthru
        _
      // Predicated region
      $region17: #{graphrec_forward.9} parent=11 // pred_check
        %p165 = pneg %p79
      $region18: #{graphrec_forward.9} parent=11 // pred_check_branch
        %167 = sbr.rel (%p165) target = $region20
      $region19: #{graphrec_forward.9} parent=11 // pred_region
        _
      $region20: #{graphrec_forward.9} parent=11 // pred_fallthru
        _
      // Predicated region
      $region21: #{graphrec_forward.9} parent=11 // pred_check
        %p168 = pneg %p100
      $region22: #{graphrec_forward.9} parent=11 // pred_check_branch
        %170 = sbr.rel (%p168) target = $region24
      $region23: #{graphrec_forward.9} parent=11 // pred_region
        _
      $region24: #{graphrec_forward.9} parent=11 // pred_fallthru
        _
      // Predicated region
      $region25: #{graphrec_forward.9} parent=11 // pred_check
        %p171 = pneg %p121
      $region26: #{graphrec_forward.9} parent=11 // pred_check_branch
        %173 = sbr.rel (%p171) target = $region28
      $region27: #{graphrec_forward.9} parent=11 // pred_region
        _
      $region28: #{graphrec_forward.9} parent=11 // pred_fallthru
        _
    $region12: #{graphrec_forward.9} parent=5 // pred_fallthru
      _
    %p174 = scmp.lt.s32.totalorder %s11, 2
    // Predicated region
    $region29: #{graphrec_forward.9} parent=5 // pred_check
      %p175 = pneg %p174
    $region30: #{graphrec_forward.9} parent=5 // pred_check_branch
      %177 = sbr.rel (%p175) target = $region32
    $region31: #{graphrec_forward.9} parent=5 // pred_region
      // Predicated region
      $region33: #{graphrec_forward.9} parent=31 // pred_check
        %p178 = pneg %p31
      $region34: #{graphrec_forward.9} parent=31 // pred_check_branch
        %180 = sbr.rel (%p178) target = $region36
      $region35: #{graphrec_forward.9} parent=31 // pred_region
        %s181 = smul.u32 2, %s11
        %p182 = scmp.lt.s32.totalorder %s181, 3
        %s183 = scalar_select %p182, %s181, 3
        %s184 = smul.addr %s183, 4
        %s185 = scalar_lea.vmem %s0, %s184
        %s186 = smul.u32 2, %s11
      $region36: #{graphrec_forward.9} parent=31 // pred_fallthru
        _
    $region32: #{graphrec_forward.9} parent=5 // pred_fallthru
      _
    %p187 = scmp.le.s32.totalorder 1, %s11
    %p188 = scmp.lt.s32.totalorder %s11, 3
    %p189 = pnand %p187, %p188
    %p190 = pneg %p189
    // Predicated region
    $region37: #{graphrec_forward.9} parent=5 // pred_check
      _
    $region38: #{graphrec_forward.9} parent=5 // pred_check_branch
      %192 = sbr.rel (%p189) target = $region40
    $region39: #{graphrec_forward.9} parent=5 // pred_region
      %s193 = ssub.s32 %s11, 1
      %s194 = smul.u32 2, %s16
      %p195 = scmp.lt.s32.totalorder %s194, 3
      %s196 = scalar_select %p195, %s194, 3
      %s197 = smul.addr %s196, 4
      %s198 = scalar_lea.vmem %s0, %s197
      %p199 = pneg %p37
      %p200 = pneg %p34
      %p201 = pneg %p58
      %p202 = pneg %p55
      %p203 = pneg %p79
      %p204 = pneg %p76
      %p205 = pneg %p100
      %p206 = pneg %p97
      %p207 = pneg %p121
      %p208 = pneg %p118
      %p209 = pneg %p147
      %p210 = pneg %p144
      %s211 = smul.u32 2, %s16
      %p212 = scmp.lt.s32.totalorder %s211, 3
      %s213 = scalar_select %p212, %s211, 3
      %s214 = smul.addr %s213, 4
      %s215 = scalar_lea.vmem %s5, %s214
      %s216 = smul.u32 2, %s16
      %p217 = scmp.lt.s32.totalorder %s216, 3
      %s218 = scalar_select %p217, %s216, 3
      %s219 = smul.addr %s218, 4
      %s220 = scalar_lea.vmem %s0, %s219
      %s221 = smul.u32 2, %s16
      %s222 = smul.u32 2, %s16
      %p223 = scmp.lt.s32.totalorder %s222, 3
      %s224 = scalar_select %p223, %s222, 3
      %s225 = smul.addr %s224, 4
      %s226 = scalar_lea.vmem %s5, %s225
      %s227 = smul.u32 2, %s16
      %v229 = vld [vmem:[%s220] sm:$0xf]
      %v230 = vld [vmem:[%s220 + $0x4] sm:$0xf]
      %v231 = vld [vmem:[%s1] sm:$0xf]
      %v232 = vld [vmem:[%s1 + $0x4] sm:$0xf]
      %v233 = vld [vmem:[%s1 + $0x8] sm:$0xf]
      %v234 = vld [vmem:[%s1 + $0xc] sm:$0xf]
      %v235 = vld [vmem:[%s1 + $0x10] sm:$0xf]
      %v236 = vld [vmem:[%s1 + $0x14] sm:$0xf]
      %v237 = vld [vmem:[%s1 + $0x18] sm:$0xf]
      %v238 = vld [vmem:[%s1 + $0x1c] sm:$0xf]
      %v239 = vld [vmem:[%s2] sm:$0x1]
      %v241 = vlaneseq
      %v242 = vshrl.u32 %v241, 7
      %v243 = vsub.s32 0, %v242
      %v244 = vrot.slane %v239, %v243
      %v248 = vunpack.c.l.b16 %v229
      %v249 = vunpack.c.l.b16 %v230
      %v250 = vpack.c.b16 %v249, %v248
      %v259 = vunpack.c.l.b16 %v231
      %v260 = vunpack.c.l.b16 %v232
      %v261 = vunpack.c.l.b16 %v233
      %v262 = vunpack.c.l.b16 %v234
      %v263 = vunpack.c.l.b16 %v235
      %v264 = vunpack.c.l.b16 %v236
      %v265 = vunpack.c.l.b16 %v237
      %v266 = vunpack.c.l.b16 %v238
      %v267 = vpack.c.b16 %v260, %v259
      %v268 = vpack.c.b16 %v262, %v261
      %v269 = vpack.c.b16 %v264, %v263
      %v270 = vpack.c.b16 %v266, %v265
      %vm275 = vcmask 523264
      %v277 = vsel %vm275, %v250, 0
      %279 = vmatprep.subr.bf16.mxu0 0
      %280 = vmatpush1.bf16.msra.mxu0 0
      %281 = vmatprep.subr.bf16.mxu0 0
      %282 = vmatpush1.bf16.msra.mxu0 0
      %283 = vmatprep.subr.bf16.mxu0 0
      %284 = vmatpush1.bf16.msra.mxu0 0
      %285 = vmatprep.subr.bf16.mxu0 0
      %286 = vmatpush1.bf16.msra.mxu0 0
      %287 = vmatprep.subr.bf16.mxu0 0
      %288 = vmatpush1.bf16.msra.mxu0 %v270
      %289 = vmatprep.subr.bf16.mxu0 0
      %290 = vmatpush1.bf16.msra.mxu0 %v269
      %291 = vmatprep.subr.bf16.mxu0 0
      %292 = vmatpush1.bf16.msra.mxu0 %v268
      %293 = vmatprep.subr.bf16.mxu0 0
      %294 = vmatpush1.bf16.msra.mxu0 %v267
      %295 = vmatprep.subr.bf16.mxu0 0
      %296 = vmatpush2.bf16.msra.mxu0 0
      %297 = vmatprep.subr.bf16.mxu0 0
      %298 = vmatpush2.bf16.msra.mxu0 0
      %299 = vmatprep.subr.bf16.mxu0 0
      %300 = vmatpush2.bf16.msra.mxu0 0
      %301 = vmatprep.subr.bf16.mxu0 0
      %302 = vmatpush2.bf16.msra.mxu0 0
      %303 = vmatprep.subr.bf16.mxu0 0
      %304 = vmatpush2.bf16.msra.mxu0 0
      %305 = vmatprep.subr.bf16.mxu0 0
      %306 = vmatpush2.bf16.msra.mxu0 0
      %307 = vmatprep.subr.bf16.mxu0 0
      %308 = vmatpush2.bf16.msra.mxu0 0
      %309 = vmatprep.subr.bf16.mxu0 0
      %310 = vmatpush2.bf16.msra.mxu0 0
      %311 = vmatprep.mubr.bf16.mxu0 0
      %312 = vmatmul.mubr.bf16.gmra.mxu0 %v277
      %v313 = vpop.f32.mrf.mxu0
      %v314 = vadd.f32 %v244, %v313
      %v315 = vpop.f32.mrf.mxu0
      %v316 = vpop.f32.mrf.mxu0
      %v317 = vadd.f32 %v244, %v316
      %v318 = vpop.f32.mrf.mxu0
      %319 = vdwg.mxu0
      %v320 = vmax.f32 %v314, 0.0
      %v321 = vmax.f32 %v317, 0.0
      %v322 = vpack.c.bf16 %v321, %v320
      %v323 = vld [vmem:[%s3] sm:$0xf]
      %v324 = vld [vmem:[%s3 + $0x4] sm:$0xf]
      %v325 = vld [vmem:[%s3 + $0x8] sm:$0xf]
      %v326 = vld [vmem:[%s3 + $0xc] sm:$0xf]
      %v327 = vld [vmem:[%s4] sm:$0x1]
      %v329 = vlaneseq
      %v330 = vshrl.u32 %v329, 7
      %v331 = vsub.s32 0, %v330
      %v332 = vrot.slane %v327, %v331
      %v338 = vunpack.c.l.b16 %v323
      %v339 = vunpack.c.l.b16 %v324
      %v340 = vunpack.c.l.b16 %v325
      %v341 = vunpack.c.l.b16 %v326
      %v342 = vpack.c.b16 %v339, %v338
      %v343 = vpack.c.b16 %v341, %v340
      %vm346 = vcmask 261120
      %v348 = vsel %vm346, %v322, 0
      %350 = vmatprep.subr.bf16.mxu0 0
      %351 = vmatpush1.bf16.msra.mxu0 0
      %352 = vmatprep.subr.bf16.mxu0 0
      %353 = vmatpush1.bf16.msra.mxu0 0
      %354 = vmatprep.subr.bf16.mxu0 0
      %355 = vmatpush1.bf16.msra.mxu0 0
      %356 = vmatprep.subr.bf16.mxu0 0
      %357 = vmatpush1.bf16.msra.mxu0 0
      %358 = vmatprep.subr.bf16.mxu0 0
      %359 = vmatpush1.bf16.msra.mxu0 0
      %360 = vmatprep.subr.bf16.mxu0 0
      %361 = vmatpush1.bf16.msra.mxu0 0
      %362 = vmatprep.subr.bf16.mxu0 0
      %363 = vmatpush1.bf16.msra.mxu0 %v343
      %364 = vmatprep.subr.bf16.mxu0 0
      %365 = vmatpush1.bf16.msra.mxu0 %v342
      %366 = vmatprep.subr.bf16.mxu0 0
      %367 = vmatpush2.bf16.msra.mxu0 0
      %368 = vmatprep.subr.bf16.mxu0 0
      %369 = vmatpush2.bf16.msra.mxu0 0
      %370 = vmatprep.subr.bf16.mxu0 0
      %371 = vmatpush2.bf16.msra.mxu0 0
      %372 = vmatprep.subr.bf16.mxu0 0
      %373 = vmatpush2.bf16.msra.mxu0 0
      %374 = vmatprep.subr.bf16.mxu0 0
      %375 = vmatpush2.bf16.msra.mxu0 0
      %376 = vmatprep.subr.bf16.mxu0 0
      %377 = vmatpush2.bf16.msra.mxu0 0
      %378 = vmatprep.subr.bf16.mxu0 0
      %379 = vmatpush2.bf16.msra.mxu0 0
      %380 = vmatprep.subr.bf16.mxu0 0
      %381 = vmatpush2.bf16.msra.mxu0 0
      %382 = vmatprep.mubr.bf16.mxu0 0
      %383 = vmatmul.mubr.bf16.gmra.mxu0 %v348
      %v384 = vpop.f32.mrf.mxu0
      %v385 = vadd.f32 %v332, %v384
      %v386 = vpop.f32.mrf.mxu0
      %v387 = vpop.f32.mrf.mxu0
      %v388 = vadd.f32 %v332, %v387
      %v389 = vpop.f32.mrf.mxu0
      %390 = vdwg.mxu0
      %v391 = vpack.c.bf16 %v388, %v385
      %v393 = vunpack.c.l.b16 %v391
      %v394 = vunpack.c.h.b16 %v391
      %v395 = vpack.c.b16 %v393, %v393
      %v396 = vpack.c.b16 %v394, %v394
      %vm399 = vcmask 257024
      %400 = vst.msk [vmem:[%s226] sm:$0xf] %vm399, %v395
      %401 = vst.msk [vmem:[%s226 + $0x4] sm:$0xf] %vm399, %v396
      %s402 = smul.u32 2, %s16
      %p403 = scmp.lt.s32.totalorder %s402, 3
      %s404 = scalar_select %p403, %s402, 3
      %s405 = smul.addr %s404, 4
      %s406 = scalar_lea.vmem %s5, %s405
      // Predicated region
      $region41: #{graphrec_forward.9} parent=39 // pred_check
        %p407 = pneg %p144
      $region42: #{graphrec_forward.9} parent=39 // pred_check_branch
        %409 = sbr.rel (%p407) target = $region44
      $region43: #{graphrec_forward.9} parent=39 // pred_region
        %s410 = smul.u32 2, %s16
      $region44: #{graphrec_forward.9} parent=39 // pred_fallthru
        _
    $region40: #{graphrec_forward.9} parent=5 // pred_fallthru
      _
    %p411 = scmp.le.s32.totalorder 2, %s11
    // Predicated region
    $region45: #{graphrec_forward.9} parent=5 // pred_check
      %p412 = pneg %p411
    $region46: #{graphrec_forward.9} parent=5 // pred_check_branch
      %414 = sbr.rel (%p412) target = $region48
    $region47: #{graphrec_forward.9} parent=5 // pred_region
      %s415 = ssub.s32 %s11, 2
      // Predicated region
      $region49: #{graphrec_forward.9} parent=47 // pred_check
        %p416 = pneg %p150
      $region50: #{graphrec_forward.9} parent=47 // pred_check_branch
        %418 = sbr.rel (%p416) target = $region52
      $region51: #{graphrec_forward.9} parent=47 // pred_region
        %s419 = smul.u32 2, %s17
        %p420 = scmp.lt.s32.totalorder %s419, 3
        %s421 = scalar_select %p420, %s419, 3
        %s422 = smul.addr %s421, 4
        %s423 = scalar_lea.vmem %s5, %s422
      $region52: #{graphrec_forward.9} parent=47 // pred_fallthru
        _
    $region48: #{graphrec_forward.9} parent=5 // pred_fallthru
      _
  $region6: #{graphrec_forward.9} parent=0 // loop_footer
    %s15 = sadd.s32 1, %s11
  $region7: #{graphrec_forward.9} parent=0 // loop_footer_branch
    %10 = sbr.rel target = $region3
  $region8: #{graphrec_forward.9} parent=0 // loop_exit
    _

// kernel: graphrec_forward.10
$region0: #{graphrec_forward.10}
  #allocation0 [shape = 'u32[]', space=smem, size = 0x4, offset = 0x4, fixed_abs, tag = 'smem constant byte address 0x4 - core index']
  #allocation1 [shape = 'u32[144,128]{1,0:T(1,128)}', space=vmem, size = 0x12000, scoped, tag = 'internal scratch']
  #allocation2 [shape = 'f32[1,1]{1,0:T(1,128)S(1)}', space=vmem, size = 0x200, scoped, tag = 'scoped memory for graphrec_forward.10']
  %s0 = inlined_call_operand.vmem [shape: bf16[16,8,32], index: 0, kind: input, shape index: {}]
  %s1 = inlined_call_operand.vmem [shape: bf16[16,8,32], index: 1, kind: input, shape index: {}]
  %s2 = inlined_call_operand.vmem [shape: f32[16,8], index: 2, kind: input, shape index: {}]
  %s3 = inlined_call_operand.vmem [shape: bf16[64,32], index: 3, kind: input, shape index: {}]
  %s4 = inlined_call_operand.vmem [shape: f32[1,32], index: 4, kind: input, shape index: {}]
  %s5 = inlined_call_operand.vmem [shape: f32[1,32], index: 5, kind: input, shape index: {}]
  %s6 = inlined_call_operand.<no memory space> [shape: f32[1,1], index: 6, kind: input, shape index: {}]
  %s7 = inlined_call_operand.vmem [shape: bf16[32,32], index: 7, kind: input, shape index: {}]
  %s8 = inlined_call_operand.vmem [shape: f32[1,32], index: 8, kind: input, shape index: {}]
  %s9 = inlined_call_operand.vmem [shape: bf16[16,32], index: 9, kind: output, shape index: {}]
  %s10 = sld [smem:[#allocation0]]
  $region46: #{graphrec_forward.10} parent=0
    _
  %s12 = ssub.s32 1, %s10
  %s13 = scalar_select 0, %s12, %s10
  %v14 = vstv %s6
  %15 = vst [vmem:[#allocation2] sm:$0x1] %v14
  // Predicated region
  $region2: #{graphrec_forward.10} parent=0 // pred_check
    _
  $region3: #{graphrec_forward.10} parent=0 // pred_check_branch
    %17 = sbr.rel (0) target = $region5
  $region4: #{graphrec_forward.10} parent=0 // pred_region
    _
  $region5: #{graphrec_forward.10} parent=0 // pred_fallthru
    _
  // Predicated region
  $region6: #{graphrec_forward.10} parent=0 // pred_check
    _
  $region7: #{graphrec_forward.10} parent=0 // pred_check_branch
    %19 = sbr.rel (0) target = $region9
  $region8: #{graphrec_forward.10} parent=0 // pred_region
    _
  $region9: #{graphrec_forward.10} parent=0 // pred_fallthru
    _
  // Predicated region
  $region10: #{graphrec_forward.10} parent=0 // pred_check
    _
  $region11: #{graphrec_forward.10} parent=0 // pred_check_branch
    %21 = sbr.rel (0) target = $region13
  $region12: #{graphrec_forward.10} parent=0 // pred_region
    _
  $region13: #{graphrec_forward.10} parent=0 // pred_fallthru
    _
  // Predicated region
  $region14: #{graphrec_forward.10} parent=0 // pred_check
    _
  $region15: #{graphrec_forward.10} parent=0 // pred_check_branch
    %23 = sbr.rel (0) target = $region17
  $region16: #{graphrec_forward.10} parent=0 // pred_region
    _
  $region17: #{graphrec_forward.10} parent=0 // pred_fallthru
    _
  // Predicated region
  $region18: #{graphrec_forward.10} parent=0 // pred_check
    _
  $region19: #{graphrec_forward.10} parent=0 // pred_check_branch
    %25 = sbr.rel (0) target = $region21
  $region20: #{graphrec_forward.10} parent=0 // pred_region
    _
  $region21: #{graphrec_forward.10} parent=0 // pred_fallthru
    _
  // Predicated region
  $region22: #{graphrec_forward.10} parent=0 // pred_check
    _
  $region23: #{graphrec_forward.10} parent=0 // pred_check_branch
    %27 = sbr.rel (0) target = $region25
  $region24: #{graphrec_forward.10} parent=0 // pred_region
    _
  $region25: #{graphrec_forward.10} parent=0 // pred_fallthru
    _
  // Predicated region
  $region26: #{graphrec_forward.10} parent=0 // pred_check
    _
  $region27: #{graphrec_forward.10} parent=0 // pred_check_branch
    %29 = sbr.rel (0) target = $region29
  $region28: #{graphrec_forward.10} parent=0 // pred_region
    _
  $region29: #{graphrec_forward.10} parent=0 // pred_fallthru
    _
  // Predicated region
  $region30: #{graphrec_forward.10} parent=0 // pred_check
    _
  $region31: #{graphrec_forward.10} parent=0 // pred_check_branch
    %31 = sbr.rel (0) target = $region33
  $region32: #{graphrec_forward.10} parent=0 // pred_region
    _
  $region33: #{graphrec_forward.10} parent=0 // pred_fallthru
    _
  // Predicated region
  $region34: #{graphrec_forward.10} parent=0 // pred_check
    _
  $region35: #{graphrec_forward.10} parent=0 // pred_check_branch
    %33 = sbr.rel (0) target = $region37
  $region36: #{graphrec_forward.10} parent=0 // pred_region
    _
  $region37: #{graphrec_forward.10} parent=0 // pred_fallthru
    _
  %v35 = vld [vmem:[%s0] sm:$0xf]
  %v36 = vld [vmem:[%s0 + $0x4] sm:$0xf]
  %v37 = vld [vmem:[%s0 + $0x8] sm:$0xf]
  %v38 = vld [vmem:[%s0 + $0xc] sm:$0xf]
  %v39 = vld [vmem:[%s0 + $0x10] sm:$0xf]
  %v40 = vld [vmem:[%s0 + $0x14] sm:$0xf]
  %v41 = vld [vmem:[%s0 + $0x18] sm:$0xf]
  %v42 = vld [vmem:[%s0 + $0x1c] sm:$0xf]
  %v43 = vld [vmem:[%s0 + $0x20] sm:$0xf]
  %v44 = vld [vmem:[%s0 + $0x24] sm:$0xf]
  %v45 = vld [vmem:[%s0 + $0x28] sm:$0xf]
  %v46 = vld [vmem:[%s0 + $0x2c] sm:$0xf]
  %v47 = vld [vmem:[%s0 + $0x30] sm:$0xf]
  %v48 = vld [vmem:[%s0 + $0x34] sm:$0xf]
  %v49 = vld [vmem:[%s0 + $0x38] sm:$0xf]
  %v50 = vld [vmem:[%s0 + $0x3c] sm:$0xf]
  %v51 = vunpack.c.l.bf16 %v35
  %v52 = vunpack.c.l.bf16 %v36
  %v53 = vunpack.c.l.bf16 %v37
  %v54 = vunpack.c.l.bf16 %v38
  %v55 = vunpack.c.l.bf16 %v39
  %v56 = vunpack.c.l.bf16 %v40
  %v57 = vunpack.c.l.bf16 %v41
  %v58 = vunpack.c.l.bf16 %v42
  %v59 = vunpack.c.l.bf16 %v43
  %v60 = vunpack.c.l.bf16 %v44
  %v61 = vunpack.c.l.bf16 %v45
  %v62 = vunpack.c.l.bf16 %v46
  %v63 = vunpack.c.l.bf16 %v47
  %v64 = vunpack.c.l.bf16 %v48
  %v65 = vunpack.c.l.bf16 %v49
  %v66 = vunpack.c.l.bf16 %v50
  %v67 = vld [vmem:[%s1] sm:$0xf]
  %v68 = vld [vmem:[%s1 + $0x4] sm:$0xf]
  %v69 = vld [vmem:[%s1 + $0x8] sm:$0xf]
  %v70 = vld [vmem:[%s1 + $0xc] sm:$0xf]
  %v71 = vld [vmem:[%s1 + $0x10] sm:$0xf]
  %v72 = vld [vmem:[%s1 + $0x14] sm:$0xf]
  %v73 = vld [vmem:[%s1 + $0x18] sm:$0xf]
  %v74 = vld [vmem:[%s1 + $0x1c] sm:$0xf]
  %v75 = vld [vmem:[%s1 + $0x20] sm:$0xf]
  %v76 = vld [vmem:[%s1 + $0x24] sm:$0xf]
  %v77 = vld [vmem:[%s1 + $0x28] sm:$0xf]
  %v78 = vld [vmem:[%s1 + $0x2c] sm:$0xf]
  %v79 = vld [vmem:[%s1 + $0x30] sm:$0xf]
  %v80 = vld [vmem:[%s1 + $0x34] sm:$0xf]
  %v81 = vld [vmem:[%s1 + $0x38] sm:$0xf]
  %v82 = vld [vmem:[%s1 + $0x3c] sm:$0xf]
  %v83 = vunpack.c.l.bf16 %v67
  %v84 = vunpack.c.l.bf16 %v68
  %v85 = vunpack.c.l.bf16 %v69
  %v86 = vunpack.c.l.bf16 %v70
  %v87 = vunpack.c.l.bf16 %v71
  %v88 = vunpack.c.l.bf16 %v72
  %v89 = vunpack.c.l.bf16 %v73
  %v90 = vunpack.c.l.bf16 %v74
  %v91 = vunpack.c.l.bf16 %v75
  %v92 = vunpack.c.l.bf16 %v76
  %v93 = vunpack.c.l.bf16 %v77
  %v94 = vunpack.c.l.bf16 %v78
  %v95 = vunpack.c.l.bf16 %v79
  %v96 = vunpack.c.l.bf16 %v80
  %v97 = vunpack.c.l.bf16 %v81
  %v98 = vunpack.c.l.bf16 %v82
  %115 = vrot.lane.b32.xlu0 %v83, 32
  %v116 = vpop.permute.xlu0 %115
  %117 = vrot.lane.b32.xlu0 %v84, 32
  %v118 = vpop.permute.xlu0 %117
  %119 = vrot.lane.b32.xlu0 %v85, 32
  %v120 = vpop.permute.xlu0 %119
  %121 = vrot.lane.b32.xlu0 %v86, 32
  %v122 = vpop.permute.xlu0 %121
  %123 = vrot.lane.b32.xlu0 %v87, 32
  %v124 = vpop.permute.xlu0 %123
  %125 = vrot.lane.b32.xlu0 %v88, 32
  %v126 = vpop.permute.xlu0 %125
  %127 = vrot.lane.b32.xlu0 %v89, 32
  %v128 = vpop.permute.xlu0 %127
  %129 = vrot.lane.b32.xlu0 %v90, 32
  %v130 = vpop.permute.xlu0 %129
  %131 = vrot.lane.b32.xlu0 %v91, 32
  %v132 = vpop.permute.xlu0 %131
  %133 = vrot.lane.b32.xlu0 %v92, 32
  %v134 = vpop.permute.xlu0 %133
  %135 = vrot.lane.b32.xlu0 %v93, 32
  %v136 = vpop.permute.xlu0 %135
  %137 = vrot.lane.b32.xlu0 %v94, 32
  %v138 = vpop.permute.xlu0 %137
  %139 = vrot.lane.b32.xlu0 %v95, 32
  %v140 = vpop.permute.xlu0 %139
  %141 = vrot.lane.b32.xlu0 %v96, 32
  %v142 = vpop.permute.xlu0 %141
  %143 = vrot.lane.b32.xlu0 %v97, 32
  %v144 = vpop.permute.xlu0 %143
  %145 = vrot.lane.b32.xlu0 %v98, 32
  %v146 = vpop.permute.xlu0 %145
  %vm163 = vcmask 261120
  %v164 = vsel %vm163, %v51, %v116
  %v165 = vsel %vm163, %v52, %v118
  %v166 = vsel %vm163, %v53, %v120
  %v167 = vsel %vm163, %v54, %v122
  %v168 = vsel %vm163, %v55, %v124
  %v169 = vsel %vm163, %v56, %v126
  %v170 = vsel %vm163, %v57, %v128
  %v171 = vsel %vm163, %v58, %v130
  %v172 = vsel %vm163, %v59, %v132
  %v173 = vsel %vm163, %v60, %v134
  %v174 = vsel %vm163, %v61, %v136
  %v175 = vsel %vm163, %v62, %v138
  %v176 = vsel %vm163, %v63, %v140
  %v177 = vsel %vm163, %v64, %v142
  %v178 = vsel %vm163, %v65, %v144
  %v179 = vsel %vm163, %v66, %v146
  %v180 = vpack.c.bf16 %v165, %v164
  %v181 = vpack.c.bf16 %v167, %v166
  %v182 = vpack.c.bf16 %v169, %v168
  %v183 = vpack.c.bf16 %v171, %v170
  %v184 = vpack.c.bf16 %v173, %v172
  %v185 = vpack.c.bf16 %v175, %v174
  %v186 = vpack.c.bf16 %v177, %v176
  %v187 = vpack.c.bf16 %v179, %v178
  %v188 = vld [vmem:[%s3] sm:$0xf]
  %v189 = vld [vmem:[%s3 + $0x4] sm:$0xf]
  %v190 = vld [vmem:[%s3 + $0x8] sm:$0xf]
  %v191 = vld [vmem:[%s3 + $0xc] sm:$0xf]
  %v192 = vld [vmem:[%s3 + $0x10] sm:$0xf]
  %v193 = vld [vmem:[%s3 + $0x14] sm:$0xf]
  %v194 = vld [vmem:[%s3 + $0x18] sm:$0xf]
  %v195 = vld [vmem:[%s3 + $0x1c] sm:$0xf]
  %v196 = vld [vmem:[%s4] sm:$0x1]
  %v198 = vlaneseq
  %v199 = vshrl.u32 %v198, 7
  %v200 = vsub.s32 0, %v199
  %v201 = vrot.slane %v196, %v200
  %v211 = vunpack.c.l.b16 %v188
  %v212 = vunpack.c.l.b16 %v189
  %v213 = vunpack.c.l.b16 %v190
  %v214 = vunpack.c.l.b16 %v191
  %v215 = vunpack.c.l.b16 %v192
  %v216 = vunpack.c.l.b16 %v193
  %v217 = vunpack.c.l.b16 %v194
  %v218 = vunpack.c.l.b16 %v195
  %v219 = vpack.c.b16 %v212, %v211
  %v220 = vpack.c.b16 %v214, %v213
  %v221 = vpack.c.b16 %v216, %v215
  %v222 = vpack.c.b16 %v218, %v217
  %vm227 = vcmask 523264
  %v229 = vsel %vm227, %v180, 0
  %v232 = vsel %vm227, %v181, 0
  %v235 = vsel %vm227, %v182, 0
  %v238 = vsel %vm227, %v183, 0
  %v241 = vsel %vm227, %v184, 0
  %v244 = vsel %vm227, %v185, 0
  %v247 = vsel %vm227, %v186, 0
  %v250 = vsel %vm227, %v187, 0
  %252 = vmatprep.subr.bf16.mxu0 0
  %253 = vmatpush1.bf16.msra.mxu0 0
  %254 = vmatprep.subr.bf16.mxu0 0
  %255 = vmatpush1.bf16.msra.mxu0 0
  %256 = vmatprep.subr.bf16.mxu0 0
  %257 = vmatpush1.bf16.msra.mxu0 0
  %258 = vmatprep.subr.bf16.mxu0 0
  %259 = vmatpush1.bf16.msra.mxu0 0
  %260 = vmatprep.subr.bf16.mxu0 0
  %261 = vmatpush1.bf16.msra.mxu0 %v222
  %262 = vmatprep.subr.bf16.mxu0 0
  %263 = vmatpush1.bf16.msra.mxu0 %v221
  %264 = vmatprep.subr.bf16.mxu0 0
  %265 = vmatpush1.bf16.msra.mxu0 %v220
  %266 = vmatprep.subr.bf16.mxu0 0
  %267 = vmatpush1.bf16.msra.mxu0 %v219
  %268 = vmatprep.subr.bf16.mxu0 0
  %269 = vmatpush2.bf16.msra.mxu0 0
  %270 = vmatprep.subr.bf16.mxu0 0
  %271 = vmatpush2.bf16.msra.mxu0 0
  %272 = vmatprep.subr.bf16.mxu0 0
  %273 = vmatpush2.bf16.msra.mxu0 0
  %274 = vmatprep.subr.bf16.mxu0 0
  %275 = vmatpush2.bf16.msra.mxu0 0
  %276 = vmatprep.subr.bf16.mxu0 0
  %277 = vmatpush2.bf16.msra.mxu0 0
  %278 = vmatprep.subr.bf16.mxu0 0
  %279 = vmatpush2.bf16.msra.mxu0 0
  %280 = vmatprep.subr.bf16.mxu0 0
  %281 = vmatpush2.bf16.msra.mxu0 0
  %282 = vmatprep.subr.bf16.mxu0 0
  %283 = vmatpush2.bf16.msra.mxu0 0
  %284 = vmatprep.mubr.bf16.mxu0 0
  %285 = vmatmul.mubr.bf16.gmra.mxu0 %v229
  %v286 = vpop.f32.mrf.mxu0
  %v287 = vadd.f32 %v201, %v286
  %v288 = vpop.f32.mrf.mxu0
  %v289 = vpop.f32.mrf.mxu0
  %v290 = vadd.f32 %v201, %v289
  %v291 = vpop.f32.mrf.mxu0
  %292 = vmatprep.mubr.bf16.mxu0 0
  %293 = vmatmul.mubr.bf16.gmra.mxu0 %v232
  %v294 = vpop.f32.mrf.mxu0
  %v295 = vadd.f32 %v201, %v294
  %v296 = vpop.f32.mrf.mxu0
  %v297 = vpop.f32.mrf.mxu0
  %v298 = vadd.f32 %v201, %v297
  %v299 = vpop.f32.mrf.mxu0
  %300 = vmatprep.mubr.bf16.mxu0 0
  %301 = vmatmul.mubr.bf16.gmra.mxu0 %v235
  %v302 = vpop.f32.mrf.mxu0
  %v303 = vadd.f32 %v201, %v302
  %v304 = vpop.f32.mrf.mxu0
  %v305 = vpop.f32.mrf.mxu0
  %v306 = vadd.f32 %v201, %v305
  %v307 = vpop.f32.mrf.mxu0
  %308 = vmatprep.mubr.bf16.mxu0 0
  %309 = vmatmul.mubr.bf16.gmra.mxu0 %v238
  %v310 = vpop.f32.mrf.mxu0
  %v311 = vadd.f32 %v201, %v310
  %v312 = vpop.f32.mrf.mxu0
  %v313 = vpop.f32.mrf.mxu0
  %v314 = vadd.f32 %v201, %v313
  %v315 = vpop.f32.mrf.mxu0
  %316 = vmatprep.mubr.bf16.mxu0 0
  %317 = vmatmul.mubr.bf16.gmra.mxu0 %v241
  %v318 = vpop.f32.mrf.mxu0
  %v319 = vadd.f32 %v201, %v318
  %v320 = vpop.f32.mrf.mxu0
  %v321 = vpop.f32.mrf.mxu0
  %v322 = vadd.f32 %v201, %v321
  %v323 = vpop.f32.mrf.mxu0
  %324 = vmatprep.mubr.bf16.mxu0 0
  %325 = vmatmul.mubr.bf16.gmra.mxu0 %v244
  %v326 = vpop.f32.mrf.mxu0
  %v327 = vadd.f32 %v201, %v326
  %v328 = vpop.f32.mrf.mxu0
  %v329 = vpop.f32.mrf.mxu0
  %v330 = vadd.f32 %v201, %v329
  %v331 = vpop.f32.mrf.mxu0
  %332 = vmatprep.mubr.bf16.mxu0 0
  %333 = vmatmul.mubr.bf16.gmra.mxu0 %v247
  %v334 = vpop.f32.mrf.mxu0
  %v335 = vadd.f32 %v201, %v334
  %v336 = vpop.f32.mrf.mxu0
  %v337 = vpop.f32.mrf.mxu0
  %v338 = vadd.f32 %v201, %v337
  %v339 = vpop.f32.mrf.mxu0
  %340 = vmatprep.mubr.bf16.mxu0 0
  %341 = vmatmul.mubr.bf16.gmra.mxu0 %v250
  %v342 = vpop.f32.mrf.mxu0
  %v343 = vadd.f32 %v201, %v342
  %v344 = vpop.f32.mrf.mxu0
  %v345 = vpop.f32.mrf.mxu0
  %v346 = vadd.f32 %v201, %v345
  %v347 = vpop.f32.mrf.mxu0
  %348 = vdwg.mxu0
  %v349 = vmax.f32 %v287, 0.0
  %v350 = vmax.f32 %v290, 0.0
  %v351 = vmax.f32 %v295, 0.0
  %v352 = vmax.f32 %v298, 0.0
  %v353 = vmax.f32 %v303, 0.0
  %v354 = vmax.f32 %v306, 0.0
  %v355 = vmax.f32 %v311, 0.0
  %v356 = vmax.f32 %v314, 0.0
  %v357 = vmax.f32 %v319, 0.0
  %v358 = vmax.f32 %v322, 0.0
  %v359 = vmax.f32 %v327, 0.0
  %v360 = vmax.f32 %v330, 0.0
  %v361 = vmax.f32 %v335, 0.0
  %v362 = vmax.f32 %v338, 0.0
  %v363 = vmax.f32 %v343, 0.0
  %v364 = vmax.f32 %v346, 0.0
  %v365 = vld [vmem:[%s5] sm:$0x1]
  %v367 = vlaneseq
  %v368 = vshrl.u32 %v367, 7
  %v369 = vsub.s32 0, %v368
  %v370 = vrot.slane %v365, %v369
  %v372 = vmul.f32 %v349, %v370
  %v373 = vmul.f32 %v350, %v370
  %v374 = vmul.f32 %v351, %v370
  %v375 = vmul.f32 %v352, %v370
  %v376 = vmul.f32 %v353, %v370
  %v377 = vmul.f32 %v354, %v370
  %v378 = vmul.f32 %v355, %v370
  %v379 = vmul.f32 %v356, %v370
  %v380 = vmul.f32 %v357, %v370
  %v381 = vmul.f32 %v358, %v370
  %v382 = vmul.f32 %v359, %v370
  %v383 = vmul.f32 %v360, %v370
  %v384 = vmul.f32 %v361, %v370
  %v385 = vmul.f32 %v362, %v370
  %v386 = vmul.f32 %v363, %v370
  %v387 = vmul.f32 %v364, %v370
  %v388 = vsel %vm163, %v372, 0.0
  %389 = vadd.xlane.f32.xlu0 %v388
  %v390 = vpop.xlane.xlu0 %389
  %v391 = vsel %vm163, %v373, 0.0
  %392 = vadd.xlane.f32.xlu0 %v391
  %v393 = vpop.xlane.xlu0 %392
  %v394 = vsel %vm163, %v374, 0.0
  %395 = vadd.xlane.f32.xlu0 %v394
  %v396 = vpop.xlane.xlu0 %395
  %v397 = vsel %vm163, %v375, 0.0
  %398 = vadd.xlane.f32.xlu0 %v397
  %v399 = vpop.xlane.xlu0 %398
  %v400 = vsel %vm163, %v376, 0.0
  %401 = vadd.xlane.f32.xlu0 %v400
  %v402 = vpop.xlane.xlu0 %401
  %v403 = vsel %vm163, %v377, 0.0
  %404 = vadd.xlane.f32.xlu0 %v403
  %v405 = vpop.xlane.xlu0 %404
  %v406 = vsel %vm163, %v378, 0.0
  %407 = vadd.xlane.f32.xlu0 %v406
  %v408 = vpop.xlane.xlu0 %407
  %v409 = vsel %vm163, %v379, 0.0
  %410 = vadd.xlane.f32.xlu0 %v409
  %v411 = vpop.xlane.xlu0 %410
  %v412 = vsel %vm163, %v380, 0.0
  %413 = vadd.xlane.f32.xlu0 %v412
  %v414 = vpop.xlane.xlu0 %413
  %v415 = vsel %vm163, %v381, 0.0
  %416 = vadd.xlane.f32.xlu0 %v415
  %v417 = vpop.xlane.xlu0 %416
  %v418 = vsel %vm163, %v382, 0.0
  %419 = vadd.xlane.f32.xlu0 %v418
  %v420 = vpop.xlane.xlu0 %419
  %v421 = vsel %vm163, %v383, 0.0
  %422 = vadd.xlane.f32.xlu0 %v421
  %v423 = vpop.xlane.xlu0 %422
  %v424 = vsel %vm163, %v384, 0.0
  %425 = vadd.xlane.f32.xlu0 %v424
  %v426 = vpop.xlane.xlu0 %425
  %v427 = vsel %vm163, %v385, 0.0
  %428 = vadd.xlane.f32.xlu0 %v427
  %v429 = vpop.xlane.xlu0 %428
  %v430 = vsel %vm163, %v386, 0.0
  %431 = vadd.xlane.f32.xlu0 %v430
  %v432 = vpop.xlane.xlu0 %431
  %v433 = vsel %vm163, %v387, 0.0
  %434 = vadd.xlane.f32.xlu0 %v433
  %v435 = vpop.xlane.xlu0 %434
  %v436 = vld [vmem:[#allocation2] sm:$0x1]
  %v438 = vlaneseq
  %v439 = vshrl.u32 %v438, 7
  %v440 = vsub.s32 0, %v439
  %v441 = vrot.slane %v436, %v440
  %442 = vset.pattern.permute.xlu0 0
  %443 = vperm.xlu0 %442, %v441
  %v444 = vpop.permute.xlu0 %443
  %v446 = vadd.f32 %v390, %v444
  %v447 = vadd.f32 %v393, %v444
  %v448 = vadd.f32 %v396, %v444
  %v449 = vadd.f32 %v399, %v444
  %v450 = vadd.f32 %v402, %v444
  %v451 = vadd.f32 %v405, %v444
  %v452 = vadd.f32 %v408, %v444
  %v453 = vadd.f32 %v411, %v444
  %v454 = vadd.f32 %v414, %v444
  %v455 = vadd.f32 %v417, %v444
  %v456 = vadd.f32 %v420, %v444
  %v457 = vadd.f32 %v423, %v444
  %v458 = vadd.f32 %v426, %v444
  %v459 = vadd.f32 %v429, %v444
  %v460 = vadd.f32 %v432, %v444
  %v461 = vadd.f32 %v435, %v444
  %v462 = vld [vmem:[%s2] sm:$0xff]
  %v463 = vld [vmem:[%s2 + $0x8] sm:$0xff]
  %v480 = vlaneseq
  %v481 = vand.u32 %v480, 127
  %v482 = vlaneseq
  %v483 = vshrl.u32 %v482, 7
  %v484 = vsub.s32 %v481, %v483
  %v485 = vrot.slane %v446, %v484
  %v486 = vlaneseq
  %v487 = vshrl.u32 %v486, 7
  %v488 = vsub.s32 %v481, %v487
  %v489 = vrot.slane %v447, %v488
  %v490 = vlaneseq
  %v491 = vshrl.u32 %v490, 7
  %v492 = vsub.s32 %v481, %v491
  %v493 = vrot.slane %v448, %v492
  %v494 = vlaneseq
  %v495 = vshrl.u32 %v494, 7
  %v496 = vsub.s32 %v481, %v495
  %v497 = vrot.slane %v449, %v496
  %v498 = vlaneseq
  %v499 = vshrl.u32 %v498, 7
  %v500 = vsub.s32 %v481, %v499
  %v501 = vrot.slane %v450, %v500
  %v502 = vlaneseq
  %v503 = vshrl.u32 %v502, 7
  %v504 = vsub.s32 %v481, %v503
  %v505 = vrot.slane %v451, %v504
  %v506 = vlaneseq
  %v507 = vshrl.u32 %v506, 7
  %v508 = vsub.s32 %v481, %v507
  %v509 = vrot.slane %v452, %v508
  %v510 = vlaneseq
  %v511 = vshrl.u32 %v510, 7
  %v512 = vsub.s32 %v481, %v511
  %v513 = vrot.slane %v453, %v512
  %v514 = vlaneseq
  %v515 = vshrl.u32 %v514, 7
  %v516 = vsub.s32 %v481, %v515
  %v517 = vrot.slane %v454, %v516
  %v518 = vlaneseq
  %v519 = vshrl.u32 %v518, 7
  %v520 = vsub.s32 %v481, %v519
  %v521 = vrot.slane %v455, %v520
  %v522 = vlaneseq
  %v523 = vshrl.u32 %v522, 7
  %v524 = vsub.s32 %v481, %v523
  %v525 = vrot.slane %v456, %v524
  %v526 = vlaneseq
  %v527 = vshrl.u32 %v526, 7
  %v528 = vsub.s32 %v481, %v527
  %v529 = vrot.slane %v457, %v528
  %v530 = vlaneseq
  %v531 = vshrl.u32 %v530, 7
  %v532 = vsub.s32 %v481, %v531
  %v533 = vrot.slane %v458, %v532
  %v534 = vlaneseq
  %v535 = vshrl.u32 %v534, 7
  %v536 = vsub.s32 %v481, %v535
  %v537 = vrot.slane %v459, %v536
  %v538 = vlaneseq
  %v539 = vshrl.u32 %v538, 7
  %v540 = vsub.s32 %v481, %v539
  %v541 = vrot.slane %v460, %v540
  %v542 = vlaneseq
  %v543 = vshrl.u32 %v542, 7
  %v544 = vsub.s32 %v481, %v543
  %v545 = vrot.slane %v461, %v544
  %vm546 = vcmask 1041409
  %v547 = vsel %vm546, %v489, %v485
  %vm548 = vcmask 1042434
  %v549 = vsel %vm548, %v493, %v547
  %vm550 = vcmask 1043459
  %v551 = vsel %vm550, %v497, %v549
  %vm552 = vcmask 1044484
  %v553 = vsel %vm552, %v501, %v551
  %vm554 = vcmask 1045509
  %v555 = vsel %vm554, %v505, %v553
  %vm556 = vcmask 1046534
  %v557 = vsel %vm556, %v509, %v555
  %vm558 = vcmask 1047559
  %v559 = vsel %vm558, %v513, %v557
  %v560 = vsel %vm546, %v521, %v517
  %v561 = vsel %vm548, %v525, %v560
  %v562 = vsel %vm550, %v529, %v561
  %v563 = vsel %vm552, %v533, %v562
  %v564 = vsel %vm554, %v537, %v563
  %v565 = vsel %vm556, %v541, %v564
  %v566 = vsel %vm558, %v545, %v565
  %vm569 = vcmask 64512
  %v570 = vsel %vm569, %v559, -inf
  %571 = vmax.xlane.f32.xlu0 %v570
  %v572 = vpop.xlane.xlu0 %571
  %v573 = vsel %vm569, %v566, -inf
  %574 = vmax.xlane.f32.xlu0 %v573
  %v575 = vpop.xlane.xlu0 %574
  %v576 = vmax.f32 %v572, 0.0
  %v577 = vmax.f32 %v575, 0.0
  %v580 = vlaneseq
  %v581 = vshrl.u32 %v580, 7
  %v582 = vsub.s32 0, %v581
  %v583 = vrot.slane %v576, %v582
  %v584 = vlaneseq
  %v585 = vshrl.u32 %v584, 7
  %v586 = vsub.s32 1, %v585
  %v587 = vrot.slane %v576, %v586
  %v588 = vlaneseq
  %v589 = vshrl.u32 %v588, 7
  %v590 = vsub.s32 2, %v589
  %v591 = vrot.slane %v576, %v590
  %v592 = vlaneseq
  %v593 = vshrl.u32 %v592, 7
  %v594 = vsub.s32 3, %v593
  %v595 = vrot.slane %v576, %v594
  %v596 = vlaneseq
  %v597 = vshrl.u32 %v596, 7
  %v598 = vsub.s32 4, %v597
  %v599 = vrot.slane %v576, %v598
  %v600 = vlaneseq
  %v601 = vshrl.u32 %v600, 7
  %v602 = vsub.s32 5, %v601
  %v603 = vrot.slane %v576, %v602
  %v604 = vlaneseq
  %v605 = vshrl.u32 %v604, 7
  %v606 = vsub.s32 6, %v605
  %v607 = vrot.slane %v576, %v606
  %v608 = vlaneseq
  %v609 = vshrl.u32 %v608, 7
  %v610 = vsub.s32 7, %v609
  %v611 = vrot.slane %v576, %v610
  %v612 = vlaneseq
  %v613 = vshrl.u32 %v612, 7
  %v614 = vsub.s32 0, %v613
  %v615 = vrot.slane %v577, %v614
  %v616 = vlaneseq
  %v617 = vshrl.u32 %v616, 7
  %v618 = vsub.s32 1, %v617
  %v619 = vrot.slane %v577, %v618
  %v620 = vlaneseq
  %v621 = vshrl.u32 %v620, 7
  %v622 = vsub.s32 2, %v621
  %v623 = vrot.slane %v577, %v622
  %v624 = vlaneseq
  %v625 = vshrl.u32 %v624, 7
  %v626 = vsub.s32 3, %v625
  %v627 = vrot.slane %v577, %v626
  %v628 = vlaneseq
  %v629 = vshrl.u32 %v628, 7
  %v630 = vsub.s32 4, %v629
  %v631 = vrot.slane %v577, %v630
  %v632 = vlaneseq
  %v633 = vshrl.u32 %v632, 7
  %v634 = vsub.s32 5, %v633
  %v635 = vrot.slane %v577, %v634
  %v636 = vlaneseq
  %v637 = vshrl.u32 %v636, 7
  %v638 = vsub.s32 6, %v637
  %v639 = vrot.slane %v577, %v638
  %v640 = vlaneseq
  %v641 = vshrl.u32 %v640, 7
  %v642 = vsub.s32 7, %v641
  %v643 = vrot.slane %v577, %v642
  %v660 = vsub.f32 %v446, %v583
  %v661 = vsub.f32 %v447, %v587
  %v662 = vsub.f32 %v448, %v591
  %v663 = vsub.f32 %v449, %v595
  %v664 = vsub.f32 %v450, %v599
  %v665 = vsub.f32 %v451, %v603
  %v666 = vsub.f32 %v452, %v607
  %v667 = vsub.f32 %v453, %v611
  %v668 = vsub.f32 %v454, %v615
  %v669 = vsub.f32 %v455, %v619
  %v670 = vsub.f32 %v456, %v623
  %v671 = vsub.f32 %v457, %v627
  %v672 = vsub.f32 %v458, %v631
  %v673 = vsub.f32 %v459, %v635
  %v674 = vsub.f32 %v460, %v639
  %v675 = vsub.f32 %v461, %v643
  %v676 = vmul.f32 %v660, 1.442695
  %v677 = vpow.pop %v676
  %v678 = vmul.f32 %v661, 1.442695
  %v679 = vpow.pop %v678
  %v680 = vmul.f32 %v662, 1.442695
  %v681 = vpow.pop %v680
  %v682 = vmul.f32 %v663, 1.442695
  %v683 = vpow.pop %v682
  %v684 = vmul.f32 %v664, 1.442695
  %v685 = vpow.pop %v684
  %v686 = vmul.f32 %v665, 1.442695
  %v687 = vpow.pop %v686
  %v688 = vmul.f32 %v666, 1.442695
  %v689 = vpow.pop %v688
  %v690 = vmul.f32 %v667, 1.442695
  %v691 = vpow.pop %v690
  %v692 = vmul.f32 %v668, 1.442695
  %v693 = vpow.pop %v692
  %v694 = vmul.f32 %v669, 1.442695
  %v695 = vpow.pop %v694
  %v696 = vmul.f32 %v670, 1.442695
  %v697 = vpow.pop %v696
  %v698 = vmul.f32 %v671, 1.442695
  %v699 = vpow.pop %v698
  %v700 = vmul.f32 %v672, 1.442695
  %v701 = vpow.pop %v700
  %v702 = vmul.f32 %v673, 1.442695
  %v703 = vpow.pop %v702
  %v704 = vmul.f32 %v674, 1.442695
  %v705 = vpow.pop %v704
  %v706 = vmul.f32 %v675, 1.442695
  %v707 = vpow.pop %v706
  %v710 = vlaneseq
  %v711 = vshrl.u32 %v710, 7
  %v712 = vsub.s32 0, %v711
  %v713 = vrot.slane %v462, %v712
  %715 = vbcast.lane.b32.xlu0 %v713, 256
  %v716 = vpop.permute.xlu0 %715
  %v717 = vlaneseq
  %v718 = vshrl.u32 %v717, 7
  %v719 = vsub.s32 1, %v718
  %v720 = vrot.slane %v462, %v719
  %722 = vbcast.lane.b32.xlu0 %v720, 256
  %v723 = vpop.permute.xlu0 %722
  %v724 = vlaneseq
  %v725 = vshrl.u32 %v724, 7
  %v726 = vsub.s32 2, %v725
  %v727 = vrot.slane %v462, %v726
  %729 = vbcast.lane.b32.xlu0 %v727, 256
  %v730 = vpop.permute.xlu0 %729
  %v731 = vlaneseq
  %v732 = vshrl.u32 %v731, 7
  %v733 = vsub.s32 3, %v732
  %v734 = vrot.slane %v462, %v733
  %736 = vbcast.lane.b32.xlu0 %v734, 256
  %v737 = vpop.permute.xlu0 %736
  %v738 = vlaneseq
  %v739 = vshrl.u32 %v738, 7
  %v740 = vsub.s32 4, %v739
  %v741 = vrot.slane %v462, %v740
  %743 = vbcast.lane.b32.xlu0 %v741, 256
  %v744 = vpop.permute.xlu0 %743
  %v745 = vlaneseq
  %v746 = vshrl.u32 %v745, 7
  %v747 = vsub.s32 5, %v746
  %v748 = vrot.slane %v462, %v747
  %750 = vbcast.lane.b32.xlu0 %v748, 256
  %v751 = vpop.permute.xlu0 %750
  %v752 = vlaneseq
  %v753 = vshrl.u32 %v752, 7
  %v754 = vsub.s32 6, %v753
  %v755 = vrot.slane %v462, %v754
  %757 = vbcast.lane.b32.xlu0 %v755, 256
  %v758 = vpop.permute.xlu0 %757
  %v759 = vlaneseq
  %v760 = vshrl.u32 %v759, 7
  %v761 = vsub.s32 7, %v760
  %v762 = vrot.slane %v462, %v761
  %764 = vbcast.lane.b32.xlu0 %v762, 256
  %v765 = vpop.permute.xlu0 %764
  %v766 = vlaneseq
  %v767 = vshrl.u32 %v766, 7
  %v768 = vsub.s32 0, %v767
  %v769 = vrot.slane %v463, %v768
  %771 = vbcast.lane.b32.xlu0 %v769, 256
  %v772 = vpop.permute.xlu0 %771
  %v773 = vlaneseq
  %v774 = vshrl.u32 %v773, 7
  %v775 = vsub.s32 1, %v774
  %v776 = vrot.slane %v463, %v775
  %778 = vbcast.lane.b32.xlu0 %v776, 256
  %v779 = vpop.permute.xlu0 %778
  %v780 = vlaneseq
  %v781 = vshrl.u32 %v780, 7
  %v782 = vsub.s32 2, %v781
  %v783 = vrot.slane %v463, %v782
  %785 = vbcast.lane.b32.xlu0 %v783, 256
  %v786 = vpop.permute.xlu0 %785
  %v787 = vlaneseq
  %v788 = vshrl.u32 %v787, 7
  %v789 = vsub.s32 3, %v788
  %v790 = vrot.slane %v463, %v789
  %792 = vbcast.lane.b32.xlu0 %v790, 256
  %v793 = vpop.permute.xlu0 %792
  %v794 = vlaneseq
  %v795 = vshrl.u32 %v794, 7
  %v796 = vsub.s32 4, %v795
  %v797 = vrot.slane %v463, %v796
  %799 = vbcast.lane.b32.xlu0 %v797, 256
  %v800 = vpop.permute.xlu0 %799
  %v801 = vlaneseq
  %v802 = vshrl.u32 %v801, 7
  %v803 = vsub.s32 5, %v802
  %v804 = vrot.slane %v463, %v803
  %806 = vbcast.lane.b32.xlu0 %v804, 256
  %v807 = vpop.permute.xlu0 %806
  %v808 = vlaneseq
  %v809 = vshrl.u32 %v808, 7
  %v810 = vsub.s32 6, %v809
  %v811 = vrot.slane %v463, %v810
  %813 = vbcast.lane.b32.xlu0 %v811, 256
  %v814 = vpop.permute.xlu0 %813
  %v815 = vlaneseq
  %v816 = vshrl.u32 %v815, 7
  %v817 = vsub.s32 7, %v816
  %v818 = vrot.slane %v463, %v817
  %820 = vbcast.lane.b32.xlu0 %v818, 256
  %v821 = vpop.permute.xlu0 %820
  %v838 = vmul.f32 %v677, %v716
  %v839 = vmul.f32 %v679, %v723
  %v840 = vmul.f32 %v681, %v730
  %v841 = vmul.f32 %v683, %v737
  %v842 = vmul.f32 %v685, %v744
  %v843 = vmul.f32 %v687, %v751
  %v844 = vmul.f32 %v689, %v758
  %v845 = vmul.f32 %v691, %v765
  %v846 = vmul.f32 %v693, %v772
  %v847 = vmul.f32 %v695, %v779
  %v848 = vmul.f32 %v697, %v786
  %v849 = vmul.f32 %v699, %v793
  %v850 = vmul.f32 %v701, %v800
  %v851 = vmul.f32 %v703, %v807
  %v852 = vmul.f32 %v705, %v814
  %v853 = vmul.f32 %v707, %v821
  %870 = vset.pattern.permute.xlu0 0
  %871 = vperm.xlu0 %870, %v838
  %v872 = vpop.permute.xlu0 %871
  %873 = vset.pattern.permute.xlu0 0
  %874 = vperm.xlu0 %873, %v839
  %v875 = vpop.permute.xlu0 %874
  %876 = vset.pattern.permute.xlu0 0
  %877 = vperm.xlu0 %876, %v840
  %v878 = vpop.permute.xlu0 %877
  %879 = vset.pattern.permute.xlu0 0
  %880 = vperm.xlu0 %879, %v841
  %v881 = vpop.permute.xlu0 %880
  %882 = vset.pattern.permute.xlu0 0
  %883 = vperm.xlu0 %882, %v842
  %v884 = vpop.permute.xlu0 %883
  %885 = vset.pattern.permute.xlu0 0
  %886 = vperm.xlu0 %885, %v843
  %v887 = vpop.permute.xlu0 %886
  %888 = vset.pattern.permute.xlu0 0
  %889 = vperm.xlu0 %888, %v844
  %v890 = vpop.permute.xlu0 %889
  %891 = vset.pattern.permute.xlu0 0
  %892 = vperm.xlu0 %891, %v845
  %v893 = vpop.permute.xlu0 %892
  %894 = vset.pattern.permute.xlu0 0
  %895 = vperm.xlu0 %894, %v846
  %v896 = vpop.permute.xlu0 %895
  %897 = vset.pattern.permute.xlu0 0
  %898 = vperm.xlu0 %897, %v847
  %v899 = vpop.permute.xlu0 %898
  %900 = vset.pattern.permute.xlu0 0
  %901 = vperm.xlu0 %900, %v848
  %v902 = vpop.permute.xlu0 %901
  %903 = vset.pattern.permute.xlu0 0
  %904 = vperm.xlu0 %903, %v849
  %v905 = vpop.permute.xlu0 %904
  %906 = vset.pattern.permute.xlu0 0
  %907 = vperm.xlu0 %906, %v850
  %v908 = vpop.permute.xlu0 %907
  %909 = vset.pattern.permute.xlu0 0
  %910 = vperm.xlu0 %909, %v851
  %v911 = vpop.permute.xlu0 %910
  %912 = vset.pattern.permute.xlu0 0
  %913 = vperm.xlu0 %912, %v852
  %v914 = vpop.permute.xlu0 %913
  %915 = vset.pattern.permute.xlu0 0
  %916 = vperm.xlu0 %915, %v853
  %v917 = vpop.permute.xlu0 %916
  %v918 = vlaneseq
  %v919 = vshrl.u32 %v918, 7
  %v920 = vsub.s32 %v481, %v919
  %v921 = vrot.slane %v872, %v920
  %v922 = vlaneseq
  %v923 = vshrl.u32 %v922, 7
  %v924 = vsub.s32 %v481, %v923
  %v925 = vrot.slane %v875, %v924
  %v926 = vlaneseq
  %v927 = vshrl.u32 %v926, 7
  %v928 = vsub.s32 %v481, %v927
  %v929 = vrot.slane %v878, %v928
  %v930 = vlaneseq
  %v931 = vshrl.u32 %v930, 7
  %v932 = vsub.s32 %v481, %v931
  %v933 = vrot.slane %v881, %v932
  %v934 = vlaneseq
  %v935 = vshrl.u32 %v934, 7
  %v936 = vsub.s32 %v481, %v935
  %v937 = vrot.slane %v884, %v936
  %v938 = vlaneseq
  %v939 = vshrl.u32 %v938, 7
  %v940 = vsub.s32 %v481, %v939
  %v941 = vrot.slane %v887, %v940
  %v942 = vlaneseq
  %v943 = vshrl.u32 %v942, 7
  %v944 = vsub.s32 %v481, %v943
  %v945 = vrot.slane %v890, %v944
  %v946 = vlaneseq
  %v947 = vshrl.u32 %v946, 7
  %v948 = vsub.s32 %v481, %v947
  %v949 = vrot.slane %v893, %v948
  %v950 = vlaneseq
  %v951 = vshrl.u32 %v950, 7
  %v952 = vsub.s32 %v481, %v951
  %v953 = vrot.slane %v896, %v952
  %v954 = vlaneseq
  %v955 = vshrl.u32 %v954, 7
  %v956 = vsub.s32 %v481, %v955
  %v957 = vrot.slane %v899, %v956
  %v958 = vlaneseq
  %v959 = vshrl.u32 %v958, 7
  %v960 = vsub.s32 %v481, %v959
  %v961 = vrot.slane %v902, %v960
  %v962 = vlaneseq
  %v963 = vshrl.u32 %v962, 7
  %v964 = vsub.s32 %v481, %v963
  %v965 = vrot.slane %v905, %v964
  %v966 = vlaneseq
  %v967 = vshrl.u32 %v966, 7
  %v968 = vsub.s32 %v481, %v967
  %v969 = vrot.slane %v908, %v968
  %v970 = vlaneseq
  %v971 = vshrl.u32 %v970, 7
  %v972 = vsub.s32 %v481, %v971
  %v973 = vrot.slane %v911, %v972
  %v974 = vlaneseq
  %v975 = vshrl.u32 %v974, 7
  %v976 = vsub.s32 %v481, %v975
  %v977 = vrot.slane %v914, %v976
  %v978 = vlaneseq
  %v979 = vshrl.u32 %v978, 7
  %v980 = vsub.s32 %v481, %v979
  %v981 = vrot.slane %v917, %v980
  %v982 = vsel %vm546, %v925, %v921
  %v983 = vsel %vm548, %v929, %v982
  %v984 = vsel %vm550, %v933, %v983
  %v985 = vsel %vm552, %v937, %v984
  %v986 = vsel %vm554, %v941, %v985
  %v987 = vsel %vm556, %v945, %v986
  %v988 = vsel %vm558, %v949, %v987
  %v989 = vsel %vm546, %v957, %v953
  %v990 = vsel %vm548, %v961, %v989
  %v991 = vsel %vm550, %v965, %v990
  %v992 = vsel %vm552, %v969, %v991
  %v993 = vsel %vm554, %v973, %v992
  %v994 = vsel %vm556, %v977, %v993
  %v995 = vsel %vm558, %v981, %v994
  %v998 = vsel %vm569, %v988, 0.0
  %999 = vadd.xlane.f32.xlu0 %v998
  %v1000 = vpop.xlane.xlu0 %999
  %v1001 = vsel %vm569, %v995, 0.0
  %1002 = vadd.xlane.f32.xlu0 %v1001
  %v1003 = vpop.xlane.xlu0 %1002
  %v1004 = vsub.f32 0.0, %v576
  %v1005 = vsub.f32 0.0, %v577
  %v1006 = vmul.f32 %v1004, 1.442695
  %v1007 = vpow.pop %v1006
  %v1008 = vmul.f32 %v1005, 1.442695
  %v1009 = vpow.pop %v1008
  %v1010 = vmul.f32 %v1007, 1e-10
  %v1011 = vmul.f32 %v1009, 1e-10
  %v1012 = vadd.f32 %v1000, %v1010
  %v1013 = vadd.f32 %v1003, %v1011
  %v1016 = vlaneseq
  %v1017 = vshrl.u32 %v1016, 7
  %v1018 = vsub.s32 0, %v1017
  %v1019 = vrot.slane %v1012, %v1018
  %v1020 = vlaneseq
  %v1021 = vshrl.u32 %v1020, 7
  %v1022 = vsub.s32 1, %v1021
  %v1023 = vrot.slane %v1012, %v1022
  %v1024 = vlaneseq
  %v1025 = vshrl.u32 %v1024, 7
  %v1026 = vsub.s32 2, %v1025
  %v1027 = vrot.slane %v1012, %v1026
  %v1028 = vlaneseq
  %v1029 = vshrl.u32 %v1028, 7
  %v1030 = vsub.s32 3, %v1029
  %v1031 = vrot.slane %v1012, %v1030
  %v1032 = vlaneseq
  %v1033 = vshrl.u32 %v1032, 7
  %v1034 = vsub.s32 4, %v1033
  %v1035 = vrot.slane %v1012, %v1034
  %v1036 = vlaneseq
  %v1037 = vshrl.u32 %v1036, 7
  %v1038 = vsub.s32 5, %v1037
  %v1039 = vrot.slane %v1012, %v1038
  %v1040 = vlaneseq
  %v1041 = vshrl.u32 %v1040, 7
  %v1042 = vsub.s32 6, %v1041
  %v1043 = vrot.slane %v1012, %v1042
  %v1044 = vlaneseq
  %v1045 = vshrl.u32 %v1044, 7
  %v1046 = vsub.s32 7, %v1045
  %v1047 = vrot.slane %v1012, %v1046
  %v1048 = vlaneseq
  %v1049 = vshrl.u32 %v1048, 7
  %v1050 = vsub.s32 0, %v1049
  %v1051 = vrot.slane %v1013, %v1050
  %v1052 = vlaneseq
  %v1053 = vshrl.u32 %v1052, 7
  %v1054 = vsub.s32 1, %v1053
  %v1055 = vrot.slane %v1013, %v1054
  %v1056 = vlaneseq
  %v1057 = vshrl.u32 %v1056, 7
  %v1058 = vsub.s32 2, %v1057
  %v1059 = vrot.slane %v1013, %v1058
  %v1060 = vlaneseq
  %v1061 = vshrl.u32 %v1060, 7
  %v1062 = vsub.s32 3, %v1061
  %v1063 = vrot.slane %v1013, %v1062
  %v1064 = vlaneseq
  %v1065 = vshrl.u32 %v1064, 7
  %v1066 = vsub.s32 4, %v1065
  %v1067 = vrot.slane %v1013, %v1066
  %v1068 = vlaneseq
  %v1069 = vshrl.u32 %v1068, 7
  %v1070 = vsub.s32 5, %v1069
  %v1071 = vrot.slane %v1013, %v1070
  %v1072 = vlaneseq
  %v1073 = vshrl.u32 %v1072, 7
  %v1074 = vsub.s32 6, %v1073
  %v1075 = vrot.slane %v1013, %v1074
  %v1076 = vlaneseq
  %v1077 = vshrl.u32 %v1076, 7
  %v1078 = vsub.s32 7, %v1077
  %v1079 = vrot.slane %v1013, %v1078
  %v1096 = vrcp.pop %v1019
  %v1097 = vmul.f32 %v838, %v1096
  %v1098 = vrcp.pop %v1023
  %v1099 = vmul.f32 %v839, %v1098
  %v1100 = vrcp.pop %v1027
  %v1101 = vmul.f32 %v840, %v1100
  %v1102 = vrcp.pop %v1031
  %v1103 = vmul.f32 %v841, %v1102
  %v1104 = vrcp.pop %v1035
  %v1105 = vmul.f32 %v842, %v1104
  %v1106 = vrcp.pop %v1039
  %v1107 = vmul.f32 %v843, %v1106
  %v1108 = vrcp.pop %v1043
  %v1109 = vmul.f32 %v844, %v1108
  %v1110 = vrcp.pop %v1047
  %v1111 = vmul.f32 %v845, %v1110
  %v1112 = vrcp.pop %v1051
  %v1113 = vmul.f32 %v846, %v1112
  %v1114 = vrcp.pop %v1055
  %v1115 = vmul.f32 %v847, %v1114
  %v1116 = vrcp.pop %v1059
  %v1117 = vmul.f32 %v848, %v1116
  %v1118 = vrcp.pop %v1063
  %v1119 = vmul.f32 %v849, %v1118
  %v1120 = vrcp.pop %v1067
  %v1121 = vmul.f32 %v850, %v1120
  %v1122 = vrcp.pop %v1071
  %v1123 = vmul.f32 %v851, %v1122
  %v1124 = vrcp.pop %v1075
  %v1125 = vmul.f32 %v852, %v1124
  %v1126 = vrcp.pop %v1079
  %v1127 = vmul.f32 %v853, %v1126
  %1129 = vset.pattern.permute.xlu0 0
  %1130 = vperm.xlu0 %1129, %v1097
  %v1131 = vpop.permute.xlu0 %1130
  %1134 = vset.pattern.permute.xlu0 0
  %1135 = vperm.xlu0 %1134, %v1099
  %v1136 = vpop.permute.xlu0 %1135
  %1139 = vset.pattern.permute.xlu0 0
  %1140 = vperm.xlu0 %1139, %v1101
  %v1141 = vpop.permute.xlu0 %1140
  %1144 = vset.pattern.permute.xlu0 0
  %1145 = vperm.xlu0 %1144, %v1103
  %v1146 = vpop.permute.xlu0 %1145
  %1149 = vset.pattern.permute.xlu0 0
  %1150 = vperm.xlu0 %1149, %v1105
  %v1151 = vpop.permute.xlu0 %1150
  %1154 = vset.pattern.permute.xlu0 0
  %1155 = vperm.xlu0 %1154, %v1107
  %v1156 = vpop.permute.xlu0 %1155
  %1159 = vset.pattern.permute.xlu0 0
  %1160 = vperm.xlu0 %1159, %v1109
  %v1161 = vpop.permute.xlu0 %1160
  %1164 = vset.pattern.permute.xlu0 0
  %1165 = vperm.xlu0 %1164, %v1111
  %v1166 = vpop.permute.xlu0 %1165
  %1169 = vset.pattern.permute.xlu0 0
  %1170 = vperm.xlu0 %1169, %v1113
  %v1171 = vpop.permute.xlu0 %1170
  %1174 = vset.pattern.permute.xlu0 0
  %1175 = vperm.xlu0 %1174, %v1115
  %v1176 = vpop.permute.xlu0 %1175
  %1179 = vset.pattern.permute.xlu0 0
  %1180 = vperm.xlu0 %1179, %v1117
  %v1181 = vpop.permute.xlu0 %1180
  %1184 = vset.pattern.permute.xlu0 0
  %1185 = vperm.xlu0 %1184, %v1119
  %v1186 = vpop.permute.xlu0 %1185
  %1189 = vset.pattern.permute.xlu0 0
  %1190 = vperm.xlu0 %1189, %v1121
  %v1191 = vpop.permute.xlu0 %1190
  %1194 = vset.pattern.permute.xlu0 0
  %1195 = vperm.xlu0 %1194, %v1123
  %v1196 = vpop.permute.xlu0 %1195
  %1199 = vset.pattern.permute.xlu0 0
  %1200 = vperm.xlu0 %1199, %v1125
  %v1201 = vpop.permute.xlu0 %1200
  %1204 = vset.pattern.permute.xlu0 0
  %1205 = vperm.xlu0 %1204, %v1127
  %v1206 = vpop.permute.xlu0 %1205
  %v1208 = vmul.f32 %v1131, %v51
  %v1209 = vmul.f32 %v1136, %v52
  %v1210 = vmul.f32 %v1141, %v53
  %v1211 = vmul.f32 %v1146, %v54
  %v1212 = vmul.f32 %v1151, %v55
  %v1213 = vmul.f32 %v1156, %v56
  %v1214 = vmul.f32 %v1161, %v57
  %v1215 = vmul.f32 %v1166, %v58
  %v1216 = vmul.f32 %v1171, %v59
  %v1217 = vmul.f32 %v1176, %v60
  %v1218 = vmul.f32 %v1181, %v61
  %v1219 = vmul.f32 %v1186, %v62
  %v1220 = vmul.f32 %v1191, %v63
  %v1221 = vmul.f32 %v1196, %v64
  %v1222 = vmul.f32 %v1201, %v65
  %v1223 = vmul.f32 %v1206, %v66
  %v1224 = vsel %vm163, %v1208, 0.0
  %v1225 = vrot.slane %v1224, 4
  %v1226 = vadd.f32 %v1224, %v1225
  %v1227 = vrot.slane %v1226, 2
  %v1228 = vadd.f32 %v1226, %v1227
  %v1229 = vrot.slane %v1228, 1
  %v1230 = vadd.f32 %v1228, %v1229
  %v1231 = vsel %vm163, %v1209, 0.0
  %v1232 = vrot.slane %v1231, 4
  %v1233 = vadd.f32 %v1231, %v1232
  %v1234 = vrot.slane %v1233, 2
  %v1235 = vadd.f32 %v1233, %v1234
  %v1236 = vrot.slane %v1235, 1
  %v1237 = vadd.f32 %v1235, %v1236
  %v1238 = vsel %vm163, %v1210, 0.0
  %v1239 = vrot.slane %v1238, 4
  %v1240 = vadd.f32 %v1238, %v1239
  %v1241 = vrot.slane %v1240, 2
  %v1242 = vadd.f32 %v1240, %v1241
  %v1243 = vrot.slane %v1242, 1
  %v1244 = vadd.f32 %v1242, %v1243
  %v1245 = vsel %vm163, %v1211, 0.0
  %v1246 = vrot.slane %v1245, 4
  %v1247 = vadd.f32 %v1245, %v1246
  %v1248 = vrot.slane %v1247, 2
  %v1249 = vadd.f32 %v1247, %v1248
  %v1250 = vrot.slane %v1249, 1
  %v1251 = vadd.f32 %v1249, %v1250
  %v1252 = vsel %vm163, %v1212, 0.0
  %v1253 = vrot.slane %v1252, 4
  %v1254 = vadd.f32 %v1252, %v1253
  %v1255 = vrot.slane %v1254, 2
  %v1256 = vadd.f32 %v1254, %v1255
  %v1257 = vrot.slane %v1256, 1
  %v1258 = vadd.f32 %v1256, %v1257
  %v1259 = vsel %vm163, %v1213, 0.0
  %v1260 = vrot.slane %v1259, 4
  %v1261 = vadd.f32 %v1259, %v1260
  %v1262 = vrot.slane %v1261, 2
  %v1263 = vadd.f32 %v1261, %v1262
  %v1264 = vrot.slane %v1263, 1
  %v1265 = vadd.f32 %v1263, %v1264
  %v1266 = vsel %vm163, %v1214, 0.0
  %v1267 = vrot.slane %v1266, 4
  %v1268 = vadd.f32 %v1266, %v1267
  %v1269 = vrot.slane %v1268, 2
  %v1270 = vadd.f32 %v1268, %v1269
  %v1271 = vrot.slane %v1270, 1
  %v1272 = vadd.f32 %v1270, %v1271
  %v1273 = vsel %vm163, %v1215, 0.0
  %v1274 = vrot.slane %v1273, 4
  %v1275 = vadd.f32 %v1273, %v1274
  %v1276 = vrot.slane %v1275, 2
  %v1277 = vadd.f32 %v1275, %v1276
  %v1278 = vrot.slane %v1277, 1
  %v1279 = vadd.f32 %v1277, %v1278
  %v1280 = vsel %vm163, %v1216, 0.0
  %v1281 = vrot.slane %v1280, 4
  %v1282 = vadd.f32 %v1280, %v1281
  %v1283 = vrot.slane %v1282, 2
  %v1284 = vadd.f32 %v1282, %v1283
  %v1285 = vrot.slane %v1284, 1
  %v1286 = vadd.f32 %v1284, %v1285
  %v1287 = vsel %vm163, %v1217, 0.0
  %v1288 = vrot.slane %v1287, 4
  %v1289 = vadd.f32 %v1287, %v1288
  %v1290 = vrot.slane %v1289, 2
  %v1291 = vadd.f32 %v1289, %v1290
  %v1292 = vrot.slane %v1291, 1
  %v1293 = vadd.f32 %v1291, %v1292
  %v1294 = vsel %vm163, %v1218, 0.0
  %v1295 = vrot.slane %v1294, 4
  %v1296 = vadd.f32 %v1294, %v1295
  %v1297 = vrot.slane %v1296, 2
  %v1298 = vadd.f32 %v1296, %v1297
  %v1299 = vrot.slane %v1298, 1
  %v1300 = vadd.f32 %v1298, %v1299
  %v1301 = vsel %vm163, %v1219, 0.0
  %v1302 = vrot.slane %v1301, 4
  %v1303 = vadd.f32 %v1301, %v1302
  %v1304 = vrot.slane %v1303, 2
  %v1305 = vadd.f32 %v1303, %v1304
  %v1306 = vrot.slane %v1305, 1
  %v1307 = vadd.f32 %v1305, %v1306
  %v1308 = vsel %vm163, %v1220, 0.0
  %v1309 = vrot.slane %v1308, 4
  %v1310 = vadd.f32 %v1308, %v1309
  %v1311 = vrot.slane %v1310, 2
  %v1312 = vadd.f32 %v1310, %v1311
  %v1313 = vrot.slane %v1312, 1
  %v1314 = vadd.f32 %v1312, %v1313
  %v1315 = vsel %vm163, %v1221, 0.0
  %v1316 = vrot.slane %v1315, 4
  %v1317 = vadd.f32 %v1315, %v1316
  %v1318 = vrot.slane %v1317, 2
  %v1319 = vadd.f32 %v1317, %v1318
  %v1320 = vrot.slane %v1319, 1
  %v1321 = vadd.f32 %v1319, %v1320
  %v1322 = vsel %vm163, %v1222, 0.0
  %v1323 = vrot.slane %v1322, 4
  %v1324 = vadd.f32 %v1322, %v1323
  %v1325 = vrot.slane %v1324, 2
  %v1326 = vadd.f32 %v1324, %v1325
  %v1327 = vrot.slane %v1326, 1
  %v1328 = vadd.f32 %v1326, %v1327
  %v1329 = vsel %vm163, %v1223, 0.0
  %v1330 = vrot.slane %v1329, 4
  %v1331 = vadd.f32 %v1329, %v1330
  %v1332 = vrot.slane %v1331, 2
  %v1333 = vadd.f32 %v1331, %v1332
  %v1334 = vrot.slane %v1333, 1
  %v1335 = vadd.f32 %v1333, %v1334
  %v1336 = vpack.c.bf16 %v1230, %v1230
  %v1337 = vpack.c.bf16 %v1237, %v1237
  %v1338 = vpack.c.bf16 %v1244, %v1244
  %v1339 = vpack.c.bf16 %v1251, %v1251
  %v1340 = vpack.c.bf16 %v1258, %v1258
  %v1341 = vpack.c.bf16 %v1265, %v1265
  %v1342 = vpack.c.bf16 %v1272, %v1272
  %v1343 = vpack.c.bf16 %v1279, %v1279
  %v1344 = vpack.c.bf16 %v1286, %v1286
  %v1345 = vpack.c.bf16 %v1293, %v1293
  %v1346 = vpack.c.bf16 %v1300, %v1300
  %v1347 = vpack.c.bf16 %v1307, %v1307
  %v1348 = vpack.c.bf16 %v1314, %v1314
  %v1349 = vpack.c.bf16 %v1321, %v1321
  %v1350 = vpack.c.bf16 %v1328, %v1328
  %v1351 = vpack.c.bf16 %v1335, %v1335
  %v1352 = vld [vmem:[%s7] sm:$0xf]
  %v1353 = vld [vmem:[%s7 + $0x4] sm:$0xf]
  %v1354 = vld [vmem:[%s7 + $0x8] sm:$0xf]
  %v1355 = vld [vmem:[%s7 + $0xc] sm:$0xf]
  %v1356 = vld [vmem:[%s8] sm:$0x1]
  %v1358 = vlaneseq
  %v1359 = vshrl.u32 %v1358, 7
  %v1360 = vsub.s32 0, %v1359
  %v1361 = vrot.slane %v1356, %v1360
  %v1379 = vunpack.c.l.b16 %v1336
  %v1380 = vunpack.c.l.b16 %v1337
  %v1381 = vunpack.c.l.b16 %v1338
  %v1382 = vunpack.c.l.b16 %v1339
  %v1383 = vunpack.c.l.b16 %v1340
  %v1384 = vunpack.c.l.b16 %v1341
  %v1385 = vunpack.c.l.b16 %v1342
  %v1386 = vunpack.c.l.b16 %v1343
  %v1387 = vunpack.c.l.b16 %v1344
  %v1388 = vunpack.c.l.b16 %v1345
  %v1389 = vunpack.c.l.b16 %v1346
  %v1390 = vunpack.c.l.b16 %v1347
  %v1391 = vunpack.c.l.b16 %v1348
  %v1392 = vunpack.c.l.b16 %v1349
  %v1393 = vunpack.c.l.b16 %v1350
  %v1394 = vunpack.c.l.b16 %v1351
  %v1395 = vsel %vm546, %v1380, %v1379
  %v1396 = vsel %vm548, %v1381, %v1395
  %v1397 = vsel %vm550, %v1382, %v1396
  %v1398 = vsel %vm552, %v1383, %v1397
  %v1399 = vsel %vm554, %v1384, %v1398
  %v1400 = vsel %vm556, %v1385, %v1399
  %v1401 = vsel %vm558, %v1386, %v1400
  %v1402 = vsel %vm546, %v1388, %v1387
  %v1403 = vsel %vm548, %v1389, %v1402
  %v1404 = vsel %vm550, %v1390, %v1403
  %v1405 = vsel %vm552, %v1391, %v1404
  %v1406 = vsel %vm554, %v1392, %v1405
  %v1407 = vsel %vm556, %v1393, %v1406
  %v1408 = vsel %vm558, %v1394, %v1407
  %v1409 = vpack.c.b16 %v1408, %v1401
  %v1414 = vunpack.c.l.b16 %v1352
  %v1415 = vunpack.c.l.b16 %v1353
  %v1416 = vunpack.c.l.b16 %v1354
  %v1417 = vunpack.c.l.b16 %v1355
  %v1418 = vpack.c.b16 %v1415, %v1414
  %v1419 = vpack.c.b16 %v1417, %v1416
  %v1423 = vsel %vm163, %v1409, 0
  %1425 = vmatprep.subr.bf16.mxu0 0
  %1426 = vmatpush1.bf16.msra.mxu0 0
  %1427 = vmatprep.subr.bf16.mxu0 0
  %1428 = vmatpush1.bf16.msra.mxu0 0
  %1429 = vmatprep.subr.bf16.mxu0 0
  %1430 = vmatpush1.bf16.msra.mxu0 0
  %1431 = vmatprep.subr.bf16.mxu0 0
  %1432 = vmatpush1.bf16.msra.mxu0 0
  %1433 = vmatprep.subr.bf16.mxu0 0
  %1434 = vmatpush1.bf16.msra.mxu0 0
  %1435 = vmatprep.subr.bf16.mxu0 0
  %1436 = vmatpush1.bf16.msra.mxu0 0
  %1437 = vmatprep.subr.bf16.mxu0 0
  %1438 = vmatpush1.bf16.msra.mxu0 %v1419
  %1439 = vmatprep.subr.bf16.mxu0 0
  %1440 = vmatpush1.bf16.msra.mxu0 %v1418
  %1441 = vmatprep.subr.bf16.mxu0 0
  %1442 = vmatpush2.bf16.msra.mxu0 0
  %1443 = vmatprep.subr.bf16.mxu0 0
  %1444 = vmatpush2.bf16.msra.mxu0 0
  %1445 = vmatprep.subr.bf16.mxu0 0
  %1446 = vmatpush2.bf16.msra.mxu0 0
  %1447 = vmatprep.subr.bf16.mxu0 0
  %1448 = vmatpush2.bf16.msra.mxu0 0
  %1449 = vmatprep.subr.bf16.mxu0 0
  %1450 = vmatpush2.bf16.msra.mxu0 0
  %1451 = vmatprep.subr.bf16.mxu0 0
  %1452 = vmatpush2.bf16.msra.mxu0 0
  %1453 = vmatprep.subr.bf16.mxu0 0
  %1454 = vmatpush2.bf16.msra.mxu0 0
  %1455 = vmatprep.subr.bf16.mxu0 0
  %1456 = vmatpush2.bf16.msra.mxu0 0
  %1457 = vmatprep.mubr.bf16.mxu0 0
  %1458 = vmatmul.mubr.bf16.gmra.mxu0 %v1423
  %v1459 = vpop.f32.mrf.mxu0
  %v1460 = vadd.f32 %v1361, %v1459
  %v1461 = vpop.f32.mrf.mxu0
  %v1462 = vpop.f32.mrf.mxu0
  %v1463 = vadd.f32 %v1361, %v1462
  %v1464 = vpop.f32.mrf.mxu0
  %1465 = vdwg.mxu0
  %v1466 = vmax.f32 %v1460, 0.0
  %v1467 = vmax.f32 %v1463, 0.0
  %v1468 = vpack.c.bf16 %v1467, %v1466
  %v1470 = vunpack.c.l.b16 %v1468
  %v1471 = vunpack.c.h.b16 %v1468
  %v1472 = vpack.c.b16 %v1470, %v1470
  %v1473 = vpack.c.b16 %v1471, %v1471
  %vm1476 = vcmask 257024
  %1477 = vst.msk [vmem:[%s9] sm:$0xf] %vm1476, %v1472
  %1478 = vst.msk [vmem:[%s9 + $0x4] sm:$0xf] %vm1476, %v1473
  // Predicated region
  $region38: #{graphrec_forward.10} parent=0 // pred_check
    _
  $region39: #{graphrec_forward.10} parent=0 // pred_check_branch
    %1480 = sbr.rel (0) target = $region41
  $region40: #{graphrec_forward.10} parent=0 // pred_region
    _
  $region41: #{graphrec_forward.10} parent=0 // pred_fallthru
    _
  // Predicated region
  $region42: #{graphrec_forward.10} parent=0 // pred_check
    _
  $region43: #{graphrec_forward.10} parent=0 // pred_check_branch
    %1482 = sbr.rel (0) target = $region45
  $region44: #{graphrec_forward.10} parent=0 // pred_region
    _
  $region45: #{graphrec_forward.10} parent=0 // pred_fallthru
    _

// kernel: graphrec_forward.6
$region0: #{graphrec_forward.6}
  #allocation0 [shape = 'u32[]', space=smem, size = 0x4, offset = 0x4, fixed_abs, tag = 'smem constant byte address 0x4 - core index']
  #allocation1 [shape = 'u32[144,128]{1,0:T(1,128)}', space=vmem, size = 0x12000, scoped, tag = 'internal scratch']
  %s0 = inlined_call_operand.vmem [shape: bf16[288,64], index: 0, kind: input, shape index: {}]
  %s1 = inlined_call_operand.vmem [shape: bf16[64,32], index: 1, kind: input, shape index: {}]
  %s2 = inlined_call_operand.vmem [shape: f32[1,32], index: 2, kind: input, shape index: {}]
  %s3 = inlined_call_operand.vmem [shape: bf16[32,32], index: 3, kind: input, shape index: {}]
  %s4 = inlined_call_operand.vmem [shape: f32[1,32], index: 4, kind: input, shape index: {}]
  %s5 = inlined_call_operand.vmem [shape: bf16[288,32], index: 5, kind: output, shape index: {}]
  %s6 = sld [smem:[#allocation0]]
  $region53: #{graphrec_forward.6} parent=0
    _
  %s8 = ssub.s32 1, %s6
  %s9 = scalar_select 0, %s8, %s6
  loop: start=0, step=1, limit=4
  $region2: #{graphrec_forward.6} parent=0 // loop_pre_header
    _
  $region3: #{graphrec_forward.6} parent=0 // loop_header
    %s11 = sphi 0, %s15
    %p12 = scmp.ge.s32.totalorder %s11, 4
    %s21 = sphi 0, %s23
    %s24 = sphi 0, %s21
    %s25 = sphi 0, %s24
    %s41 = sphi 0, %s25
    %s45 = sphi 0, %s45
    %s47 = sphi 0, %s45
    %s48 = sphi 0, %s47
    %s62 = sphi 0, %s48
    %s66 = sphi 0, %s66
    %s68 = sphi 0, %s66
    %s69 = sphi 0, %s68
    %s83 = sphi 0, %s69
    %s87 = sphi 0, %s87
    %s89 = sphi 0, %s87
    %s90 = sphi 0, %s89
    %s104 = sphi 0, %s90
    %s108 = sphi 0, %s108
    %s110 = sphi 0, %s108
    %s111 = sphi 0, %s110
    %s125 = sphi 0, %s111
    %s131 = sphi 0, %s133
    %s134 = sphi 0, %s131
    %s135 = sphi 0, %s134
    %s151 = sphi 0, %s135
  $region4: #{graphrec_forward.6} parent=0 // loop_header_branch
    %14 = sbr.rel (%p12) target = $region8
  $region5: #{graphrec_forward.6} parent=0 // loop_body
    %s16 = ssub.s32 %s11, 1
    %s17 = ssub.s32 %s11, 2
    %s18 = sadd.s32 %s11, 1
    %s19 = ssub.s32 %s11, %s18
    %p20 = scmp.eq.s32.totalorder %s19, 0
    %s22 = sadd.s32 %s21, 1
    %s23 = scalar_select %p20, %s21, %s22
    %p26 = pneg %p20
    %p27 = scmp.eq.s32.totalorder %s11, 1
    %p28 = por %p26, %p27
    %p29 = scmp.ne.s32.totalorder %s21, %s24
    %p30 = scmp.eq.s32.totalorder %s11, 0
    %p31 = por %p29, %p30
    %p32 = scmp.ne.s32.totalorder %s21, %s24
    %p33 = scmp.eq.s32.totalorder %s16, 1
    %p34 = por %p32, %p33
    %p35 = scmp.ne.s32.totalorder %s24, %s25
    %p36 = scmp.eq.s32.totalorder %s16, 0
    %p37 = por %p35, %p36
    %p38 = scmp.ne.s32.totalorder %s24, %s25
    %p39 = scmp.eq.s32.totalorder %s17, 1
    %p40 = por %p38, %p39
    %p42 = scmp.ne.s32.totalorder %s25, %s41
    %p43 = scmp.eq.s32.totalorder %s17, 0
    %p44 = por %p42, %p43
    %s46 = sadd.s32 %s45, 1
    %p49 = scmp.eq.s32.totalorder %s11, 1
    %p50 = scmp.ne.s32.totalorder %s45, %s47
    %p51 = scmp.eq.s32.totalorder %s11, 0
    %p52 = por %p50, %p51
    %p53 = scmp.ne.s32.totalorder %s45, %s47
    %p54 = scmp.eq.s32.totalorder %s16, 1
    %p55 = por %p53, %p54
    %p56 = scmp.ne.s32.totalorder %s47, %s48
    %p57 = scmp.eq.s32.totalorder %s16, 0
    %p58 = por %p56, %p57
    %p59 = scmp.ne.s32.totalorder %s47, %s48
    %p60 = scmp.eq.s32.totalorder %s17, 1
    %p61 = por %p59, %p60
    %p63 = scmp.ne.s32.totalorder %s48, %s62
    %p64 = scmp.eq.s32.totalorder %s17, 0
    %p65 = por %p63, %p64
    %s67 = sadd.s32 %s66, 1
    %p70 = scmp.eq.s32.totalorder %s11, 1
    %p71 = scmp.ne.s32.totalorder %s66, %s68
    %p72 = scmp.eq.s32.totalorder %s11, 0
    %p73 = por %p71, %p72
    %p74 = scmp.ne.s32.totalorder %s66, %s68
    %p75 = scmp.eq.s32.totalorder %s16, 1
    %p76 = por %p74, %p75
    %p77 = scmp.ne.s32.totalorder %s68, %s69
    %p78 = scmp.eq.s32.totalorder %s16, 0
    %p79 = por %p77, %p78
    %p80 = scmp.ne.s32.totalorder %s68, %s69
    %p81 = scmp.eq.s32.totalorder %s17, 1
    %p82 = por %p80, %p81
    %p84 = scmp.ne.s32.totalorder %s69, %s83
    %p85 = scmp.eq.s32.totalorder %s17, 0
    %p86 = por %p84, %p85
    %s88 = sadd.s32 %s87, 1
    %p91 = scmp.eq.s32.totalorder %s11, 1
    %p92 = scmp.ne.s32.totalorder %s87, %s89
    %p93 = scmp.eq.s32.totalorder %s11, 0
    %p94 = por %p92, %p93
    %p95 = scmp.ne.s32.totalorder %s87, %s89
    %p96 = scmp.eq.s32.totalorder %s16, 1
    %p97 = por %p95, %p96
    %p98 = scmp.ne.s32.totalorder %s89, %s90
    %p99 = scmp.eq.s32.totalorder %s16, 0
    %p100 = por %p98, %p99
    %p101 = scmp.ne.s32.totalorder %s89, %s90
    %p102 = scmp.eq.s32.totalorder %s17, 1
    %p103 = por %p101, %p102
    %p105 = scmp.ne.s32.totalorder %s90, %s104
    %p106 = scmp.eq.s32.totalorder %s17, 0
    %p107 = por %p105, %p106
    %s109 = sadd.s32 %s108, 1
    %p112 = scmp.eq.s32.totalorder %s11, 1
    %p113 = scmp.ne.s32.totalorder %s108, %s110
    %p114 = scmp.eq.s32.totalorder %s11, 0
    %p115 = por %p113, %p114
    %p116 = scmp.ne.s32.totalorder %s108, %s110
    %p117 = scmp.eq.s32.totalorder %s16, 1
    %p118 = por %p116, %p117
    %p119 = scmp.ne.s32.totalorder %s110, %s111
    %p120 = scmp.eq.s32.totalorder %s16, 0
    %p121 = por %p119, %p120
    %p122 = scmp.ne.s32.totalorder %s110, %s111
    %p123 = scmp.eq.s32.totalorder %s17, 1
    %p124 = por %p122, %p123
    %p126 = scmp.ne.s32.totalorder %s111, %s125
    %p127 = scmp.eq.s32.totalorder %s17, 0
    %p128 = por %p126, %p127
    %s129 = ssub.s32 %s11, %s18
    %p130 = scmp.eq.s32.totalorder %s129, 0
    %s132 = sadd.s32 %s131, 1
    %s133 = scalar_select %p130, %s131, %s132
    %p136 = pneg %p130
    %p137 = scmp.eq.s32.totalorder %s11, 1
    %p138 = por %p136, %p137
    %p139 = scmp.ne.s32.totalorder %s131, %s134
    %p140 = scmp.eq.s32.totalorder %s11, 0
    %p141 = por %p139, %p140
    %p142 = scmp.ne.s32.totalorder %s131, %s134
    %p143 = scmp.eq.s32.totalorder %s16, 1
    %p144 = por %p142, %p143
    %p145 = scmp.ne.s32.totalorder %s134, %s135
    %p146 = scmp.eq.s32.totalorder %s16, 0
    %p147 = por %p145, %p146
    %p148 = scmp.ne.s32.totalorder %s134, %s135
    %p149 = scmp.eq.s32.totalorder %s17, 1
    %p150 = por %p148, %p149
    %p152 = scmp.ne.s32.totalorder %s135, %s151
    %p153 = scmp.eq.s32.totalorder %s17, 0
    %p154 = por %p152, %p153
    %p155 = scmp.le.s32.totalorder 1, %s11
    %p156 = scmp.lt.s32.totalorder %s11, 3
    %p157 = pnand %p155, %p156
    %p158 = pneg %p157
    // Predicated region
    $region9: #{graphrec_forward.6} parent=5 // pred_check
      _
    $region10: #{graphrec_forward.6} parent=5 // pred_check_branch
      %160 = sbr.rel (%p157) target = $region12
    $region11: #{graphrec_forward.6} parent=5 // pred_region
      %s161 = ssub.s32 %s11, 1
      // Predicated region
      $region13: #{graphrec_forward.6} parent=11 // pred_check
        %p162 = pneg %p58
      $region14: #{graphrec_forward.6} parent=11 // pred_check_branch
        %164 = sbr.rel (%p162) target = $region16
      $region15: #{graphrec_forward.6} parent=11 // pred_region
        _
      $region16: #{graphrec_forward.6} parent=11 // pred_fallthru
        _
      // Predicated region
      $region17: #{graphrec_forward.6} parent=11 // pred_check
        %p165 = pneg %p79
      $region18: #{graphrec_forward.6} parent=11 // pred_check_branch
        %167 = sbr.rel (%p165) target = $region20
      $region19: #{graphrec_forward.6} parent=11 // pred_region
        _
      $region20: #{graphrec_forward.6} parent=11 // pred_fallthru
        _
      // Predicated region
      $region21: #{graphrec_forward.6} parent=11 // pred_check
        %p168 = pneg %p100
      $region22: #{graphrec_forward.6} parent=11 // pred_check_branch
        %170 = sbr.rel (%p168) target = $region24
      $region23: #{graphrec_forward.6} parent=11 // pred_region
        _
      $region24: #{graphrec_forward.6} parent=11 // pred_fallthru
        _
      // Predicated region
      $region25: #{graphrec_forward.6} parent=11 // pred_check
        %p171 = pneg %p121
      $region26: #{graphrec_forward.6} parent=11 // pred_check_branch
        %173 = sbr.rel (%p171) target = $region28
      $region27: #{graphrec_forward.6} parent=11 // pred_region
        _
      $region28: #{graphrec_forward.6} parent=11 // pred_fallthru
        _
    $region12: #{graphrec_forward.6} parent=5 // pred_fallthru
      _
    %p174 = scmp.lt.s32.totalorder %s11, 2
    // Predicated region
    $region29: #{graphrec_forward.6} parent=5 // pred_check
      %p175 = pneg %p174
    $region30: #{graphrec_forward.6} parent=5 // pred_check_branch
      %177 = sbr.rel (%p175) target = $region32
    $region31: #{graphrec_forward.6} parent=5 // pred_region
      // Predicated region
      $region33: #{graphrec_forward.6} parent=31 // pred_check
        %p178 = pneg %p31
      $region34: #{graphrec_forward.6} parent=31 // pred_check_branch
        %180 = sbr.rel (%p178) target = $region36
      $region35: #{graphrec_forward.6} parent=31 // pred_region
        %s181 = smul.u32 18, %s11
        %p182 = scmp.lt.s32.totalorder %s181, 35
        %s183 = scalar_select %p182, %s181, 35
        %s184 = smul.addr %s183, 4
        %s185 = scalar_lea.vmem %s0, %s184
        %s186 = smul.u32 18, %s11
      $region36: #{graphrec_forward.6} parent=31 // pred_fallthru
        _
    $region32: #{graphrec_forward.6} parent=5 // pred_fallthru
      _
    %p187 = scmp.le.s32.totalorder 1, %s11
    %p188 = scmp.lt.s32.totalorder %s11, 3
    %p189 = pnand %p187, %p188
    %p190 = pneg %p189
    // Predicated region
    $region37: #{graphrec_forward.6} parent=5 // pred_check
      _
    $region38: #{graphrec_forward.6} parent=5 // pred_check_branch
      %192 = sbr.rel (%p189) target = $region40
    $region39: #{graphrec_forward.6} parent=5 // pred_region
      %s193 = ssub.s32 %s11, 1
      %s194 = smul.u32 18, %s16
      %p195 = scmp.lt.s32.totalorder %s194, 35
      %s196 = scalar_select %p195, %s194, 35
      %s197 = smul.addr %s196, 4
      %s198 = scalar_lea.vmem %s0, %s197
      %p199 = pneg %p37
      %p200 = pneg %p34
      %p201 = pneg %p58
      %p202 = pneg %p55
      %p203 = pneg %p79
      %p204 = pneg %p76
      %p205 = pneg %p100
      %p206 = pneg %p97
      %p207 = pneg %p121
      %p208 = pneg %p118
      %p209 = pneg %p147
      %p210 = pneg %p144
      %s211 = smul.u32 18, %s16
      %p212 = scmp.lt.s32.totalorder %s211, 35
      %s213 = scalar_select %p212, %s211, 35
      %s214 = smul.addr %s213, 4
      %s215 = scalar_lea.vmem %s5, %s214
      %s216 = smul.u32 18, %s16
      %p217 = scmp.lt.s32.totalorder %s216, 35
      %s218 = scalar_select %p217, %s216, 35
      %s219 = smul.addr %s218, 4
      %s220 = scalar_lea.vmem %s0, %s219
      %s221 = smul.u32 18, %s16
      %s222 = smul.u32 18, %s16
      %p223 = scmp.lt.s32.totalorder %s222, 35
      %s224 = scalar_select %p223, %s222, 35
      %s225 = smul.addr %s224, 4
      %s226 = scalar_lea.vmem %s5, %s225
      %s227 = smul.u32 18, %s16
      %v229 = vld [vmem:[%s220] sm:$0xf]
      %v230 = vld [vmem:[%s220 + $0x4] sm:$0xf]
      %v231 = vld [vmem:[%s220 + $0x8] sm:$0xf]
      %v232 = vld [vmem:[%s220 + $0xc] sm:$0xf]
      %v233 = vld [vmem:[%s220 + $0x10] sm:$0xf]
      %v234 = vld [vmem:[%s220 + $0x14] sm:$0xf]
      %v235 = vld [vmem:[%s220 + $0x18] sm:$0xf]
      %v236 = vld [vmem:[%s220 + $0x1c] sm:$0xf]
      %v237 = vld [vmem:[%s220 + $0x20] sm:$0xf]
      %v238 = vld [vmem:[%s220 + $0x24] sm:$0xf]
      %v239 = vld [vmem:[%s220 + $0x28] sm:$0xf]
      %v240 = vld [vmem:[%s220 + $0x2c] sm:$0xf]
      %v241 = vld [vmem:[%s220 + $0x30] sm:$0xf]
      %v242 = vld [vmem:[%s220 + $0x34] sm:$0xf]
      %v243 = vld [vmem:[%s220 + $0x38] sm:$0xf]
      %v244 = vld [vmem:[%s220 + $0x3c] sm:$0xf]
      %v245 = vld [vmem:[%s220 + $0x40] sm:$0xf]
      %v246 = vld [vmem:[%s220 + $0x44] sm:$0xf]
      %v247 = vld [vmem:[%s1] sm:$0xf]
      %v248 = vld [vmem:[%s1 + $0x4] sm:$0xf]
      %v249 = vld [vmem:[%s1 + $0x8] sm:$0xf]
      %v250 = vld [vmem:[%s1 + $0xc] sm:$0xf]
      %v251 = vld [vmem:[%s1 + $0x10] sm:$0xf]
      %v252 = vld [vmem:[%s1 + $0x14] sm:$0xf]
      %v253 = vld [vmem:[%s1 + $0x18] sm:$0xf]
      %v254 = vld [vmem:[%s1 + $0x1c] sm:$0xf]
      %v255 = vld [vmem:[%s2] sm:$0x1]
      %v257 = vlaneseq
      %v258 = vshrl.u32 %v257, 7
      %v259 = vsub.s32 0, %v258
      %v260 = vrot.slane %v255, %v259
      %v280 = vunpack.c.l.b16 %v229
      %v281 = vunpack.c.l.b16 %v230
      %v282 = vunpack.c.l.b16 %v231
      %v283 = vunpack.c.l.b16 %v232
      %v284 = vunpack.c.l.b16 %v233
      %v285 = vunpack.c.l.b16 %v234
      %v286 = vunpack.c.l.b16 %v235
      %v287 = vunpack.c.l.b16 %v236
      %v288 = vunpack.c.l.b16 %v237
      %v289 = vunpack.c.l.b16 %v238
      %v290 = vunpack.c.l.b16 %v239
      %v291 = vunpack.c.l.b16 %v240
      %v292 = vunpack.c.l.b16 %v241
      %v293 = vunpack.c.l.b16 %v242
      %v294 = vunpack.c.l.b16 %v243
      %v295 = vunpack.c.l.b16 %v244
      %v296 = vunpack.c.l.b16 %v245
      %v297 = vunpack.c.l.b16 %v246
      %v298 = vpack.c.b16 %v281, %v280
      %v299 = vpack.c.b16 %v283, %v282
      %v300 = vpack.c.b16 %v285, %v284
      %v301 = vpack.c.b16 %v287, %v286
      %v302 = vpack.c.b16 %v289, %v288
      %v303 = vpack.c.b16 %v291, %v290
      %v304 = vpack.c.b16 %v293, %v292
      %v305 = vpack.c.b16 %v295, %v294
      %v306 = vpack.c.b16 %v297, %v296
      %v315 = vunpack.c.l.b16 %v247
      %v316 = vunpack.c.l.b16 %v248
      %v317 = vunpack.c.l.b16 %v249
      %v318 = vunpack.c.l.b16 %v250
      %v319 = vunpack.c.l.b16 %v251
      %v320 = vunpack.c.l.b16 %v252
      %v321 = vunpack.c.l.b16 %v253
      %v322 = vunpack.c.l.b16 %v254
      %v323 = vpack.c.b16 %v316, %v315
      %v324 = vpack.c.b16 %v318, %v317
      %v325 = vpack.c.b16 %v320, %v319
      %v326 = vpack.c.b16 %v322, %v321
      %vm331 = vcmask 523264
      %v333 = vsel %vm331, %v298, 0
      %v336 = vsel %vm331, %v299, 0
      %v339 = vsel %vm331, %v300, 0
      %v342 = vsel %vm331, %v301, 0
      %v345 = vsel %vm331, %v302, 0
      %v348 = vsel %vm331, %v303, 0
      %v351 = vsel %vm331, %v304, 0
      %v354 = vsel %vm331, %v305, 0
      %v357 = vsel %vm331, %v306, 0
      %359 = vmatprep.subr.bf16.mxu0 0
      %360 = vmatpush1.bf16.msra.mxu0 0
      %361 = vmatprep.subr.bf16.mxu0 0
      %362 = vmatpush1.bf16.msra.mxu0 0
      %363 = vmatprep.subr.bf16.mxu0 0
      %364 = vmatpush1.bf16.msra.mxu0 0
      %365 = vmatprep.subr.bf16.mxu0 0
      %366 = vmatpush1.bf16.msra.mxu0 0
      %367 = vmatprep.subr.bf16.mxu0 0
      %368 = vmatpush1.bf16.msra.mxu0 %v326
      %369 = vmatprep.subr.bf16.mxu0 0
      %370 = vmatpush1.bf16.msra.mxu0 %v325
      %371 = vmatprep.subr.bf16.mxu0 0
      %372 = vmatpush1.bf16.msra.mxu0 %v324
      %373 = vmatprep.subr.bf16.mxu0 0
      %374 = vmatpush1.bf16.msra.mxu0 %v323
      %375 = vmatprep.subr.bf16.mxu0 0
      %376 = vmatpush2.bf16.msra.mxu0 0
      %377 = vmatprep.subr.bf16.mxu0 0
      %378 = vmatpush2.bf16.msra.mxu0 0
      %379 = vmatprep.subr.bf16.mxu0 0
      %380 = vmatpush2.bf16.msra.mxu0 0
      %381 = vmatprep.subr.bf16.mxu0 0
      %382 = vmatpush2.bf16.msra.mxu0 0
      %383 = vmatprep.subr.bf16.mxu0 0
      %384 = vmatpush2.bf16.msra.mxu0 0
      %385 = vmatprep.subr.bf16.mxu0 0
      %386 = vmatpush2.bf16.msra.mxu0 0
      %387 = vmatprep.subr.bf16.mxu0 0
      %388 = vmatpush2.bf16.msra.mxu0 0
      %389 = vmatprep.subr.bf16.mxu0 0
      %390 = vmatpush2.bf16.msra.mxu0 0
      %391 = vmatprep.mubr.bf16.mxu0 0
      %392 = vmatmul.mubr.bf16.gmra.mxu0 %v333
      %v393 = vpop.f32.mrf.mxu0
      %v394 = vadd.f32 %v260, %v393
      %v395 = vpop.f32.mrf.mxu0
      %v396 = vpop.f32.mrf.mxu0
      %v397 = vadd.f32 %v260, %v396
      %v398 = vpop.f32.mrf.mxu0
      %399 = vmatprep.mubr.bf16.mxu0 0
      %400 = vmatmul.mubr.bf16.gmra.mxu0 %v336
      %v401 = vpop.f32.mrf.mxu0
      %v402 = vadd.f32 %v260, %v401
      %v403 = vpop.f32.mrf.mxu0
      %v404 = vpop.f32.mrf.mxu0
      %v405 = vadd.f32 %v260, %v404
      %v406 = vpop.f32.mrf.mxu0
      %407 = vmatprep.mubr.bf16.mxu0 0
      %408 = vmatmul.mubr.bf16.gmra.mxu0 %v339
      %v409 = vpop.f32.mrf.mxu0
      %v410 = vadd.f32 %v260, %v409
      %v411 = vpop.f32.mrf.mxu0
      %v412 = vpop.f32.mrf.mxu0
      %v413 = vadd.f32 %v260, %v412
      %v414 = vpop.f32.mrf.mxu0
      %415 = vmatprep.mubr.bf16.mxu0 0
      %416 = vmatmul.mubr.bf16.gmra.mxu0 %v342
      %v417 = vpop.f32.mrf.mxu0
      %v418 = vadd.f32 %v260, %v417
      %v419 = vpop.f32.mrf.mxu0
      %v420 = vpop.f32.mrf.mxu0
      %v421 = vadd.f32 %v260, %v420
      %v422 = vpop.f32.mrf.mxu0
      %423 = vmatprep.mubr.bf16.mxu0 0
      %424 = vmatmul.mubr.bf16.gmra.mxu0 %v345
      %v425 = vpop.f32.mrf.mxu0
      %v426 = vadd.f32 %v260, %v425
      %v427 = vpop.f32.mrf.mxu0
      %v428 = vpop.f32.mrf.mxu0
      %v429 = vadd.f32 %v260, %v428
      %v430 = vpop.f32.mrf.mxu0
      %431 = vmatprep.mubr.bf16.mxu0 0
      %432 = vmatmul.mubr.bf16.gmra.mxu0 %v348
      %v433 = vpop.f32.mrf.mxu0
      %v434 = vadd.f32 %v260, %v433
      %v435 = vpop.f32.mrf.mxu0
      %v436 = vpop.f32.mrf.mxu0
      %v437 = vadd.f32 %v260, %v436
      %v438 = vpop.f32.mrf.mxu0
      %439 = vmatprep.mubr.bf16.mxu0 0
      %440 = vmatmul.mubr.bf16.gmra.mxu0 %v351
      %v441 = vpop.f32.mrf.mxu0
      %v442 = vadd.f32 %v260, %v441
      %v443 = vpop.f32.mrf.mxu0
      %v444 = vpop.f32.mrf.mxu0
      %v445 = vadd.f32 %v260, %v444
      %v446 = vpop.f32.mrf.mxu0
      %447 = vmatprep.mubr.bf16.mxu0 0
      %448 = vmatmul.mubr.bf16.gmra.mxu0 %v354
      %v449 = vpop.f32.mrf.mxu0
      %v450 = vadd.f32 %v260, %v449
      %v451 = vpop.f32.mrf.mxu0
      %v452 = vpop.f32.mrf.mxu0
      %v453 = vadd.f32 %v260, %v452
      %v454 = vpop.f32.mrf.mxu0
      %455 = vmatprep.mubr.bf16.mxu0 0
      %456 = vmatmul.mubr.bf16.gmra.mxu0 %v357
      %v457 = vpop.f32.mrf.mxu0
      %v458 = vadd.f32 %v260, %v457
      %v459 = vpop.f32.mrf.mxu0
      %v460 = vpop.f32.mrf.mxu0
      %v461 = vadd.f32 %v260, %v460
      %v462 = vpop.f32.mrf.mxu0
      %463 = vdwg.mxu0
      %v464 = vmax.f32 %v394, 0.0
      %v465 = vmax.f32 %v397, 0.0
      %v466 = vmax.f32 %v402, 0.0
      %v467 = vmax.f32 %v405, 0.0
      %v468 = vmax.f32 %v410, 0.0
      %v469 = vmax.f32 %v413, 0.0
      %v470 = vmax.f32 %v418, 0.0
      %v471 = vmax.f32 %v421, 0.0
      %v472 = vmax.f32 %v426, 0.0
      %v473 = vmax.f32 %v429, 0.0
      %v474 = vmax.f32 %v434, 0.0
      %v475 = vmax.f32 %v437, 0.0
      %v476 = vmax.f32 %v442, 0.0
      %v477 = vmax.f32 %v445, 0.0
      %v478 = vmax.f32 %v450, 0.0
      %v479 = vmax.f32 %v453, 0.0
      %v480 = vmax.f32 %v458, 0.0
      %v481 = vmax.f32 %v461, 0.0
      %v482 = vpack.c.bf16 %v465, %v464
      %v483 = vpack.c.bf16 %v467, %v466
      %v484 = vpack.c.bf16 %v469, %v468
      %v485 = vpack.c.bf16 %v471, %v470
      %v486 = vpack.c.bf16 %v473, %v472
      %v487 = vpack.c.bf16 %v475, %v474
      %v488 = vpack.c.bf16 %v477, %v476
      %v489 = vpack.c.bf16 %v479, %v478
      %v490 = vpack.c.bf16 %v481, %v480
      %v491 = vld [vmem:[%s3] sm:$0xf]
      %v492 = vld [vmem:[%s3 + $0x4] sm:$0xf]
      %v493 = vld [vmem:[%s3 + $0x8] sm:$0xf]
      %v494 = vld [vmem:[%s3 + $0xc] sm:$0xf]
      %v495 = vld [vmem:[%s4] sm:$0x1]
      %v497 = vlaneseq
      %v498 = vshrl.u32 %v497, 7
      %v499 = vsub.s32 0, %v498
      %v500 = vrot.slane %v495, %v499
      %v506 = vunpack.c.l.b16 %v491
      %v507 = vunpack.c.l.b16 %v492
      %v508 = vunpack.c.l.b16 %v493
      %v509 = vunpack.c.l.b16 %v494
      %v510 = vpack.c.b16 %v507, %v506
      %v511 = vpack.c.b16 %v509, %v508
      %vm514 = vcmask 261120
      %v516 = vsel %vm514, %v482, 0
      %v519 = vsel %vm514, %v483, 0
      %v522 = vsel %vm514, %v484, 0
      %v525 = vsel %vm514, %v485, 0
      %v528 = vsel %vm514, %v486, 0
      %v531 = vsel %vm514, %v487, 0
      %v534 = vsel %vm514, %v488, 0
      %v537 = vsel %vm514, %v489, 0
      %v540 = vsel %vm514, %v490, 0
      %542 = vmatprep.subr.bf16.mxu0 0
      %543 = vmatpush1.bf16.msra.mxu0 0
      %544 = vmatprep.subr.bf16.mxu0 0
      %545 = vmatpush1.bf16.msra.mxu0 0
      %546 = vmatprep.subr.bf16.mxu0 0
      %547 = vmatpush1.bf16.msra.mxu0 0
      %548 = vmatprep.subr.bf16.mxu0 0
      %549 = vmatpush1.bf16.msra.mxu0 0
      %550 = vmatprep.subr.bf16.mxu0 0
      %551 = vmatpush1.bf16.msra.mxu0 0
      %552 = vmatprep.subr.bf16.mxu0 0
      %553 = vmatpush1.bf16.msra.mxu0 0
      %554 = vmatprep.subr.bf16.mxu0 0
      %555 = vmatpush1.bf16.msra.mxu0 %v511
      %556 = vmatprep.subr.bf16.mxu0 0
      %557 = vmatpush1.bf16.msra.mxu0 %v510
      %558 = vmatprep.subr.bf16.mxu0 0
      %559 = vmatpush2.bf16.msra.mxu0 0
      %560 = vmatprep.subr.bf16.mxu0 0
      %561 = vmatpush2.bf16.msra.mxu0 0
      %562 = vmatprep.subr.bf16.mxu0 0
      %563 = vmatpush2.bf16.msra.mxu0 0
      %564 = vmatprep.subr.bf16.mxu0 0
      %565 = vmatpush2.bf16.msra.mxu0 0
      %566 = vmatprep.subr.bf16.mxu0 0
      %567 = vmatpush2.bf16.msra.mxu0 0
      %568 = vmatprep.subr.bf16.mxu0 0
      %569 = vmatpush2.bf16.msra.mxu0 0
      %570 = vmatprep.subr.bf16.mxu0 0
      %571 = vmatpush2.bf16.msra.mxu0 0
      %572 = vmatprep.subr.bf16.mxu0 0
      %573 = vmatpush2.bf16.msra.mxu0 0
      %574 = vmatprep.mubr.bf16.mxu0 0
      %575 = vmatmul.mubr.bf16.gmra.mxu0 %v516
      %v576 = vpop.f32.mrf.mxu0
      %v577 = vadd.f32 %v500, %v576
      %v578 = vpop.f32.mrf.mxu0
      %v579 = vpop.f32.mrf.mxu0
      %v580 = vadd.f32 %v500, %v579
      %v581 = vpop.f32.mrf.mxu0
      %582 = vmatprep.mubr.bf16.mxu0 0
      %583 = vmatmul.mubr.bf16.gmra.mxu0 %v519
      %v584 = vpop.f32.mrf.mxu0
      %v585 = vadd.f32 %v500, %v584
      %v586 = vpop.f32.mrf.mxu0
      %v587 = vpop.f32.mrf.mxu0
      %v588 = vadd.f32 %v500, %v587
      %v589 = vpop.f32.mrf.mxu0
      %590 = vmatprep.mubr.bf16.mxu0 0
      %591 = vmatmul.mubr.bf16.gmra.mxu0 %v522
      %v592 = vpop.f32.mrf.mxu0
      %v593 = vadd.f32 %v500, %v592
      %v594 = vpop.f32.mrf.mxu0
      %v595 = vpop.f32.mrf.mxu0
      %v596 = vadd.f32 %v500, %v595
      %v597 = vpop.f32.mrf.mxu0
      %598 = vmatprep.mubr.bf16.mxu0 0
      %599 = vmatmul.mubr.bf16.gmra.mxu0 %v525
      %v600 = vpop.f32.mrf.mxu0
      %v601 = vadd.f32 %v500, %v600
      %v602 = vpop.f32.mrf.mxu0
      %v603 = vpop.f32.mrf.mxu0
      %v604 = vadd.f32 %v500, %v603
      %v605 = vpop.f32.mrf.mxu0
      %606 = vmatprep.mubr.bf16.mxu0 0
      %607 = vmatmul.mubr.bf16.gmra.mxu0 %v528
      %v608 = vpop.f32.mrf.mxu0
      %v609 = vadd.f32 %v500, %v608
      %v610 = vpop.f32.mrf.mxu0
      %v611 = vpop.f32.mrf.mxu0
      %v612 = vadd.f32 %v500, %v611
      %v613 = vpop.f32.mrf.mxu0
      %614 = vmatprep.mubr.bf16.mxu0 0
      %615 = vmatmul.mubr.bf16.gmra.mxu0 %v531
      %v616 = vpop.f32.mrf.mxu0
      %v617 = vadd.f32 %v500, %v616
      %v618 = vpop.f32.mrf.mxu0
      %v619 = vpop.f32.mrf.mxu0
      %v620 = vadd.f32 %v500, %v619
      %v621 = vpop.f32.mrf.mxu0
      %622 = vmatprep.mubr.bf16.mxu0 0
      %623 = vmatmul.mubr.bf16.gmra.mxu0 %v534
      %v624 = vpop.f32.mrf.mxu0
      %v625 = vadd.f32 %v500, %v624
      %v626 = vpop.f32.mrf.mxu0
      %v627 = vpop.f32.mrf.mxu0
      %v628 = vadd.f32 %v500, %v627
      %v629 = vpop.f32.mrf.mxu0
      %630 = vmatprep.mubr.bf16.mxu0 0
      %631 = vmatmul.mubr.bf16.gmra.mxu0 %v537
      %v632 = vpop.f32.mrf.mxu0
      %v633 = vadd.f32 %v500, %v632
      %v634 = vpop.f32.mrf.mxu0
      %v635 = vpop.f32.mrf.mxu0
      %v636 = vadd.f32 %v500, %v635
      %v637 = vpop.f32.mrf.mxu0
      %638 = vmatprep.mubr.bf16.mxu0 0
      %639 = vmatmul.mubr.bf16.gmra.mxu0 %v540
      %v640 = vpop.f32.mrf.mxu0
      %v641 = vadd.f32 %v500, %v640
      %v642 = vpop.f32.mrf.mxu0
      %v643 = vpop.f32.mrf.mxu0
      %v644 = vadd.f32 %v500, %v643
      %v645 = vpop.f32.mrf.mxu0
      %646 = vdwg.mxu0
      %v647 = vpack.c.bf16 %v580, %v577
      %v648 = vpack.c.bf16 %v588, %v585
      %v649 = vpack.c.bf16 %v596, %v593
      %v650 = vpack.c.bf16 %v604, %v601
      %v651 = vpack.c.bf16 %v612, %v609
      %v652 = vpack.c.bf16 %v620, %v617
      %v653 = vpack.c.bf16 %v628, %v625
      %v654 = vpack.c.bf16 %v636, %v633
      %v655 = vpack.c.bf16 %v644, %v641
      %v665 = vunpack.c.l.b16 %v647
      %v666 = vunpack.c.h.b16 %v647
      %v667 = vunpack.c.l.b16 %v648
      %v668 = vunpack.c.h.b16 %v648
      %v669 = vunpack.c.l.b16 %v649
      %v670 = vunpack.c.h.b16 %v649
      %v671 = vunpack.c.l.b16 %v650
      %v672 = vunpack.c.h.b16 %v650
      %v673 = vunpack.c.l.b16 %v651
      %v674 = vunpack.c.h.b16 %v651
      %v675 = vunpack.c.l.b16 %v652
      %v676 = vunpack.c.h.b16 %v652
      %v677 = vunpack.c.l.b16 %v653
      %v678 = vunpack.c.h.b16 %v653
      %v679 = vunpack.c.l.b16 %v654
      %v680 = vunpack.c.h.b16 %v654
      %v681 = vunpack.c.l.b16 %v655
      %v682 = vunpack.c.h.b16 %v655
      %v683 = vpack.c.b16 %v665, %v665
      %v684 = vpack.c.b16 %v666, %v666
      %v685 = vpack.c.b16 %v667, %v667
      %v686 = vpack.c.b16 %v668, %v668
      %v687 = vpack.c.b16 %v669, %v669
      %v688 = vpack.c.b16 %v670, %v670
      %v689 = vpack.c.b16 %v671, %v671
      %v690 = vpack.c.b16 %v672, %v672
      %v691 = vpack.c.b16 %v673, %v673
      %v692 = vpack.c.b16 %v674, %v674
      %v693 = vpack.c.b16 %v675, %v675
      %v694 = vpack.c.b16 %v676, %v676
      %v695 = vpack.c.b16 %v677, %v677
      %v696 = vpack.c.b16 %v678, %v678
      %v697 = vpack.c.b16 %v679, %v679
      %v698 = vpack.c.b16 %v680, %v680
      %v699 = vpack.c.b16 %v681, %v681
      %v700 = vpack.c.b16 %v682, %v682
      %vm719 = vcmask 257024
      %720 = vst.msk [vmem:[%s226] sm:$0xf] %vm719, %v683
      %721 = vst.msk [vmem:[%s226 + $0x4] sm:$0xf] %vm719, %v684
      %722 = vst.msk [vmem:[%s226 + $0x8] sm:$0xf] %vm719, %v685
      %723 = vst.msk [vmem:[%s226 + $0xc] sm:$0xf] %vm719, %v686
      %724 = vst.msk [vmem:[%s226 + $0x10] sm:$0xf] %vm719, %v687
      %725 = vst.msk [vmem:[%s226 + $0x14] sm:$0xf] %vm719, %v688
      %726 = vst.msk [vmem:[%s226 + $0x18] sm:$0xf] %vm719, %v689
      %727 = vst.msk [vmem:[%s226 + $0x1c] sm:$0xf] %vm719, %v690
      %728 = vst.msk [vmem:[%s226 + $0x20] sm:$0xf] %vm719, %v691
      %729 = vst.msk [vmem:[%s226 + $0x24] sm:$0xf] %vm719, %v692
      %730 = vst.msk [vmem:[%s226 + $0x28] sm:$0xf] %vm719, %v693
      %731 = vst.msk [vmem:[%s226 + $0x2c] sm:$0xf] %vm719, %v694
      %732 = vst.msk [vmem:[%s226 + $0x30] sm:$0xf] %vm719, %v695
      %733 = vst.msk [vmem:[%s226 + $0x34] sm:$0xf] %vm719, %v696
      %734 = vst.msk [vmem:[%s226 + $0x38] sm:$0xf] %vm719, %v697
      %735 = vst.msk [vmem:[%s226 + $0x3c] sm:$0xf] %vm719, %v698
      %736 = vst.msk [vmem:[%s226 + $0x40] sm:$0xf] %vm719, %v699
      %737 = vst.msk [vmem:[%s226 + $0x44] sm:$0xf] %vm719, %v700
      %s738 = smul.u32 18, %s16
      %p739 = scmp.lt.s32.totalorder %s738, 35
      %s740 = scalar_select %p739, %s738, 35
      %s741 = smul.addr %s740, 4
      %s742 = scalar_lea.vmem %s5, %s741
      // Predicated region
      $region41: #{graphrec_forward.6} parent=39 // pred_check
        %p743 = pneg %p144
      $region42: #{graphrec_forward.6} parent=39 // pred_check_branch
        %745 = sbr.rel (%p743) target = $region44
      $region43: #{graphrec_forward.6} parent=39 // pred_region
        %s746 = smul.u32 18, %s16
      $region44: #{graphrec_forward.6} parent=39 // pred_fallthru
        _
    $region40: #{graphrec_forward.6} parent=5 // pred_fallthru
      _
    %p747 = scmp.le.s32.totalorder 2, %s11
    // Predicated region
    $region45: #{graphrec_forward.6} parent=5 // pred_check
      %p748 = pneg %p747
    $region46: #{graphrec_forward.6} parent=5 // pred_check_branch
      %750 = sbr.rel (%p748) target = $region48
    $region47: #{graphrec_forward.6} parent=5 // pred_region
      %s751 = ssub.s32 %s11, 2
      // Predicated region
      $region49: #{graphrec_forward.6} parent=47 // pred_check
        %p752 = pneg %p150
      $region50: #{graphrec_forward.6} parent=47 // pred_check_branch
        %754 = sbr.rel (%p752) target = $region52
      $region51: #{graphrec_forward.6} parent=47 // pred_region
        %s755 = smul.u32 18, %s17
        %p756 = scmp.lt.s32.totalorder %s755, 35
        %s757 = scalar_select %p756, %s755, 35
        %s758 = smul.addr %s757, 4
        %s759 = scalar_lea.vmem %s5, %s758
      $region52: #{graphrec_forward.6} parent=47 // pred_fallthru
        _
    $region48: #{graphrec_forward.6} parent=5 // pred_fallthru
      _
  $region6: #{graphrec_forward.6} parent=0 // loop_footer
    %s15 = sadd.s32 1, %s11
  $region7: #{graphrec_forward.6} parent=0 // loop_footer_branch
    %10 = sbr.rel target = $region3
  $region8: #{graphrec_forward.6} parent=0 // loop_exit
    _

// kernel: graphrec_forward.11
$region0: #{graphrec_forward.11}
  #allocation0 [shape = 'u32[]', space=smem, size = 0x4, offset = 0x4, fixed_abs, tag = 'smem constant byte address 0x4 - core index']
  #allocation1 [shape = 'u32[144,128]{1,0:T(1,128)}', space=vmem, size = 0x12000, scoped, tag = 'internal scratch']
  #allocation2 [shape = 'f32[1,1]{1,0:T(1,128)S(1)}', space=vmem, size = 0x200, scoped, tag = 'scoped memory for graphrec_forward.11']
  %s0 = inlined_call_operand.vmem [shape: bf16[16,32], index: 0, kind: input, shape index: {}]
  %s1 = inlined_call_operand.vmem [shape: bf16[16,32], index: 1, kind: input, shape index: {}]
  %s2 = inlined_call_operand.vmem [shape: bf16[16,32], index: 2, kind: input, shape index: {}]
  %s3 = inlined_call_operand.vmem [shape: bf16[64,32], index: 3, kind: input, shape index: {}]
  %s4 = inlined_call_operand.vmem [shape: f32[1,32], index: 4, kind: input, shape index: {}]
  %s5 = inlined_call_operand.vmem [shape: bf16[32,32], index: 5, kind: input, shape index: {}]
  %s6 = inlined_call_operand.vmem [shape: f32[1,32], index: 6, kind: input, shape index: {}]
  %s7 = inlined_call_operand.vmem [shape: bf16[32,32], index: 7, kind: input, shape index: {}]
  %s8 = inlined_call_operand.vmem [shape: f32[1,32], index: 8, kind: input, shape index: {}]
  %s9 = inlined_call_operand.vmem [shape: bf16[64,32], index: 9, kind: input, shape index: {}]
  %s10 = inlined_call_operand.vmem [shape: f32[1,32], index: 10, kind: input, shape index: {}]
  %s11 = inlined_call_operand.vmem [shape: bf16[32,32], index: 11, kind: input, shape index: {}]
  %s12 = inlined_call_operand.vmem [shape: f32[1,32], index: 12, kind: input, shape index: {}]
  %s13 = inlined_call_operand.vmem [shape: f32[1,32], index: 13, kind: input, shape index: {}]
  %s14 = inlined_call_operand.<no memory space> [shape: f32[1,1], index: 14, kind: input, shape index: {}]
  %s15 = inlined_call_operand.vmem [shape: f32[16,1], index: 15, kind: output, shape index: {}]
  %s16 = sld [smem:[#allocation0]]
  $region70: #{graphrec_forward.11} parent=0
    _
  %s18 = ssub.s32 1, %s16
  %s19 = scalar_select 0, %s18, %s16
  %v20 = vstv %s14
  %21 = vst [vmem:[#allocation2] sm:$0x1] %v20
  // Predicated region
  $region2: #{graphrec_forward.11} parent=0 // pred_check
    _
  $region3: #{graphrec_forward.11} parent=0 // pred_check_branch
    %23 = sbr.rel (0) target = $region5
  $region4: #{graphrec_forward.11} parent=0 // pred_region
    _
  $region5: #{graphrec_forward.11} parent=0 // pred_fallthru
    _
  // Predicated region
  $region6: #{graphrec_forward.11} parent=0 // pred_check
    _
  $region7: #{graphrec_forward.11} parent=0 // pred_check_branch
    %25 = sbr.rel (0) target = $region9
  $region8: #{graphrec_forward.11} parent=0 // pred_region
    _
  $region9: #{graphrec_forward.11} parent=0 // pred_fallthru
    _
  // Predicated region
  $region10: #{graphrec_forward.11} parent=0 // pred_check
    _
  $region11: #{graphrec_forward.11} parent=0 // pred_check_branch
    %27 = sbr.rel (0) target = $region13
  $region12: #{graphrec_forward.11} parent=0 // pred_region
    _
  $region13: #{graphrec_forward.11} parent=0 // pred_fallthru
    _
  // Predicated region
  $region14: #{graphrec_forward.11} parent=0 // pred_check
    _
  $region15: #{graphrec_forward.11} parent=0 // pred_check_branch
    %29 = sbr.rel (0) target = $region17
  $region16: #{graphrec_forward.11} parent=0 // pred_region
    _
  $region17: #{graphrec_forward.11} parent=0 // pred_fallthru
    _
  // Predicated region
  $region18: #{graphrec_forward.11} parent=0 // pred_check
    _
  $region19: #{graphrec_forward.11} parent=0 // pred_check_branch
    %31 = sbr.rel (0) target = $region21
  $region20: #{graphrec_forward.11} parent=0 // pred_region
    _
  $region21: #{graphrec_forward.11} parent=0 // pred_fallthru
    _
  // Predicated region
  $region22: #{graphrec_forward.11} parent=0 // pred_check
    _
  $region23: #{graphrec_forward.11} parent=0 // pred_check_branch
    %33 = sbr.rel (0) target = $region25
  $region24: #{graphrec_forward.11} parent=0 // pred_region
    _
  $region25: #{graphrec_forward.11} parent=0 // pred_fallthru
    _
  // Predicated region
  $region26: #{graphrec_forward.11} parent=0 // pred_check
    _
  $region27: #{graphrec_forward.11} parent=0 // pred_check_branch
    %35 = sbr.rel (0) target = $region29
  $region28: #{graphrec_forward.11} parent=0 // pred_region
    _
  $region29: #{graphrec_forward.11} parent=0 // pred_fallthru
    _
  // Predicated region
  $region30: #{graphrec_forward.11} parent=0 // pred_check
    _
  $region31: #{graphrec_forward.11} parent=0 // pred_check_branch
    %37 = sbr.rel (0) target = $region33
  $region32: #{graphrec_forward.11} parent=0 // pred_region
    _
  $region33: #{graphrec_forward.11} parent=0 // pred_fallthru
    _
  // Predicated region
  $region34: #{graphrec_forward.11} parent=0 // pred_check
    _
  $region35: #{graphrec_forward.11} parent=0 // pred_check_branch
    %39 = sbr.rel (0) target = $region37
  $region36: #{graphrec_forward.11} parent=0 // pred_region
    _
  $region37: #{graphrec_forward.11} parent=0 // pred_fallthru
    _
  // Predicated region
  $region38: #{graphrec_forward.11} parent=0 // pred_check
    _
  $region39: #{graphrec_forward.11} parent=0 // pred_check_branch
    %41 = sbr.rel (0) target = $region41
  $region40: #{graphrec_forward.11} parent=0 // pred_region
    _
  $region41: #{graphrec_forward.11} parent=0 // pred_fallthru
    _
  // Predicated region
  $region42: #{graphrec_forward.11} parent=0 // pred_check
    _
  $region43: #{graphrec_forward.11} parent=0 // pred_check_branch
    %43 = sbr.rel (0) target = $region45
  $region44: #{graphrec_forward.11} parent=0 // pred_region
    _
  $region45: #{graphrec_forward.11} parent=0 // pred_fallthru
    _
  // Predicated region
  $region46: #{graphrec_forward.11} parent=0 // pred_check
    _
  $region47: #{graphrec_forward.11} parent=0 // pred_check_branch
    %45 = sbr.rel (0) target = $region49
  $region48: #{graphrec_forward.11} parent=0 // pred_region
    _
  $region49: #{graphrec_forward.11} parent=0 // pred_fallthru
    _
  // Predicated region
  $region50: #{graphrec_forward.11} parent=0 // pred_check
    _
  $region51: #{graphrec_forward.11} parent=0 // pred_check_branch
    %47 = sbr.rel (0) target = $region53
  $region52: #{graphrec_forward.11} parent=0 // pred_region
    _
  $region53: #{graphrec_forward.11} parent=0 // pred_fallthru
    _
  // Predicated region
  $region54: #{graphrec_forward.11} parent=0 // pred_check
    _
  $region55: #{graphrec_forward.11} parent=0 // pred_check_branch
    %49 = sbr.rel (0) target = $region57
  $region56: #{graphrec_forward.11} parent=0 // pred_region
    _
  $region57: #{graphrec_forward.11} parent=0 // pred_fallthru
    _
  // Predicated region
  $region58: #{graphrec_forward.11} parent=0 // pred_check
    _
  $region59: #{graphrec_forward.11} parent=0 // pred_check_branch
    %51 = sbr.rel (0) target = $region61
  $region60: #{graphrec_forward.11} parent=0 // pred_region
    _
  $region61: #{graphrec_forward.11} parent=0 // pred_fallthru
    _
  %v53 = vld [vmem:[%s0] sm:$0xf]
  %v54 = vld [vmem:[%s0 + $0x4] sm:$0xf]
  %v55 = vld [vmem:[%s1] sm:$0xf]
  %v56 = vld [vmem:[%s1 + $0x4] sm:$0xf]
  %v57 = vld [vmem:[%s2] sm:$0xf]
  %v58 = vld [vmem:[%s2 + $0x4] sm:$0xf]
  %v61 = vunpack.c.l.b16 %v53
  %v62 = vunpack.c.l.b16 %v54
  %v63 = vpack.c.b16 %v62, %v61
  %v66 = vunpack.c.l.b16 %v55
  %v67 = vunpack.c.l.b16 %v56
  %v68 = vpack.c.b16 %v67, %v66
  %69 = vrot.lane.b32.xlu0 %v68, 32
  %v70 = vpop.permute.xlu0 %69
  %vm71 = vcmask 261120
  %v74 = vsel %vm71, %v63, %v70
  %v75 = vld [vmem:[%s3] sm:$0xf]
  %v76 = vld [vmem:[%s3 + $0x4] sm:$0xf]
  %v77 = vld [vmem:[%s3 + $0x8] sm:$0xf]
  %v78 = vld [vmem:[%s3 + $0xc] sm:$0xf]
  %v79 = vld [vmem:[%s3 + $0x10] sm:$0xf]
  %v80 = vld [vmem:[%s3 + $0x14] sm:$0xf]
  %v81 = vld [vmem:[%s3 + $0x18] sm:$0xf]
  %v82 = vld [vmem:[%s3 + $0x1c] sm:$0xf]
  %v83 = vld [vmem:[%s4] sm:$0x1]
  %v85 = vlaneseq
  %v86 = vshrl.u32 %v85, 7
  %v87 = vsub.s32 0, %v86
  %v88 = vrot.slane %v83, %v87
  %v98 = vunpack.c.l.b16 %v75
  %v99 = vunpack.c.l.b16 %v76
  %v100 = vunpack.c.l.b16 %v77
  %v101 = vunpack.c.l.b16 %v78
  %v102 = vunpack.c.l.b16 %v79
  %v103 = vunpack.c.l.b16 %v80
  %v104 = vunpack.c.l.b16 %v81
  %v105 = vunpack.c.l.b16 %v82
  %v106 = vpack.c.b16 %v99, %v98
  %v107 = vpack.c.b16 %v101, %v100
  %v108 = vpack.c.b16 %v103, %v102
  %v109 = vpack.c.b16 %v105, %v104
  %vm114 = vcmask 523264
  %v115 = vsel %vm114, %v74, 0
  %117 = vmatprep.subr.bf16.mxu0 0
  %118 = vmatpush1.bf16.msra.mxu0 0
  %119 = vmatprep.subr.bf16.mxu0 0
  %120 = vmatpush1.bf16.msra.mxu0 0
  %121 = vmatprep.subr.bf16.mxu0 0
  %122 = vmatpush1.bf16.msra.mxu0 0
  %123 = vmatprep.subr.bf16.mxu0 0
  %124 = vmatpush1.bf16.msra.mxu0 0
  %125 = vmatprep.subr.bf16.mxu0 0
  %126 = vmatpush1.bf16.msra.mxu0 %v109
  %127 = vmatprep.subr.bf16.mxu0 0
  %128 = vmatpush1.bf16.msra.mxu0 %v108
  %129 = vmatprep.subr.bf16.mxu0 0
  %130 = vmatpush1.bf16.msra.mxu0 %v107
  %131 = vmatprep.subr.bf16.mxu0 0
  %132 = vmatpush1.bf16.msra.mxu0 %v106
  %133 = vmatprep.subr.bf16.mxu0 0
  %134 = vmatpush2.bf16.msra.mxu0 0
  %135 = vmatprep.subr.bf16.mxu0 0
  %136 = vmatpush2.bf16.msra.mxu0 0
  %137 = vmatprep.subr.bf16.mxu0 0
  %138 = vmatpush2.bf16.msra.mxu0 0
  %139 = vmatprep.subr.bf16.mxu0 0
  %140 = vmatpush2.bf16.msra.mxu0 0
  %141 = vmatprep.subr.bf16.mxu0 0
  %142 = vmatpush2.bf16.msra.mxu0 0
  %143 = vmatprep.subr.bf16.mxu0 0
  %144 = vmatpush2.bf16.msra.mxu0 0
  %145 = vmatprep.subr.bf16.mxu0 0
  %146 = vmatpush2.bf16.msra.mxu0 0
  %147 = vmatprep.subr.bf16.mxu0 0
  %148 = vmatpush2.bf16.msra.mxu0 0
  %149 = vmatprep.mubr.bf16.mxu0 0
  %150 = vmatmul.mubr.bf16.gmra.mxu0 %v115
  %v151 = vpop.f32.mrf.mxu0
  %v152 = vadd.f32 %v88, %v151
  %v153 = vpop.f32.mrf.mxu0
  %v154 = vpop.f32.mrf.mxu0
  %v155 = vadd.f32 %v88, %v154
  %v156 = vpop.f32.mrf.mxu0
  %157 = vdwg.mxu0
  %v158 = vmax.f32 %v152, 0.0
  %v159 = vmax.f32 %v155, 0.0
  %v160 = vpack.c.bf16 %v159, %v158
  %v161 = vld [vmem:[%s5] sm:$0xf]
  %v162 = vld [vmem:[%s5 + $0x4] sm:$0xf]
  %v163 = vld [vmem:[%s5 + $0x8] sm:$0xf]
  %v164 = vld [vmem:[%s5 + $0xc] sm:$0xf]
  %v165 = vld [vmem:[%s6] sm:$0x1]
  %v167 = vlaneseq
  %v168 = vshrl.u32 %v167, 7
  %v169 = vsub.s32 0, %v168
  %v170 = vrot.slane %v165, %v169
  %v176 = vunpack.c.l.b16 %v161
  %v177 = vunpack.c.l.b16 %v162
  %v178 = vunpack.c.l.b16 %v163
  %v179 = vunpack.c.l.b16 %v164
  %v180 = vpack.c.b16 %v177, %v176
  %v181 = vpack.c.b16 %v179, %v178
  %v185 = vsel %vm71, %v160, 0
  %187 = vmatprep.subr.bf16.mxu0 0
  %188 = vmatpush1.bf16.msra.mxu0 0
  %189 = vmatprep.subr.bf16.mxu0 0
  %190 = vmatpush1.bf16.msra.mxu0 0
  %191 = vmatprep.subr.bf16.mxu0 0
  %192 = vmatpush1.bf16.msra.mxu0 0
  %193 = vmatprep.subr.bf16.mxu0 0
  %194 = vmatpush1.bf16.msra.mxu0 0
  %195 = vmatprep.subr.bf16.mxu0 0
  %196 = vmatpush1.bf16.msra.mxu0 0
  %197 = vmatprep.subr.bf16.mxu0 0
  %198 = vmatpush1.bf16.msra.mxu0 0
  %199 = vmatprep.subr.bf16.mxu0 0
  %200 = vmatpush1.bf16.msra.mxu0 %v181
  %201 = vmatprep.subr.bf16.mxu0 0
  %202 = vmatpush1.bf16.msra.mxu0 %v180
  %203 = vmatprep.subr.bf16.mxu0 0
  %204 = vmatpush2.bf16.msra.mxu0 0
  %205 = vmatprep.subr.bf16.mxu0 0
  %206 = vmatpush2.bf16.msra.mxu0 0
  %207 = vmatprep.subr.bf16.mxu0 0
  %208 = vmatpush2.bf16.msra.mxu0 0
  %209 = vmatprep.subr.bf16.mxu0 0
  %210 = vmatpush2.bf16.msra.mxu0 0
  %211 = vmatprep.subr.bf16.mxu0 0
  %212 = vmatpush2.bf16.msra.mxu0 0
  %213 = vmatprep.subr.bf16.mxu0 0
  %214 = vmatpush2.bf16.msra.mxu0 0
  %215 = vmatprep.subr.bf16.mxu0 0
  %216 = vmatpush2.bf16.msra.mxu0 0
  %217 = vmatprep.subr.bf16.mxu0 0
  %218 = vmatpush2.bf16.msra.mxu0 0
  %219 = vmatprep.mubr.bf16.mxu0 0
  %220 = vmatmul.mubr.bf16.gmra.mxu0 %v185
  %v221 = vpop.f32.mrf.mxu0
  %v222 = vadd.f32 %v170, %v221
  %v223 = vpop.f32.mrf.mxu0
  %v224 = vpop.f32.mrf.mxu0
  %v225 = vadd.f32 %v170, %v224
  %v226 = vpop.f32.mrf.mxu0
  %227 = vdwg.mxu0
  %v228 = vmax.f32 %v222, 0.0
  %v229 = vmax.f32 %v225, 0.0
  %v230 = vpack.c.bf16 %v229, %v228
  %v231 = vld [vmem:[%s7] sm:$0xf]
  %v232 = vld [vmem:[%s7 + $0x4] sm:$0xf]
  %v233 = vld [vmem:[%s7 + $0x8] sm:$0xf]
  %v234 = vld [vmem:[%s7 + $0xc] sm:$0xf]
  %v235 = vld [vmem:[%s8] sm:$0x1]
  %v237 = vlaneseq
  %v238 = vshrl.u32 %v237, 7
  %v239 = vsub.s32 0, %v238
  %v240 = vrot.slane %v235, %v239
  %v246 = vunpack.c.l.b16 %v231
  %v247 = vunpack.c.l.b16 %v232
  %v248 = vunpack.c.l.b16 %v233
  %v249 = vunpack.c.l.b16 %v234
  %v250 = vpack.c.b16 %v247, %v246
  %v251 = vpack.c.b16 %v249, %v248
  %v255 = vsel %vm71, %v230, 0
  %257 = vmatprep.subr.bf16.mxu0 0
  %258 = vmatpush1.bf16.msra.mxu0 0
  %259 = vmatprep.subr.bf16.mxu0 0
  %260 = vmatpush1.bf16.msra.mxu0 0
  %261 = vmatprep.subr.bf16.mxu0 0
  %262 = vmatpush1.bf16.msra.mxu0 0
  %263 = vmatprep.subr.bf16.mxu0 0
  %264 = vmatpush1.bf16.msra.mxu0 0
  %265 = vmatprep.subr.bf16.mxu0 0
  %266 = vmatpush1.bf16.msra.mxu0 0
  %267 = vmatprep.subr.bf16.mxu0 0
  %268 = vmatpush1.bf16.msra.mxu0 0
  %269 = vmatprep.subr.bf16.mxu0 0
  %270 = vmatpush1.bf16.msra.mxu0 %v251
  %271 = vmatprep.subr.bf16.mxu0 0
  %272 = vmatpush1.bf16.msra.mxu0 %v250
  %273 = vmatprep.subr.bf16.mxu0 0
  %274 = vmatpush2.bf16.msra.mxu0 0
  %275 = vmatprep.subr.bf16.mxu0 0
  %276 = vmatpush2.bf16.msra.mxu0 0
  %277 = vmatprep.subr.bf16.mxu0 0
  %278 = vmatpush2.bf16.msra.mxu0 0
  %279 = vmatprep.subr.bf16.mxu0 0
  %280 = vmatpush2.bf16.msra.mxu0 0
  %281 = vmatprep.subr.bf16.mxu0 0
  %282 = vmatpush2.bf16.msra.mxu0 0
  %283 = vmatprep.subr.bf16.mxu0 0
  %284 = vmatpush2.bf16.msra.mxu0 0
  %285 = vmatprep.subr.bf16.mxu0 0
  %286 = vmatpush2.bf16.msra.mxu0 0
  %287 = vmatprep.subr.bf16.mxu0 0
  %288 = vmatpush2.bf16.msra.mxu0 0
  %289 = vmatprep.mubr.bf16.mxu0 0
  %290 = vmatmul.mubr.bf16.gmra.mxu0 %v255
  %v291 = vpop.f32.mrf.mxu0
  %v292 = vadd.f32 %v240, %v291
  %v293 = vpop.f32.mrf.mxu0
  %v294 = vpop.f32.mrf.mxu0
  %v295 = vadd.f32 %v240, %v294
  %v296 = vpop.f32.mrf.mxu0
  %297 = vdwg.mxu0
  %v298 = vmax.f32 %v292, 0.0
  %v299 = vmax.f32 %v295, 0.0
  %v300 = vpack.c.bf16 %v299, %v298
  %v303 = vunpack.c.l.b16 %v57
  %v304 = vunpack.c.l.b16 %v58
  %v305 = vpack.c.b16 %v304, %v303
  %306 = vrot.lane.b32.xlu0 %v305, 32
  %v307 = vpop.permute.xlu0 %306
  %v310 = vsel %vm71, %v300, %v307
  %v311 = vld [vmem:[%s9] sm:$0xf]
  %v312 = vld [vmem:[%s9 + $0x4] sm:$0xf]
  %v313 = vld [vmem:[%s9 + $0x8] sm:$0xf]
  %v314 = vld [vmem:[%s9 + $0xc] sm:$0xf]
  %v315 = vld [vmem:[%s9 + $0x10] sm:$0xf]
  %v316 = vld [vmem:[%s9 + $0x14] sm:$0xf]
  %v317 = vld [vmem:[%s9 + $0x18] sm:$0xf]
  %v318 = vld [vmem:[%s9 + $0x1c] sm:$0xf]
  %v319 = vld [vmem:[%s10] sm:$0x1]
  %v321 = vlaneseq
  %v322 = vshrl.u32 %v321, 7
  %v323 = vsub.s32 0, %v322
  %v324 = vrot.slane %v319, %v323
  %v334 = vunpack.c.l.b16 %v311
  %v335 = vunpack.c.l.b16 %v312
  %v336 = vunpack.c.l.b16 %v313
  %v337 = vunpack.c.l.b16 %v314
  %v338 = vunpack.c.l.b16 %v315
  %v339 = vunpack.c.l.b16 %v316
  %v340 = vunpack.c.l.b16 %v317
  %v341 = vunpack.c.l.b16 %v318
  %v342 = vpack.c.b16 %v335, %v334
  %v343 = vpack.c.b16 %v337, %v336
  %v344 = vpack.c.b16 %v339, %v338
  %v345 = vpack.c.b16 %v341, %v340
  %v350 = vsel %vm114, %v310, 0
  %352 = vmatprep.subr.bf16.mxu0 0
  %353 = vmatpush1.bf16.msra.mxu0 0
  %354 = vmatprep.subr.bf16.mxu0 0
  %355 = vmatpush1.bf16.msra.mxu0 0
  %356 = vmatprep.subr.bf16.mxu0 0
  %357 = vmatpush1.bf16.msra.mxu0 0
  %358 = vmatprep.subr.bf16.mxu0 0
  %359 = vmatpush1.bf16.msra.mxu0 0
  %360 = vmatprep.subr.bf16.mxu0 0
  %361 = vmatpush1.bf16.msra.mxu0 %v345
  %362 = vmatprep.subr.bf16.mxu0 0
  %363 = vmatpush1.bf16.msra.mxu0 %v344
  %364 = vmatprep.subr.bf16.mxu0 0
  %365 = vmatpush1.bf16.msra.mxu0 %v343
  %366 = vmatprep.subr.bf16.mxu0 0
  %367 = vmatpush1.bf16.msra.mxu0 %v342
  %368 = vmatprep.subr.bf16.mxu0 0
  %369 = vmatpush2.bf16.msra.mxu0 0
  %370 = vmatprep.subr.bf16.mxu0 0
  %371 = vmatpush2.bf16.msra.mxu0 0
  %372 = vmatprep.subr.bf16.mxu0 0
  %373 = vmatpush2.bf16.msra.mxu0 0
  %374 = vmatprep.subr.bf16.mxu0 0
  %375 = vmatpush2.bf16.msra.mxu0 0
  %376 = vmatprep.subr.bf16.mxu0 0
  %377 = vmatpush2.bf16.msra.mxu0 0
  %378 = vmatprep.subr.bf16.mxu0 0
  %379 = vmatpush2.bf16.msra.mxu0 0
  %380 = vmatprep.subr.bf16.mxu0 0
  %381 = vmatpush2.bf16.msra.mxu0 0
  %382 = vmatprep.subr.bf16.mxu0 0
  %383 = vmatpush2.bf16.msra.mxu0 0
  %384 = vmatprep.mubr.bf16.mxu0 0
  %385 = vmatmul.mubr.bf16.gmra.mxu0 %v350
  %v386 = vpop.f32.mrf.mxu0
  %v387 = vadd.f32 %v324, %v386
  %v388 = vpop.f32.mrf.mxu0
  %v389 = vpop.f32.mrf.mxu0
  %v390 = vadd.f32 %v324, %v389
  %v391 = vpop.f32.mrf.mxu0
  %392 = vdwg.mxu0
  %v393 = vmax.f32 %v387, 0.0
  %v394 = vmax.f32 %v390, 0.0
  %v395 = vpack.c.bf16 %v394, %v393
  %v396 = vld [vmem:[%s11] sm:$0xf]
  %v397 = vld [vmem:[%s11 + $0x4] sm:$0xf]
  %v398 = vld [vmem:[%s11 + $0x8] sm:$0xf]
  %v399 = vld [vmem:[%s11 + $0xc] sm:$0xf]
  %v400 = vld [vmem:[%s12] sm:$0x1]
  %v402 = vlaneseq
  %v403 = vshrl.u32 %v402, 7
  %v404 = vsub.s32 0, %v403
  %v405 = vrot.slane %v400, %v404
  %v411 = vunpack.c.l.b16 %v396
  %v412 = vunpack.c.l.b16 %v397
  %v413 = vunpack.c.l.b16 %v398
  %v414 = vunpack.c.l.b16 %v399
  %v415 = vpack.c.b16 %v412, %v411
  %v416 = vpack.c.b16 %v414, %v413
  %v420 = vsel %vm71, %v395, 0
  %422 = vmatprep.subr.bf16.mxu0 0
  %423 = vmatpush1.bf16.msra.mxu0 0
  %424 = vmatprep.subr.bf16.mxu0 0
  %425 = vmatpush1.bf16.msra.mxu0 0
  %426 = vmatprep.subr.bf16.mxu0 0
  %427 = vmatpush1.bf16.msra.mxu0 0
  %428 = vmatprep.subr.bf16.mxu0 0
  %429 = vmatpush1.bf16.msra.mxu0 0
  %430 = vmatprep.subr.bf16.mxu0 0
  %431 = vmatpush1.bf16.msra.mxu0 0
  %432 = vmatprep.subr.bf16.mxu0 0
  %433 = vmatpush1.bf16.msra.mxu0 0
  %434 = vmatprep.subr.bf16.mxu0 0
  %435 = vmatpush1.bf16.msra.mxu0 %v416
  %436 = vmatprep.subr.bf16.mxu0 0
  %437 = vmatpush1.bf16.msra.mxu0 %v415
  %438 = vmatprep.subr.bf16.mxu0 0
  %439 = vmatpush2.bf16.msra.mxu0 0
  %440 = vmatprep.subr.bf16.mxu0 0
  %441 = vmatpush2.bf16.msra.mxu0 0
  %442 = vmatprep.subr.bf16.mxu0 0
  %443 = vmatpush2.bf16.msra.mxu0 0
  %444 = vmatprep.subr.bf16.mxu0 0
  %445 = vmatpush2.bf16.msra.mxu0 0
  %446 = vmatprep.subr.bf16.mxu0 0
  %447 = vmatpush2.bf16.msra.mxu0 0
  %448 = vmatprep.subr.bf16.mxu0 0
  %449 = vmatpush2.bf16.msra.mxu0 0
  %450 = vmatprep.subr.bf16.mxu0 0
  %451 = vmatpush2.bf16.msra.mxu0 0
  %452 = vmatprep.subr.bf16.mxu0 0
  %453 = vmatpush2.bf16.msra.mxu0 0
  %454 = vmatprep.mubr.bf16.mxu0 0
  %455 = vmatmul.mubr.bf16.gmra.mxu0 %v420
  %v456 = vpop.f32.mrf.mxu0
  %v457 = vadd.f32 %v405, %v456
  %v458 = vpop.f32.mrf.mxu0
  %v459 = vpop.f32.mrf.mxu0
  %v460 = vadd.f32 %v405, %v459
  %v461 = vpop.f32.mrf.mxu0
  %462 = vdwg.mxu0
  %v463 = vmax.f32 %v457, 0.0
  %v464 = vmax.f32 %v460, 0.0
  %v465 = vld [vmem:[%s13] sm:$0x1]
  %v467 = vlaneseq
  %v468 = vshrl.u32 %v467, 7
  %v469 = vsub.s32 0, %v468
  %v470 = vrot.slane %v465, %v469
  %v472 = vmul.f32 %v463, %v470
  %v473 = vmul.f32 %v464, %v470
  %v474 = vsel %vm71, %v472, 0.0
  %475 = vadd.xlane.f32.xlu0 %v474
  %v476 = vpop.xlane.xlu0 %475
  %v477 = vsel %vm71, %v473, 0.0
  %478 = vadd.xlane.f32.xlu0 %v477
  %v479 = vpop.xlane.xlu0 %478
  %v480 = vld [vmem:[#allocation2] sm:$0x1]
  %v482 = vlaneseq
  %v483 = vshrl.u32 %v482, 7
  %v484 = vsub.s32 0, %v483
  %v485 = vrot.slane %v480, %v484
  %v487 = vadd.f32 %v476, %v485
  %v488 = vadd.f32 %v479, %v485
  %vm489 = vcmask 7168
  %490 = vst.msk [vmem:[%s15] sm:$0xff] %vm489, %v487
  %491 = vst.msk [vmem:[%s15 + $0x8] sm:$0xff] %vm489, %v488
  // Predicated region
  $region62: #{graphrec_forward.11} parent=0 // pred_check
    _
  $region63: #{graphrec_forward.11} parent=0 // pred_check_branch
    %493 = sbr.rel (0) target = $region65
  $region64: #{graphrec_forward.11} parent=0 // pred_region
    _
  $region65: #{graphrec_forward.11} parent=0 // pred_fallthru
    _
  // Predicated region
  $region66: #{graphrec_forward.11} parent=0 // pred_check
    _
  $region67: #{graphrec_forward.11} parent=0 // pred_check_branch
    %495 = sbr.rel (0) target = $region69
  $region68: #{graphrec_forward.11} parent=0 // pred_region
    _
  $region69: #{graphrec_forward.11} parent=0 // pred_fallthru
    _

// kernel: graphrec_forward.7
$region0: #{graphrec_forward.7}
  #allocation0 [shape = 'u32[]', space=smem, size = 0x4, offset = 0x4, fixed_abs, tag = 'smem constant byte address 0x4 - core index']
  #allocation1 [shape = 'u32[144,128]{1,0:T(1,128)}', space=vmem, size = 0x12000, scoped, tag = 'internal scratch']
  #allocation2 [shape = 'f32[1,1]{1,0:T(1,128)S(1)}', space=vmem, size = 0x200, scoped, tag = 'scoped memory for graphrec_forward.7']
  %s0 = inlined_call_operand.vmem [shape: bf16[64,8,32], index: 0, kind: input, shape index: {}]
  %s1 = inlined_call_operand.vmem [shape: bf16[64,8,32], index: 1, kind: input, shape index: {}]
  %s2 = inlined_call_operand.vmem [shape: f32[64,8], index: 2, kind: input, shape index: {}]
  %s3 = inlined_call_operand.vmem [shape: bf16[64,32], index: 3, kind: input, shape index: {}]
  %s4 = inlined_call_operand.vmem [shape: f32[1,32], index: 4, kind: input, shape index: {}]
  %s5 = inlined_call_operand.vmem [shape: f32[1,32], index: 5, kind: input, shape index: {}]
  %s6 = inlined_call_operand.<no memory space> [shape: f32[1,1], index: 6, kind: input, shape index: {}]
  %s7 = inlined_call_operand.vmem [shape: bf16[32,32], index: 7, kind: input, shape index: {}]
  %s8 = inlined_call_operand.vmem [shape: f32[1,32], index: 8, kind: input, shape index: {}]
  %s9 = inlined_call_operand.vmem [shape: bf16[64,32], index: 9, kind: output, shape index: {}]
  %s10 = sld [smem:[#allocation0]]
  $region69: #{graphrec_forward.7} parent=0
    _
  %s12 = ssub.s32 1, %s10
  %s13 = scalar_select 0, %s12, %s10
  %v14 = vstv %s6
  %15 = vst [vmem:[#allocation2] sm:$0x1] %v14
  loop: start=0, step=1, limit=4
  $region2: #{graphrec_forward.7} parent=0 // loop_pre_header
    _
  $region3: #{graphrec_forward.7} parent=0 // loop_header
    %s17 = sphi 0, %s21
    %p18 = scmp.ge.s32.totalorder %s17, 4
    %s27 = sphi 0, %s29
    %s30 = sphi 0, %s27
    %s31 = sphi 0, %s30
    %s47 = sphi 0, %s31
    %s53 = sphi 0, %s55
    %s56 = sphi 0, %s53
    %s57 = sphi 0, %s56
    %s73 = sphi 0, %s57
    %s79 = sphi 0, %s81
    %s82 = sphi 0, %s79
    %s83 = sphi 0, %s82
    %s99 = sphi 0, %s83
    %s103 = sphi 0, %s103
    %s105 = sphi 0, %s103
    %s106 = sphi 0, %s105
    %s120 = sphi 0, %s106
    %s124 = sphi 0, %s124
    %s126 = sphi 0, %s124
    %s127 = sphi 0, %s126
    %s141 = sphi 0, %s127
    %s145 = sphi 0, %s145
    %s147 = sphi 0, %s145
    %s148 = sphi 0, %s147
    %s162 = sphi 0, %s148
    %s166 = sphi 0, %s166
    %s168 = sphi 0, %s166
    %s169 = sphi 0, %s168
    %s183 = sphi 0, %s169
    %s187 = sphi 0, %s187
    %s189 = sphi 0, %s187
    %s190 = sphi 0, %s189
    %s204 = sphi 0, %s190
    %s208 = sphi 0, %s208
    %s210 = sphi 0, %s208
    %s211 = sphi 0, %s210
    %s225 = sphi 0, %s211
    %s231 = sphi 0, %s233
    %s234 = sphi 0, %s231
    %s235 = sphi 0, %s234
    %s251 = sphi 0, %s235
  $region4: #{graphrec_forward.7} parent=0 // loop_header_branch
    %20 = sbr.rel (%p18) target = $region8
  $region5: #{graphrec_forward.7} parent=0 // loop_body
    %s22 = ssub.s32 %s17, 1
    %s23 = ssub.s32 %s17, 2
    %s24 = sadd.s32 %s17, 1
    %s25 = ssub.s32 %s17, %s24
    %p26 = scmp.eq.s32.totalorder %s25, 0
    %s28 = sadd.s32 %s27, 1
    %s29 = scalar_select %p26, %s27, %s28
    %p32 = pneg %p26
    %p33 = scmp.eq.s32.totalorder %s17, 1
    %p34 = por %p32, %p33
    %p35 = scmp.ne.s32.totalorder %s27, %s30
    %p36 = scmp.eq.s32.totalorder %s17, 0
    %p37 = por %p35, %p36
    %p38 = scmp.ne.s32.totalorder %s27, %s30
    %p39 = scmp.eq.s32.totalorder %s22, 1
    %p40 = por %p38, %p39
    %p41 = scmp.ne.s32.totalorder %s30, %s31
    %p42 = scmp.eq.s32.totalorder %s22, 0
    %p43 = por %p41, %p42
    %p44 = scmp.ne.s32.totalorder %s30, %s31
    %p45 = scmp.eq.s32.totalorder %s23, 1
    %p46 = por %p44, %p45
    %p48 = scmp.ne.s32.totalorder %s31, %s47
    %p49 = scmp.eq.s32.totalorder %s23, 0
    %p50 = por %p48, %p49
    %s51 = ssub.s32 %s17, %s24
    %p52 = scmp.eq.s32.totalorder %s51, 0
    %s54 = sadd.s32 %s53, 1
    %s55 = scalar_select %p52, %s53, %s54
    %p58 = pneg %p52
    %p59 = scmp.eq.s32.totalorder %s17, 1
    %p60 = por %p58, %p59
    %p61 = scmp.ne.s32.totalorder %s53, %s56
    %p62 = scmp.eq.s32.totalorder %s17, 0
    %p63 = por %p61, %p62
    %p64 = scmp.ne.s32.totalorder %s53, %s56
    %p65 = scmp.eq.s32.totalorder %s22, 1
    %p66 = por %p64, %p65
    %p67 = scmp.ne.s32.totalorder %s56, %s57
    %p68 = scmp.eq.s32.totalorder %s22, 0
    %p69 = por %p67, %p68
    %p70 = scmp.ne.s32.totalorder %s56, %s57
    %p71 = scmp.eq.s32.totalorder %s23, 1
    %p72 = por %p70, %p71
    %p74 = scmp.ne.s32.totalorder %s57, %s73
    %p75 = scmp.eq.s32.totalorder %s23, 0
    %p76 = por %p74, %p75
    %s77 = ssub.s32 %s17, %s24
    %p78 = scmp.eq.s32.totalorder %s77, 0
    %s80 = sadd.s32 %s79, 1
    %s81 = scalar_select %p78, %s79, %s80
    %p84 = pneg %p78
    %p85 = scmp.eq.s32.totalorder %s17, 1
    %p86 = por %p84, %p85
    %p87 = scmp.ne.s32.totalorder %s79, %s82
    %p88 = scmp.eq.s32.totalorder %s17, 0
    %p89 = por %p87, %p88
    %p90 = scmp.ne.s32.totalorder %s79, %s82
    %p91 = scmp.eq.s32.totalorder %s22, 1
    %p92 = por %p90, %p91
    %p93 = scmp.ne.s32.totalorder %s82, %s83
    %p94 = scmp.eq.s32.totalorder %s22, 0
    %p95 = por %p93, %p94
    %p96 = scmp.ne.s32.totalorder %s82, %s83
    %p97 = scmp.eq.s32.totalorder %s23, 1
    %p98 = por %p96, %p97
    %p100 = scmp.ne.s32.totalorder %s83, %s99
    %p101 = scmp.eq.s32.totalorder %s23, 0
    %p102 = por %p100, %p101
    %s104 = sadd.s32 %s103, 1
    %p107 = scmp.eq.s32.totalorder %s17, 1
    %p108 = scmp.ne.s32.totalorder %s103, %s105
    %p109 = scmp.eq.s32.totalorder %s17, 0
    %p110 = por %p108, %p109
    %p111 = scmp.ne.s32.totalorder %s103, %s105
    %p112 = scmp.eq.s32.totalorder %s22, 1
    %p113 = por %p111, %p112
    %p114 = scmp.ne.s32.totalorder %s105, %s106
    %p115 = scmp.eq.s32.totalorder %s22, 0
    %p116 = por %p114, %p115
    %p117 = scmp.ne.s32.totalorder %s105, %s106
    %p118 = scmp.eq.s32.totalorder %s23, 1
    %p119 = por %p117, %p118
    %p121 = scmp.ne.s32.totalorder %s106, %s120
    %p122 = scmp.eq.s32.totalorder %s23, 0
    %p123 = por %p121, %p122
    %s125 = sadd.s32 %s124, 1
    %p128 = scmp.eq.s32.totalorder %s17, 1
    %p129 = scmp.ne.s32.totalorder %s124, %s126
    %p130 = scmp.eq.s32.totalorder %s17, 0
    %p131 = por %p129, %p130
    %p132 = scmp.ne.s32.totalorder %s124, %s126
    %p133 = scmp.eq.s32.totalorder %s22, 1
    %p134 = por %p132, %p133
    %p135 = scmp.ne.s32.totalorder %s126, %s127
    %p136 = scmp.eq.s32.totalorder %s22, 0
    %p137 = por %p135, %p136
    %p138 = scmp.ne.s32.totalorder %s126, %s127
    %p139 = scmp.eq.s32.totalorder %s23, 1
    %p140 = por %p138, %p139
    %p142 = scmp.ne.s32.totalorder %s127, %s141
    %p143 = scmp.eq.s32.totalorder %s23, 0
    %p144 = por %p142, %p143
    %s146 = sadd.s32 %s145, 1
    %p149 = scmp.eq.s32.totalorder %s17, 1
    %p150 = scmp.ne.s32.totalorder %s145, %s147
    %p151 = scmp.eq.s32.totalorder %s17, 0
    %p152 = por %p150, %p151
    %p153 = scmp.ne.s32.totalorder %s145, %s147
    %p154 = scmp.eq.s32.totalorder %s22, 1
    %p155 = por %p153, %p154
    %p156 = scmp.ne.s32.totalorder %s147, %s148
    %p157 = scmp.eq.s32.totalorder %s22, 0
    %p158 = por %p156, %p157
    %p159 = scmp.ne.s32.totalorder %s147, %s148
    %p160 = scmp.eq.s32.totalorder %s23, 1
    %p161 = por %p159, %p160
    %p163 = scmp.ne.s32.totalorder %s148, %s162
    %p164 = scmp.eq.s32.totalorder %s23, 0
    %p165 = por %p163, %p164
    %s167 = sadd.s32 %s166, 1
    %p170 = scmp.eq.s32.totalorder %s17, 1
    %p171 = scmp.ne.s32.totalorder %s166, %s168
    %p172 = scmp.eq.s32.totalorder %s17, 0
    %p173 = por %p171, %p172
    %p174 = scmp.ne.s32.totalorder %s166, %s168
    %p175 = scmp.eq.s32.totalorder %s22, 1
    %p176 = por %p174, %p175
    %p177 = scmp.ne.s32.totalorder %s168, %s169
    %p178 = scmp.eq.s32.totalorder %s22, 0
    %p179 = por %p177, %p178
    %p180 = scmp.ne.s32.totalorder %s168, %s169
    %p181 = scmp.eq.s32.totalorder %s23, 1
    %p182 = por %p180, %p181
    %p184 = scmp.ne.s32.totalorder %s169, %s183
    %p185 = scmp.eq.s32.totalorder %s23, 0
    %p186 = por %p184, %p185
    %s188 = sadd.s32 %s187, 1
    %p191 = scmp.eq.s32.totalorder %s17, 1
    %p192 = scmp.ne.s32.totalorder %s187, %s189
    %p193 = scmp.eq.s32.totalorder %s17, 0
    %p194 = por %p192, %p193
    %p195 = scmp.ne.s32.totalorder %s187, %s189
    %p196 = scmp.eq.s32.totalorder %s22, 1
    %p197 = por %p195, %p196
    %p198 = scmp.ne.s32.totalorder %s189, %s190
    %p199 = scmp.eq.s32.totalorder %s22, 0
    %p200 = por %p198, %p199
    %p201 = scmp.ne.s32.totalorder %s189, %s190
    %p202 = scmp.eq.s32.totalorder %s23, 1
    %p203 = por %p201, %p202
    %p205 = scmp.ne.s32.totalorder %s190, %s204
    %p206 = scmp.eq.s32.totalorder %s23, 0
    %p207 = por %p205, %p206
    %s209 = sadd.s32 %s208, 1
    %p212 = scmp.eq.s32.totalorder %s17, 1
    %p213 = scmp.ne.s32.totalorder %s208, %s210
    %p214 = scmp.eq.s32.totalorder %s17, 0
    %p215 = por %p213, %p214
    %p216 = scmp.ne.s32.totalorder %s208, %s210
    %p217 = scmp.eq.s32.totalorder %s22, 1
    %p218 = por %p216, %p217
    %p219 = scmp.ne.s32.totalorder %s210, %s211
    %p220 = scmp.eq.s32.totalorder %s22, 0
    %p221 = por %p219, %p220
    %p222 = scmp.ne.s32.totalorder %s210, %s211
    %p223 = scmp.eq.s32.totalorder %s23, 1
    %p224 = por %p222, %p223
    %p226 = scmp.ne.s32.totalorder %s211, %s225
    %p227 = scmp.eq.s32.totalorder %s23, 0
    %p228 = por %p226, %p227
    %s229 = ssub.s32 %s17, %s24
    %p230 = scmp.eq.s32.totalorder %s229, 0
    %s232 = sadd.s32 %s231, 1
    %s233 = scalar_select %p230, %s231, %s232
    %p236 = pneg %p230
    %p237 = scmp.eq.s32.totalorder %s17, 1
    %p238 = por %p236, %p237
    %p239 = scmp.ne.s32.totalorder %s231, %s234
    %p240 = scmp.eq.s32.totalorder %s17, 0
    %p241 = por %p239, %p240
    %p242 = scmp.ne.s32.totalorder %s231, %s234
    %p243 = scmp.eq.s32.totalorder %s22, 1
    %p244 = por %p242, %p243
    %p245 = scmp.ne.s32.totalorder %s234, %s235
    %p246 = scmp.eq.s32.totalorder %s22, 0
    %p247 = por %p245, %p246
    %p248 = scmp.ne.s32.totalorder %s234, %s235
    %p249 = scmp.eq.s32.totalorder %s23, 1
    %p250 = por %p248, %p249
    %p252 = scmp.ne.s32.totalorder %s235, %s251
    %p253 = scmp.eq.s32.totalorder %s23, 0
    %p254 = por %p252, %p253
    %p255 = scmp.le.s32.totalorder 1, %s17
    %p256 = scmp.lt.s32.totalorder %s17, 3
    %p257 = pnand %p255, %p256
    %p258 = pneg %p257
    // Predicated region
    $region9: #{graphrec_forward.7} parent=5 // pred_check
      _
    $region10: #{graphrec_forward.7} parent=5 // pred_check_branch
      %260 = sbr.rel (%p257) target = $region12
    $region11: #{graphrec_forward.7} parent=5 // pred_region
      %s261 = ssub.s32 %s17, 1
      // Predicated region
      $region13: #{graphrec_forward.7} parent=11 // pred_check
        %p262 = pneg %p116
      $region14: #{graphrec_forward.7} parent=11 // pred_check_branch
        %264 = sbr.rel (%p262) target = $region16
      $region15: #{graphrec_forward.7} parent=11 // pred_region
        _
      $region16: #{graphrec_forward.7} parent=11 // pred_fallthru
        _
      // Predicated region
      $region17: #{graphrec_forward.7} parent=11 // pred_check
        %p265 = pneg %p137
      $region18: #{graphrec_forward.7} parent=11 // pred_check_branch
        %267 = sbr.rel (%p265) target = $region20
      $region19: #{graphrec_forward.7} parent=11 // pred_region
        _
      $region20: #{graphrec_forward.7} parent=11 // pred_fallthru
        _
      // Predicated region
      $region21: #{graphrec_forward.7} parent=11 // pred_check
        %p268 = pneg %p158
      $region22: #{graphrec_forward.7} parent=11 // pred_check_branch
        %270 = sbr.rel (%p268) target = $region24
      $region23: #{graphrec_forward.7} parent=11 // pred_region
        _
      $region24: #{graphrec_forward.7} parent=11 // pred_fallthru
        _
      // Predicated region
      $region25: #{graphrec_forward.7} parent=11 // pred_check
        %p271 = pneg %p179
      $region26: #{graphrec_forward.7} parent=11 // pred_check_branch
        %273 = sbr.rel (%p271) target = $region28
      $region27: #{graphrec_forward.7} parent=11 // pred_region
        _
      $region28: #{graphrec_forward.7} parent=11 // pred_fallthru
        _
      // Predicated region
      $region29: #{graphrec_forward.7} parent=11 // pred_check
        %p274 = pneg %p200
      $region30: #{graphrec_forward.7} parent=11 // pred_check_branch
        %276 = sbr.rel (%p274) target = $region32
      $region31: #{graphrec_forward.7} parent=11 // pred_region
        _
      $region32: #{graphrec_forward.7} parent=11 // pred_fallthru
        _
      // Predicated region
      $region33: #{graphrec_forward.7} parent=11 // pred_check
        %p277 = pneg %p221
      $region34: #{graphrec_forward.7} parent=11 // pred_check_branch
        %279 = sbr.rel (%p277) target = $region36
      $region35: #{graphrec_forward.7} parent=11 // pred_region
        _
      $region36: #{graphrec_forward.7} parent=11 // pred_fallthru
        _
    $region12: #{graphrec_forward.7} parent=5 // pred_fallthru
      _
    %p280 = scmp.lt.s32.totalorder %s17, 2
    // Predicated region
    $region37: #{graphrec_forward.7} parent=5 // pred_check
      %p281 = pneg %p280
    $region38: #{graphrec_forward.7} parent=5 // pred_check_branch
      %283 = sbr.rel (%p281) target = $region40
    $region39: #{graphrec_forward.7} parent=5 // pred_region
      // Predicated region
      $region41: #{graphrec_forward.7} parent=39 // pred_check
        %p284 = pneg %p37
      $region42: #{graphrec_forward.7} parent=39 // pred_check_branch
        %286 = sbr.rel (%p284) target = $region44
      $region43: #{graphrec_forward.7} parent=39 // pred_region
        %s287 = smul.u32 32, %s17
        %p288 = scmp.lt.s32.totalorder %s287, 63
        %s289 = scalar_select %p288, %s287, 63
        %s290 = smul.addr %s289, 4
        %s291 = scalar_lea.vmem %s0, %s290
        %s292 = smul.u32 32, %s17
      $region44: #{graphrec_forward.7} parent=39 // pred_fallthru
        _
      // Predicated region
      $region45: #{graphrec_forward.7} parent=39 // pred_check
        %p293 = pneg %p63
      $region46: #{graphrec_forward.7} parent=39 // pred_check_branch
        %295 = sbr.rel (%p293) target = $region48
      $region47: #{graphrec_forward.7} parent=39 // pred_region
        %s296 = smul.u32 32, %s17
        %p297 = scmp.lt.s32.totalorder %s296, 63
        %s298 = scalar_select %p297, %s296, 63
        %s299 = smul.addr %s298, 4
        %s300 = scalar_lea.vmem %s1, %s299
        %s301 = smul.u32 32, %s17
      $region48: #{graphrec_forward.7} parent=39 // pred_fallthru
        _
      // Predicated region
      $region49: #{graphrec_forward.7} parent=39 // pred_check
        %p302 = pneg %p89
      $region50: #{graphrec_forward.7} parent=39 // pred_check_branch
        %304 = sbr.rel (%p302) target = $region52
      $region51: #{graphrec_forward.7} parent=39 // pred_region
        %s305 = smul.u32 4, %s17
        %p306 = scmp.lt.s32.totalorder %s305, 7
        %s307 = scalar_select %p306, %s305, 7
        %s308 = smul.addr %s307, 8
        %s309 = scalar_lea.vmem %s2, %s308
        %s310 = smul.u32 4, %s17
      $region52: #{graphrec_forward.7} parent=39 // pred_fallthru
        _
    $region40: #{graphrec_forward.7} parent=5 // pred_fallthru
      _
    %p311 = scmp.le.s32.totalorder 1, %s17
    %p312 = scmp.lt.s32.totalorder %s17, 3
    %p313 = pnand %p311, %p312
    %p314 = pneg %p313
    // Predicated region
    $region53: #{graphrec_forward.7} parent=5 // pred_check
      _
    $region54: #{graphrec_forward.7} parent=5 // pred_check_branch
      %316 = sbr.rel (%p313) target = $region56
    $region55: #{graphrec_forward.7} parent=5 // pred_region
      %s317 = ssub.s32 %s17, 1
      %s318 = smul.u32 32, %s22
      %p319 = scmp.lt.s32.totalorder %s318, 63
      %s320 = scalar_select %p319, %s318, 63
      %s321 = smul.addr %s320, 4
      %s322 = scalar_lea.vmem %s0, %s321
      %p323 = pneg %p43
      %p324 = pneg %p40
      %s325 = smul.u32 32, %s22
      %p326 = scmp.lt.s32.totalorder %s325, 63
      %s327 = scalar_select %p326, %s325, 63
      %s328 = smul.addr %s327, 4
      %s329 = scalar_lea.vmem %s1, %s328
      %p330 = pneg %p69
      %p331 = pneg %p66
      %s332 = smul.u32 4, %s22
      %p333 = scmp.lt.s32.totalorder %s332, 7
      %s334 = scalar_select %p333, %s332, 7
      %s335 = smul.addr %s334, 8
      %s336 = scalar_lea.vmem %s2, %s335
      %p337 = pneg %p95
      %p338 = pneg %p92
      %p339 = pneg %p116
      %p340 = pneg %p113
      %p341 = pneg %p137
      %p342 = pneg %p134
      %p343 = pneg %p158
      %p344 = pneg %p155
      %p345 = pneg %p179
      %p346 = pneg %p176
      %p347 = pneg %p200
      %p348 = pneg %p197
      %p349 = pneg %p221
      %p350 = pneg %p218
      %p351 = pneg %p247
      %p352 = pneg %p244
      %s353 = smul.u32 4, %s22
      %p354 = scmp.lt.s32.totalorder %s353, 7
      %s355 = scalar_select %p354, %s353, 7
      %s356 = smul.addr %s355, 4
      %s357 = scalar_lea.vmem %s9, %s356
      %s358 = smul.u32 32, %s22
      %p359 = scmp.lt.s32.totalorder %s358, 63
      %s360 = scalar_select %p359, %s358, 63
      %s361 = smul.addr %s360, 4
      %s362 = scalar_lea.vmem %s0, %s361
      %s363 = smul.u32 32, %s22
      %s364 = smul.u32 32, %s22
      %p365 = scmp.lt.s32.totalorder %s364, 63
      %s366 = scalar_select %p365, %s364, 63
      %s367 = smul.addr %s366, 4
      %s368 = scalar_lea.vmem %s1, %s367
      %s369 = smul.u32 32, %s22
      %s370 = smul.u32 4, %s22
      %p371 = scmp.lt.s32.totalorder %s370, 7
      %s372 = scalar_select %p371, %s370, 7
      %s373 = smul.addr %s372, 8
      %s374 = scalar_lea.vmem %s2, %s373
      %s375 = smul.u32 4, %s22
      %s376 = smul.u32 4, %s22
      %p377 = scmp.lt.s32.totalorder %s376, 7
      %s378 = scalar_select %p377, %s376, 7
      %s379 = smul.addr %s378, 4
      %s380 = scalar_lea.vmem %s9, %s379
      %s381 = smul.u32 4, %s22
      %v383 = vld [vmem:[%s362] sm:$0xf]
      %v384 = vld [vmem:[%s362 + $0x4] sm:$0xf]
      %v385 = vld [vmem:[%s362 + $0x8] sm:$0xf]
      %v386 = vld [vmem:[%s362 + $0xc] sm:$0xf]
      %v387 = vld [vmem:[%s362 + $0x10] sm:$0xf]
      %v388 = vld [vmem:[%s362 + $0x14] sm:$0xf]
      %v389 = vld [vmem:[%s362 + $0x18] sm:$0xf]
      %v390 = vld [vmem:[%s362 + $0x1c] sm:$0xf]
      %v391 = vld [vmem:[%s362 + $0x20] sm:$0xf]
      %v392 = vld [vmem:[%s362 + $0x24] sm:$0xf]
      %v393 = vld [vmem:[%s362 + $0x28] sm:$0xf]
      %v394 = vld [vmem:[%s362 + $0x2c] sm:$0xf]
      %v395 = vld [vmem:[%s362 + $0x30] sm:$0xf]
      %v396 = vld [vmem:[%s362 + $0x34] sm:$0xf]
      %v397 = vld [vmem:[%s362 + $0x38] sm:$0xf]
      %v398 = vld [vmem:[%s362 + $0x3c] sm:$0xf]
      %v399 = vld [vmem:[%s362 + $0x40] sm:$0xf]
      %v400 = vld [vmem:[%s362 + $0x44] sm:$0xf]
      %v401 = vld [vmem:[%s362 + $0x48] sm:$0xf]
      %v402 = vld [vmem:[%s362 + $0x4c] sm:$0xf]
      %v403 = vld [vmem:[%s362 + $0x50] sm:$0xf]
      %v404 = vld [vmem:[%s362 + $0x54] sm:$0xf]
      %v405 = vld [vmem:[%s362 + $0x58] sm:$0xf]
      %v406 = vld [vmem:[%s362 + $0x5c] sm:$0xf]
      %v407 = vld [vmem:[%s362 + $0x60] sm:$0xf]
      %v408 = vld [vmem:[%s362 + $0x64] sm:$0xf]
      %v409 = vld [vmem:[%s362 + $0x68] sm:$0xf]
      %v410 = vld [vmem:[%s362 + $0x6c] sm:$0xf]
      %v411 = vld [vmem:[%s362 + $0x70] sm:$0xf]
      %v412 = vld [vmem:[%s362 + $0x74] sm:$0xf]
      %v413 = vld [vmem:[%s362 + $0x78] sm:$0xf]
      %v414 = vld [vmem:[%s362 + $0x7c] sm:$0xf]
      %v415 = vunpack.c.l.bf16 %v383
      %v416 = vunpack.c.l.bf16 %v384
      %v417 = vunpack.c.l.bf16 %v385
      %v418 = vunpack.c.l.bf16 %v386
      %v419 = vunpack.c.l.bf16 %v387
      %v420 = vunpack.c.l.bf16 %v388
      %v421 = vunpack.c.l.bf16 %v389
      %v422 = vunpack.c.l.bf16 %v390
      %v423 = vunpack.c.l.bf16 %v391
      %v424 = vunpack.c.l.bf16 %v392
      %v425 = vunpack.c.l.bf16 %v393
      %v426 = vunpack.c.l.bf16 %v394
      %v427 = vunpack.c.l.bf16 %v395
      %v428 = vunpack.c.l.bf16 %v396
      %v429 = vunpack.c.l.bf16 %v397
      %v430 = vunpack.c.l.bf16 %v398
      %v431 = vunpack.c.l.bf16 %v399
      %v432 = vunpack.c.l.bf16 %v400
      %v433 = vunpack.c.l.bf16 %v401
      %v434 = vunpack.c.l.bf16 %v402
      %v435 = vunpack.c.l.bf16 %v403
      %v436 = vunpack.c.l.bf16 %v404
      %v437 = vunpack.c.l.bf16 %v405
      %v438 = vunpack.c.l.bf16 %v406
      %v439 = vunpack.c.l.bf16 %v407
      %v440 = vunpack.c.l.bf16 %v408
      %v441 = vunpack.c.l.bf16 %v409
      %v442 = vunpack.c.l.bf16 %v410
      %v443 = vunpack.c.l.bf16 %v411
      %v444 = vunpack.c.l.bf16 %v412
      %v445 = vunpack.c.l.bf16 %v413
      %v446 = vunpack.c.l.bf16 %v414
      %v447 = vld [vmem:[%s368] sm:$0xf]
      %v448 = vld [vmem:[%s368 + $0x4] sm:$0xf]
      %v449 = vld [vmem:[%s368 + $0x8] sm:$0xf]
      %v450 = vld [vmem:[%s368 + $0xc] sm:$0xf]
      %v451 = vld [vmem:[%s368 + $0x10] sm:$0xf]
      %v452 = vld [vmem:[%s368 + $0x14] sm:$0xf]
      %v453 = vld [vmem:[%s368 + $0x18] sm:$0xf]
      %v454 = vld [vmem:[%s368 + $0x1c] sm:$0xf]
      %v455 = vld [vmem:[%s368 + $0x20] sm:$0xf]
      %v456 = vld [vmem:[%s368 + $0x24] sm:$0xf]
      %v457 = vld [vmem:[%s368 + $0x28] sm:$0xf]
      %v458 = vld [vmem:[%s368 + $0x2c] sm:$0xf]
      %v459 = vld [vmem:[%s368 + $0x30] sm:$0xf]
      %v460 = vld [vmem:[%s368 + $0x34] sm:$0xf]
      %v461 = vld [vmem:[%s368 + $0x38] sm:$0xf]
      %v462 = vld [vmem:[%s368 + $0x3c] sm:$0xf]
      %v463 = vld [vmem:[%s368 + $0x40] sm:$0xf]
      %v464 = vld [vmem:[%s368 + $0x44] sm:$0xf]
      %v465 = vld [vmem:[%s368 + $0x48] sm:$0xf]
      %v466 = vld [vmem:[%s368 + $0x4c] sm:$0xf]
      %v467 = vld [vmem:[%s368 + $0x50] sm:$0xf]
      %v468 = vld [vmem:[%s368 + $0x54] sm:$0xf]
      %v469 = vld [vmem:[%s368 + $0x58] sm:$0xf]
      %v470 = vld [vmem:[%s368 + $0x5c] sm:$0xf]
      %v471 = vld [vmem:[%s368 + $0x60] sm:$0xf]
      %v472 = vld [vmem:[%s368 + $0x64] sm:$0xf]
      %v473 = vld [vmem:[%s368 + $0x68] sm:$0xf]
      %v474 = vld [vmem:[%s368 + $0x6c] sm:$0xf]
      %v475 = vld [vmem:[%s368 + $0x70] sm:$0xf]
      %v476 = vld [vmem:[%s368 + $0x74] sm:$0xf]
      %v477 = vld [vmem:[%s368 + $0x78] sm:$0xf]
      %v478 = vld [vmem:[%s368 + $0x7c] sm:$0xf]
      %v479 = vunpack.c.l.bf16 %v447
      %v480 = vunpack.c.l.bf16 %v448
      %v481 = vunpack.c.l.bf16 %v449
      %v482 = vunpack.c.l.bf16 %v450
      %v483 = vunpack.c.l.bf16 %v451
      %v484 = vunpack.c.l.bf16 %v452
      %v485 = vunpack.c.l.bf16 %v453
      %v486 = vunpack.c.l.bf16 %v454
      %v487 = vunpack.c.l.bf16 %v455
      %v488 = vunpack.c.l.bf16 %v456
      %v489 = vunpack.c.l.bf16 %v457
      %v490 = vunpack.c.l.bf16 %v458
      %v491 = vunpack.c.l.bf16 %v459
      %v492 = vunpack.c.l.bf16 %v460
      %v493 = vunpack.c.l.bf16 %v461
      %v494 = vunpack.c.l.bf16 %v462
      %v495 = vunpack.c.l.bf16 %v463
      %v496 = vunpack.c.l.bf16 %v464
      %v497 = vunpack.c.l.bf16 %v465
      %v498 = vunpack.c.l.bf16 %v466
      %v499 = vunpack.c.l.bf16 %v467
      %v500 = vunpack.c.l.bf16 %v468
      %v501 = vunpack.c.l.bf16 %v469
      %v502 = vunpack.c.l.bf16 %v470
      %v503 = vunpack.c.l.bf16 %v471
      %v504 = vunpack.c.l.bf16 %v472
      %v505 = vunpack.c.l.bf16 %v473
      %v506 = vunpack.c.l.bf16 %v474
      %v507 = vunpack.c.l.bf16 %v475
      %v508 = vunpack.c.l.bf16 %v476
      %v509 = vunpack.c.l.bf16 %v477
      %v510 = vunpack.c.l.bf16 %v478
      %543 = vrot.lane.b32.xlu0 %v479, 32
      %v544 = vpop.permute.xlu0 %543
      %545 = vrot.lane.b32.xlu0 %v480, 32
      %v546 = vpop.permute.xlu0 %545
      %547 = vrot.lane.b32.xlu0 %v481, 32
      %v548 = vpop.permute.xlu0 %547
      %549 = vrot.lane.b32.xlu0 %v482, 32
      %v550 = vpop.permute.xlu0 %549
      %551 = vrot.lane.b32.xlu0 %v483, 32
      %v552 = vpop.permute.xlu0 %551
      %553 = vrot.lane.b32.xlu0 %v484, 32
      %v554 = vpop.permute.xlu0 %553
      %555 = vrot.lane.b32.xlu0 %v485, 32
      %v556 = vpop.permute.xlu0 %555
      %557 = vrot.lane.b32.xlu0 %v486, 32
      %v558 = vpop.permute.xlu0 %557
      %559 = vrot.lane.b32.xlu0 %v487, 32
      %v560 = vpop.permute.xlu0 %559
      %561 = vrot.lane.b32.xlu0 %v488, 32
      %v562 = vpop.permute.xlu0 %561
      %563 = vrot.lane.b32.xlu0 %v489, 32
      %v564 = vpop.permute.xlu0 %563
      %565 = vrot.lane.b32.xlu0 %v490, 32
      %v566 = vpop.permute.xlu0 %565
      %567 = vrot.lane.b32.xlu0 %v491, 32
      %v568 = vpop.permute.xlu0 %567
      %569 = vrot.lane.b32.xlu0 %v492, 32
      %v570 = vpop.permute.xlu0 %569
      %571 = vrot.lane.b32.xlu0 %v493, 32
      %v572 = vpop.permute.xlu0 %571
      %573 = vrot.lane.b32.xlu0 %v494, 32
      %v574 = vpop.permute.xlu0 %573
      %575 = vrot.lane.b32.xlu0 %v495, 32
      %v576 = vpop.permute.xlu0 %575
      %577 = vrot.lane.b32.xlu0 %v496, 32
      %v578 = vpop.permute.xlu0 %577
      %579 = vrot.lane.b32.xlu0 %v497, 32
      %v580 = vpop.permute.xlu0 %579
      %581 = vrot.lane.b32.xlu0 %v498, 32
      %v582 = vpop.permute.xlu0 %581
      %583 = vrot.lane.b32.xlu0 %v499, 32
      %v584 = vpop.permute.xlu0 %583
      %585 = vrot.lane.b32.xlu0 %v500, 32
      %v586 = vpop.permute.xlu0 %585
      %587 = vrot.lane.b32.xlu0 %v501, 32
      %v588 = vpop.permute.xlu0 %587
      %589 = vrot.lane.b32.xlu0 %v502, 32
      %v590 = vpop.permute.xlu0 %589
      %591 = vrot.lane.b32.xlu0 %v503, 32
      %v592 = vpop.permute.xlu0 %591
      %593 = vrot.lane.b32.xlu0 %v504, 32
      %v594 = vpop.permute.xlu0 %593
      %595 = vrot.lane.b32.xlu0 %v505, 32
      %v596 = vpop.permute.xlu0 %595
      %597 = vrot.lane.b32.xlu0 %v506, 32
      %v598 = vpop.permute.xlu0 %597
      %599 = vrot.lane.b32.xlu0 %v507, 32
      %v600 = vpop.permute.xlu0 %599
      %601 = vrot.lane.b32.xlu0 %v508, 32
      %v602 = vpop.permute.xlu0 %601
      %603 = vrot.lane.b32.xlu0 %v509, 32
      %v604 = vpop.permute.xlu0 %603
      %605 = vrot.lane.b32.xlu0 %v510, 32
      %v606 = vpop.permute.xlu0 %605
      %vm639 = vcmask 261120
      %v640 = vsel %vm639, %v415, %v544
      %v641 = vsel %vm639, %v416, %v546
      %v642 = vsel %vm639, %v417, %v548
      %v643 = vsel %vm639, %v418, %v550
      %v644 = vsel %vm639, %v419, %v552
      %v645 = vsel %vm639, %v420, %v554
      %v646 = vsel %vm639, %v421, %v556
      %v647 = vsel %vm639, %v422, %v558
      %v648 = vsel %vm639, %v423, %v560
      %v649 = vsel %vm639, %v424, %v562
      %v650 = vsel %vm639, %v425, %v564
      %v651 = vsel %vm639, %v426, %v566
      %v652 = vsel %vm639, %v427, %v568
      %v653 = vsel %vm639, %v428, %v570
      %v654 = vsel %vm639, %v429, %v572
      %v655 = vsel %vm639, %v430, %v574
      %v656 = vsel %vm639, %v431, %v576
      %v657 = vsel %vm639, %v432, %v578
      %v658 = vsel %vm639, %v433, %v580
      %v659 = vsel %vm639, %v434, %v582
      %v660 = vsel %vm639, %v435, %v584
      %v661 = vsel %vm639, %v436, %v586
      %v662 = vsel %vm639, %v437, %v588
      %v663 = vsel %vm639, %v438, %v590
      %v664 = vsel %vm639, %v439, %v592
      %v665 = vsel %vm639, %v440, %v594
      %v666 = vsel %vm639, %v441, %v596
      %v667 = vsel %vm639, %v442, %v598
      %v668 = vsel %vm639, %v443, %v600
      %v669 = vsel %vm639, %v444, %v602
      %v670 = vsel %vm639, %v445, %v604
      %v671 = vsel %vm639, %v446, %v606
      %v672 = vpack.c.bf16 %v641, %v640
      %v673 = vpack.c.bf16 %v643, %v642
      %v674 = vpack.c.bf16 %v645, %v644
      %v675 = vpack.c.bf16 %v647, %v646
      %v676 = vpack.c.bf16 %v649, %v648
      %v677 = vpack.c.bf16 %v651, %v650
      %v678 = vpack.c.bf16 %v653, %v652
      %v679 = vpack.c.bf16 %v655, %v654
      %v680 = vpack.c.bf16 %v657, %v656
      %v681 = vpack.c.bf16 %v659, %v658
      %v682 = vpack.c.bf16 %v661, %v660
      %v683 = vpack.c.bf16 %v663, %v662
      %v684 = vpack.c.bf16 %v665, %v664
      %v685 = vpack.c.bf16 %v667, %v666
      %v686 = vpack.c.bf16 %v669, %v668
      %v687 = vpack.c.bf16 %v671, %v670
      %v688 = vld [vmem:[%s3] sm:$0xf]
      %v689 = vld [vmem:[%s3 + $0x4] sm:$0xf]
      %v690 = vld [vmem:[%s3 + $0x8] sm:$0xf]
      %v691 = vld [vmem:[%s3 + $0xc] sm:$0xf]
      %v692 = vld [vmem:[%s3 + $0x10] sm:$0xf]
      %v693 = vld [vmem:[%s3 + $0x14] sm:$0xf]
      %v694 = vld [vmem:[%s3 + $0x18] sm:$0xf]
      %v695 = vld [vmem:[%s3 + $0x1c] sm:$0xf]
      %v696 = vld [vmem:[%s4] sm:$0x1]
      %v698 = vlaneseq
      %v699 = vshrl.u32 %v698, 7
      %v700 = vsub.s32 0, %v699
      %v701 = vrot.slane %v696, %v700
      %v711 = vunpack.c.l.b16 %v688
      %v712 = vunpack.c.l.b16 %v689
      %v713 = vunpack.c.l.b16 %v690
      %v714 = vunpack.c.l.b16 %v691
      %v715 = vunpack.c.l.b16 %v692
      %v716 = vunpack.c.l.b16 %v693
      %v717 = vunpack.c.l.b16 %v694
      %v718 = vunpack.c.l.b16 %v695
      %v719 = vpack.c.b16 %v712, %v711
      %v720 = vpack.c.b16 %v714, %v713
      %v721 = vpack.c.b16 %v716, %v715
      %v722 = vpack.c.b16 %v718, %v717
      %vm727 = vcmask 523264
      %v729 = vsel %vm727, %v672, 0
      %v732 = vsel %vm727, %v673, 0
      %v735 = vsel %vm727, %v674, 0
      %v738 = vsel %vm727, %v675, 0
      %v741 = vsel %vm727, %v676, 0
      %v744 = vsel %vm727, %v677, 0
      %v747 = vsel %vm727, %v678, 0
      %v750 = vsel %vm727, %v679, 0
      %v753 = vsel %vm727, %v680, 0
      %v756 = vsel %vm727, %v681, 0
      %v759 = vsel %vm727, %v682, 0
      %v762 = vsel %vm727, %v683, 0
      %v765 = vsel %vm727, %v684, 0
      %v768 = vsel %vm727, %v685, 0
      %v771 = vsel %vm727, %v686, 0
      %v774 = vsel %vm727, %v687, 0
      %776 = vmatprep.subr.bf16.mxu0 0
      %777 = vmatpush1.bf16.msra.mxu0 0
      %778 = vmatprep.subr.bf16.mxu0 0
      %779 = vmatpush1.bf16.msra.mxu0 0
      %780 = vmatprep.subr.bf16.mxu0 0
      %781 = vmatpush1.bf16.msra.mxu0 0
      %782 = vmatprep.subr.bf16.mxu0 0
      %783 = vmatpush1.bf16.msra.mxu0 0
      %784 = vmatprep.subr.bf16.mxu0 0
      %785 = vmatpush1.bf16.msra.mxu0 %v722
      %786 = vmatprep.subr.bf16.mxu0 0
      %787 = vmatpush1.bf16.msra.mxu0 %v721
      %788 = vmatprep.subr.bf16.mxu0 0
      %789 = vmatpush1.bf16.msra.mxu0 %v720
      %790 = vmatprep.subr.bf16.mxu0 0
      %791 = vmatpush1.bf16.msra.mxu0 %v719
      %792 = vmatprep.subr.bf16.mxu0 0
      %793 = vmatpush2.bf16.msra.mxu0 0
      %794 = vmatprep.subr.bf16.mxu0 0
      %795 = vmatpush2.bf16.msra.mxu0 0
      %796 = vmatprep.subr.bf16.mxu0 0
      %797 = vmatpush2.bf16.msra.mxu0 0
      %798 = vmatprep.subr.bf16.mxu0 0
      %799 = vmatpush2.bf16.msra.mxu0 0
      %800 = vmatprep.subr.bf16.mxu0 0
      %801 = vmatpush2.bf16.msra.mxu0 0
      %802 = vmatprep.subr.bf16.mxu0 0
      %803 = vmatpush2.bf16.msra.mxu0 0
      %804 = vmatprep.subr.bf16.mxu0 0
      %805 = vmatpush2.bf16.msra.mxu0 0
      %806 = vmatprep.subr.bf16.mxu0 0
      %807 = vmatpush2.bf16.msra.mxu0 0
      %808 = vmatprep.mubr.bf16.mxu0 0
      %809 = vmatmul.mubr.bf16.gmra.mxu0 %v729
      %v810 = vpop.f32.mrf.mxu0
      %v811 = vadd.f32 %v701, %v810
      %v812 = vpop.f32.mrf.mxu0
      %v813 = vpop.f32.mrf.mxu0
      %v814 = vadd.f32 %v701, %v813
      %v815 = vpop.f32.mrf.mxu0
      %816 = vmatprep.mubr.bf16.mxu0 0
      %817 = vmatmul.mubr.bf16.gmra.mxu0 %v732
      %v818 = vpop.f32.mrf.mxu0
      %v819 = vadd.f32 %v701, %v818
      %v820 = vpop.f32.mrf.mxu0
      %v821 = vpop.f32.mrf.mxu0
      %v822 = vadd.f32 %v701, %v821
      %v823 = vpop.f32.mrf.mxu0
      %824 = vmatprep.mubr.bf16.mxu0 0
      %825 = vmatmul.mubr.bf16.gmra.mxu0 %v735
      %v826 = vpop.f32.mrf.mxu0
      %v827 = vadd.f32 %v701, %v826
      %v828 = vpop.f32.mrf.mxu0
      %v829 = vpop.f32.mrf.mxu0
      %v830 = vadd.f32 %v701, %v829
      %v831 = vpop.f32.mrf.mxu0
      %832 = vmatprep.mubr.bf16.mxu0 0
      %833 = vmatmul.mubr.bf16.gmra.mxu0 %v738
      %v834 = vpop.f32.mrf.mxu0
      %v835 = vadd.f32 %v701, %v834
      %v836 = vpop.f32.mrf.mxu0
      %v837 = vpop.f32.mrf.mxu0
      %v838 = vadd.f32 %v701, %v837
      %v839 = vpop.f32.mrf.mxu0
      %840 = vmatprep.mubr.bf16.mxu0 0
      %841 = vmatmul.mubr.bf16.gmra.mxu0 %v741
      %v842 = vpop.f32.mrf.mxu0
      %v843 = vadd.f32 %v701, %v842
      %v844 = vpop.f32.mrf.mxu0
      %v845 = vpop.f32.mrf.mxu0
      %v846 = vadd.f32 %v701, %v845
      %v847 = vpop.f32.mrf.mxu0
      %848 = vmatprep.mubr.bf16.mxu0 0
      %849 = vmatmul.mubr.bf16.gmra.mxu0 %v744
      %v850 = vpop.f32.mrf.mxu0
      %v851 = vadd.f32 %v701, %v850
      %v852 = vpop.f32.mrf.mxu0
      %v853 = vpop.f32.mrf.mxu0
      %v854 = vadd.f32 %v701, %v853
      %v855 = vpop.f32.mrf.mxu0
      %856 = vmatprep.mubr.bf16.mxu0 0
      %857 = vmatmul.mubr.bf16.gmra.mxu0 %v747
      %v858 = vpop.f32.mrf.mxu0
      %v859 = vadd.f32 %v701, %v858
      %v860 = vpop.f32.mrf.mxu0
      %v861 = vpop.f32.mrf.mxu0
      %v862 = vadd.f32 %v701, %v861
      %v863 = vpop.f32.mrf.mxu0
      %864 = vmatprep.mubr.bf16.mxu0 0
      %865 = vmatmul.mubr.bf16.gmra.mxu0 %v750
      %v866 = vpop.f32.mrf.mxu0
      %v867 = vadd.f32 %v701, %v866
      %v868 = vpop.f32.mrf.mxu0
      %v869 = vpop.f32.mrf.mxu0
      %v870 = vadd.f32 %v701, %v869
      %v871 = vpop.f32.mrf.mxu0
      %872 = vmatprep.mubr.bf16.mxu0 0
      %873 = vmatmul.mubr.bf16.gmra.mxu0 %v753
      %v874 = vpop.f32.mrf.mxu0
      %v875 = vadd.f32 %v701, %v874
      %v876 = vpop.f32.mrf.mxu0
      %v877 = vpop.f32.mrf.mxu0
      %v878 = vadd.f32 %v701, %v877
      %v879 = vpop.f32.mrf.mxu0
      %880 = vmatprep.mubr.bf16.mxu0 0
      %881 = vmatmul.mubr.bf16.gmra.mxu0 %v756
      %v882 = vpop.f32.mrf.mxu0
      %v883 = vadd.f32 %v701, %v882
      %v884 = vpop.f32.mrf.mxu0
      %v885 = vpop.f32.mrf.mxu0
      %v886 = vadd.f32 %v701, %v885
      %v887 = vpop.f32.mrf.mxu0
      %888 = vmatprep.mubr.bf16.mxu0 0
      %889 = vmatmul.mubr.bf16.gmra.mxu0 %v759
      %v890 = vpop.f32.mrf.mxu0
      %v891 = vadd.f32 %v701, %v890
      %v892 = vpop.f32.mrf.mxu0
      %v893 = vpop.f32.mrf.mxu0
      %v894 = vadd.f32 %v701, %v893
      %v895 = vpop.f32.mrf.mxu0
      %896 = vmatprep.mubr.bf16.mxu0 0
      %897 = vmatmul.mubr.bf16.gmra.mxu0 %v762
      %v898 = vpop.f32.mrf.mxu0
      %v899 = vadd.f32 %v701, %v898
      %v900 = vpop.f32.mrf.mxu0
      %v901 = vpop.f32.mrf.mxu0
      %v902 = vadd.f32 %v701, %v901
      %v903 = vpop.f32.mrf.mxu0
      %904 = vmatprep.mubr.bf16.mxu0 0
      %905 = vmatmul.mubr.bf16.gmra.mxu0 %v765
      %v906 = vpop.f32.mrf.mxu0
      %v907 = vadd.f32 %v701, %v906
      %v908 = vpop.f32.mrf.mxu0
      %v909 = vpop.f32.mrf.mxu0
      %v910 = vadd.f32 %v701, %v909
      %v911 = vpop.f32.mrf.mxu0
      %912 = vmatprep.mubr.bf16.mxu0 0
      %913 = vmatmul.mubr.bf16.gmra.mxu0 %v768
      %v914 = vpop.f32.mrf.mxu0
      %v915 = vadd.f32 %v701, %v914
      %v916 = vpop.f32.mrf.mxu0
      %v917 = vpop.f32.mrf.mxu0
      %v918 = vadd.f32 %v701, %v917
      %v919 = vpop.f32.mrf.mxu0
      %920 = vmatprep.mubr.bf16.mxu0 0
      %921 = vmatmul.mubr.bf16.gmra.mxu0 %v771
      %v922 = vpop.f32.mrf.mxu0
      %v923 = vadd.f32 %v701, %v922
      %v924 = vpop.f32.mrf.mxu0
      %v925 = vpop.f32.mrf.mxu0
      %v926 = vadd.f32 %v701, %v925
      %v927 = vpop.f32.mrf.mxu0
      %928 = vmatprep.mubr.bf16.mxu0 0
      %929 = vmatmul.mubr.bf16.gmra.mxu0 %v774
      %v930 = vpop.f32.mrf.mxu0
      %v931 = vadd.f32 %v701, %v930
      %v932 = vpop.f32.mrf.mxu0
      %v933 = vpop.f32.mrf.mxu0
      %v934 = vadd.f32 %v701, %v933
      %v935 = vpop.f32.mrf.mxu0
      %936 = vdwg.mxu0
      %v937 = vmax.f32 %v811, 0.0
      %v938 = vmax.f32 %v814, 0.0
      %v939 = vmax.f32 %v819, 0.0
      %v940 = vmax.f32 %v822, 0.0
      %v941 = vmax.f32 %v827, 0.0
      %v942 = vmax.f32 %v830, 0.0
      %v943 = vmax.f32 %v835, 0.0
      %v944 = vmax.f32 %v838, 0.0
      %v945 = vmax.f32 %v843, 0.0
      %v946 = vmax.f32 %v846, 0.0
      %v947 = vmax.f32 %v851, 0.0
      %v948 = vmax.f32 %v854, 0.0
      %v949 = vmax.f32 %v859, 0.0
      %v950 = vmax.f32 %v862, 0.0
      %v951 = vmax.f32 %v867, 0.0
      %v952 = vmax.f32 %v870, 0.0
      %v953 = vmax.f32 %v875, 0.0
      %v954 = vmax.f32 %v878, 0.0
      %v955 = vmax.f32 %v883, 0.0
      %v956 = vmax.f32 %v886, 0.0
      %v957 = vmax.f32 %v891, 0.0
      %v958 = vmax.f32 %v894, 0.0
      %v959 = vmax.f32 %v899, 0.0
      %v960 = vmax.f32 %v902, 0.0
      %v961 = vmax.f32 %v907, 0.0
      %v962 = vmax.f32 %v910, 0.0
      %v963 = vmax.f32 %v915, 0.0
      %v964 = vmax.f32 %v918, 0.0
      %v965 = vmax.f32 %v923, 0.0
      %v966 = vmax.f32 %v926, 0.0
      %v967 = vmax.f32 %v931, 0.0
      %v968 = vmax.f32 %v934, 0.0
      %v969 = vld [vmem:[%s5] sm:$0x1]
      %v971 = vlaneseq
      %v972 = vshrl.u32 %v971, 7
      %v973 = vsub.s32 0, %v972
      %v974 = vrot.slane %v969, %v973
      %v976 = vmul.f32 %v937, %v974
      %v977 = vmul.f32 %v938, %v974
      %v978 = vmul.f32 %v939, %v974
      %v979 = vmul.f32 %v940, %v974
      %v980 = vmul.f32 %v941, %v974
      %v981 = vmul.f32 %v942, %v974
      %v982 = vmul.f32 %v943, %v974
      %v983 = vmul.f32 %v944, %v974
      %v984 = vmul.f32 %v945, %v974
      %v985 = vmul.f32 %v946, %v974
      %v986 = vmul.f32 %v947, %v974
      %v987 = vmul.f32 %v948, %v974
      %v988 = vmul.f32 %v949, %v974
      %v989 = vmul.f32 %v950, %v974
      %v990 = vmul.f32 %v951, %v974
      %v991 = vmul.f32 %v952, %v974
      %v992 = vmul.f32 %v953, %v974
      %v993 = vmul.f32 %v954, %v974
      %v994 = vmul.f32 %v955, %v974
      %v995 = vmul.f32 %v956, %v974
      %v996 = vmul.f32 %v957, %v974
      %v997 = vmul.f32 %v958, %v974
      %v998 = vmul.f32 %v959, %v974
      %v999 = vmul.f32 %v960, %v974
      %v1000 = vmul.f32 %v961, %v974
      %v1001 = vmul.f32 %v962, %v974
      %v1002 = vmul.f32 %v963, %v974
      %v1003 = vmul.f32 %v964, %v974
      %v1004 = vmul.f32 %v965, %v974
      %v1005 = vmul.f32 %v966, %v974
      %v1006 = vmul.f32 %v967, %v974
      %v1007 = vmul.f32 %v968, %v974
      %v1008 = vsel %vm639, %v976, 0.0
      %1009 = vadd.xlane.f32.xlu0 %v1008
      %v1010 = vpop.xlane.xlu0 %1009
      %v1011 = vsel %vm639, %v977, 0.0
      %1012 = vadd.xlane.f32.xlu0 %v1011
      %v1013 = vpop.xlane.xlu0 %1012
      %v1014 = vsel %vm639, %v978, 0.0
      %1015 = vadd.xlane.f32.xlu0 %v1014
      %v1016 = vpop.xlane.xlu0 %1015
      %v1017 = vsel %vm639, %v979, 0.0
      %1018 = vadd.xlane.f32.xlu0 %v1017
      %v1019 = vpop.xlane.xlu0 %1018
      %v1020 = vsel %vm639, %v980, 0.0
      %1021 = vadd.xlane.f32.xlu0 %v1020
      %v1022 = vpop.xlane.xlu0 %1021
      %v1023 = vsel %vm639, %v981, 0.0
      %1024 = vadd.xlane.f32.xlu0 %v1023
      %v1025 = vpop.xlane.xlu0 %1024
      %v1026 = vsel %vm639, %v982, 0.0
      %1027 = vadd.xlane.f32.xlu0 %v1026
      %v1028 = vpop.xlane.xlu0 %1027
      %v1029 = vsel %vm639, %v983, 0.0
      %1030 = vadd.xlane.f32.xlu0 %v1029
      %v1031 = vpop.xlane.xlu0 %1030
      %v1032 = vsel %vm639, %v984, 0.0
      %1033 = vadd.xlane.f32.xlu0 %v1032
      %v1034 = vpop.xlane.xlu0 %1033
      %v1035 = vsel %vm639, %v985, 0.0
      %1036 = vadd.xlane.f32.xlu0 %v1035
      %v1037 = vpop.xlane.xlu0 %1036
      %v1038 = vsel %vm639, %v986, 0.0
      %1039 = vadd.xlane.f32.xlu0 %v1038
      %v1040 = vpop.xlane.xlu0 %1039
      %v1041 = vsel %vm639, %v987, 0.0
      %1042 = vadd.xlane.f32.xlu0 %v1041
      %v1043 = vpop.xlane.xlu0 %1042
      %v1044 = vsel %vm639, %v988, 0.0
      %1045 = vadd.xlane.f32.xlu0 %v1044
      %v1046 = vpop.xlane.xlu0 %1045
      %v1047 = vsel %vm639, %v989, 0.0
      %1048 = vadd.xlane.f32.xlu0 %v1047
      %v1049 = vpop.xlane.xlu0 %1048
      %v1050 = vsel %vm639, %v990, 0.0
      %1051 = vadd.xlane.f32.xlu0 %v1050
      %v1052 = vpop.xlane.xlu0 %1051
      %v1053 = vsel %vm639, %v991, 0.0
      %1054 = vadd.xlane.f32.xlu0 %v1053
      %v1055 = vpop.xlane.xlu0 %1054
      %v1056 = vsel %vm639, %v992, 0.0
      %1057 = vadd.xlane.f32.xlu0 %v1056
      %v1058 = vpop.xlane.xlu0 %1057
      %v1059 = vsel %vm639, %v993, 0.0
      %1060 = vadd.xlane.f32.xlu0 %v1059
      %v1061 = vpop.xlane.xlu0 %1060
      %v1062 = vsel %vm639, %v994, 0.0
      %1063 = vadd.xlane.f32.xlu0 %v1062
      %v1064 = vpop.xlane.xlu0 %1063
      %v1065 = vsel %vm639, %v995, 0.0
      %1066 = vadd.xlane.f32.xlu0 %v1065
      %v1067 = vpop.xlane.xlu0 %1066
      %v1068 = vsel %vm639, %v996, 0.0
      %1069 = vadd.xlane.f32.xlu0 %v1068
      %v1070 = vpop.xlane.xlu0 %1069
      %v1071 = vsel %vm639, %v997, 0.0
      %1072 = vadd.xlane.f32.xlu0 %v1071
      %v1073 = vpop.xlane.xlu0 %1072
      %v1074 = vsel %vm639, %v998, 0.0
      %1075 = vadd.xlane.f32.xlu0 %v1074
      %v1076 = vpop.xlane.xlu0 %1075
      %v1077 = vsel %vm639, %v999, 0.0
      %1078 = vadd.xlane.f32.xlu0 %v1077
      %v1079 = vpop.xlane.xlu0 %1078
      %v1080 = vsel %vm639, %v1000, 0.0
      %1081 = vadd.xlane.f32.xlu0 %v1080
      %v1082 = vpop.xlane.xlu0 %1081
      %v1083 = vsel %vm639, %v1001, 0.0
      %1084 = vadd.xlane.f32.xlu0 %v1083
      %v1085 = vpop.xlane.xlu0 %1084
      %v1086 = vsel %vm639, %v1002, 0.0
      %1087 = vadd.xlane.f32.xlu0 %v1086
      %v1088 = vpop.xlane.xlu0 %1087
      %v1089 = vsel %vm639, %v1003, 0.0
      %1090 = vadd.xlane.f32.xlu0 %v1089
      %v1091 = vpop.xlane.xlu0 %1090
      %v1092 = vsel %vm639, %v1004, 0.0
      %1093 = vadd.xlane.f32.xlu0 %v1092
      %v1094 = vpop.xlane.xlu0 %1093
      %v1095 = vsel %vm639, %v1005, 0.0
      %1096 = vadd.xlane.f32.xlu0 %v1095
      %v1097 = vpop.xlane.xlu0 %1096
      %v1098 = vsel %vm639, %v1006, 0.0
      %1099 = vadd.xlane.f32.xlu0 %v1098
      %v1100 = vpop.xlane.xlu0 %1099
      %v1101 = vsel %vm639, %v1007, 0.0
      %1102 = vadd.xlane.f32.xlu0 %v1101
      %v1103 = vpop.xlane.xlu0 %1102
      %v1104 = vld [vmem:[#allocation2] sm:$0x1]
      %v1106 = vlaneseq
      %v1107 = vshrl.u32 %v1106, 7
      %v1108 = vsub.s32 0, %v1107
      %v1109 = vrot.slane %v1104, %v1108
      %1110 = vset.pattern.permute.xlu0 0
      %1111 = vperm.xlu0 %1110, %v1109
      %v1112 = vpop.permute.xlu0 %1111
      %v1114 = vadd.f32 %v1010, %v1112
      %v1115 = vadd.f32 %v1013, %v1112
      %v1116 = vadd.f32 %v1016, %v1112
      %v1117 = vadd.f32 %v1019, %v1112
      %v1118 = vadd.f32 %v1022, %v1112
      %v1119 = vadd.f32 %v1025, %v1112
      %v1120 = vadd.f32 %v1028, %v1112
      %v1121 = vadd.f32 %v1031, %v1112
      %v1122 = vadd.f32 %v1034, %v1112
      %v1123 = vadd.f32 %v1037, %v1112
      %v1124 = vadd.f32 %v1040, %v1112
      %v1125 = vadd.f32 %v1043, %v1112
      %v1126 = vadd.f32 %v1046, %v1112
      %v1127 = vadd.f32 %v1049, %v1112
      %v1128 = vadd.f32 %v1052, %v1112
      %v1129 = vadd.f32 %v1055, %v1112
      %v1130 = vadd.f32 %v1058, %v1112
      %v1131 = vadd.f32 %v1061, %v1112
      %v1132 = vadd.f32 %v1064, %v1112
      %v1133 = vadd.f32 %v1067, %v1112
      %v1134 = vadd.f32 %v1070, %v1112
      %v1135 = vadd.f32 %v1073, %v1112
      %v1136 = vadd.f32 %v1076, %v1112
      %v1137 = vadd.f32 %v1079, %v1112
      %v1138 = vadd.f32 %v1082, %v1112
      %v1139 = vadd.f32 %v1085, %v1112
      %v1140 = vadd.f32 %v1088, %v1112
      %v1141 = vadd.f32 %v1091, %v1112
      %v1142 = vadd.f32 %v1094, %v1112
      %v1143 = vadd.f32 %v1097, %v1112
      %v1144 = vadd.f32 %v1100, %v1112
      %v1145 = vadd.f32 %v1103, %v1112
      %v1146 = vld [vmem:[%s374] sm:$0xff]
      %v1147 = vld [vmem:[%s374 + $0x8] sm:$0xff]
      %v1148 = vld [vmem:[%s374 + $0x10] sm:$0xff]
      %v1149 = vld [vmem:[%s374 + $0x18] sm:$0xff]
      %v1182 = vlaneseq
      %v1183 = vand.u32 %v1182, 127
      %v1184 = vlaneseq
      %v1185 = vshrl.u32 %v1184, 7
      %v1186 = vsub.s32 %v1183, %v1185
      %v1187 = vrot.slane %v1114, %v1186
      %v1188 = vlaneseq
      %v1189 = vshrl.u32 %v1188, 7
      %v1190 = vsub.s32 %v1183, %v1189
      %v1191 = vrot.slane %v1115, %v1190
      %v1192 = vlaneseq
      %v1193 = vshrl.u32 %v1192, 7
      %v1194 = vsub.s32 %v1183, %v1193
      %v1195 = vrot.slane %v1116, %v1194
      %v1196 = vlaneseq
      %v1197 = vshrl.u32 %v1196, 7
      %v1198 = vsub.s32 %v1183, %v1197
      %v1199 = vrot.slane %v1117, %v1198
      %v1200 = vlaneseq
      %v1201 = vshrl.u32 %v1200, 7
      %v1202 = vsub.s32 %v1183, %v1201
      %v1203 = vrot.slane %v1118, %v1202
      %v1204 = vlaneseq
      %v1205 = vshrl.u32 %v1204, 7
      %v1206 = vsub.s32 %v1183, %v1205
      %v1207 = vrot.slane %v1119, %v1206
      %v1208 = vlaneseq
      %v1209 = vshrl.u32 %v1208, 7
      %v1210 = vsub.s32 %v1183, %v1209
      %v1211 = vrot.slane %v1120, %v1210
      %v1212 = vlaneseq
      %v1213 = vshrl.u32 %v1212, 7
      %v1214 = vsub.s32 %v1183, %v1213
      %v1215 = vrot.slane %v1121, %v1214
      %v1216 = vlaneseq
      %v1217 = vshrl.u32 %v1216, 7
      %v1218 = vsub.s32 %v1183, %v1217
      %v1219 = vrot.slane %v1122, %v1218
      %v1220 = vlaneseq
      %v1221 = vshrl.u32 %v1220, 7
      %v1222 = vsub.s32 %v1183, %v1221
      %v1223 = vrot.slane %v1123, %v1222
      %v1224 = vlaneseq
      %v1225 = vshrl.u32 %v1224, 7
      %v1226 = vsub.s32 %v1183, %v1225
      %v1227 = vrot.slane %v1124, %v1226
      %v1228 = vlaneseq
      %v1229 = vshrl.u32 %v1228, 7
      %v1230 = vsub.s32 %v1183, %v1229
      %v1231 = vrot.slane %v1125, %v1230
      %v1232 = vlaneseq
      %v1233 = vshrl.u32 %v1232, 7
      %v1234 = vsub.s32 %v1183, %v1233
      %v1235 = vrot.slane %v1126, %v1234
      %v1236 = vlaneseq
      %v1237 = vshrl.u32 %v1236, 7
      %v1238 = vsub.s32 %v1183, %v1237
      %v1239 = vrot.slane %v1127, %v1238
      %v1240 = vlaneseq
      %v1241 = vshrl.u32 %v1240, 7
      %v1242 = vsub.s32 %v1183, %v1241
      %v1243 = vrot.slane %v1128, %v1242
      %v1244 = vlaneseq
      %v1245 = vshrl.u32 %v1244, 7
      %v1246 = vsub.s32 %v1183, %v1245
      %v1247 = vrot.slane %v1129, %v1246
      %v1248 = vlaneseq
      %v1249 = vshrl.u32 %v1248, 7
      %v1250 = vsub.s32 %v1183, %v1249
      %v1251 = vrot.slane %v1130, %v1250
      %v1252 = vlaneseq
      %v1253 = vshrl.u32 %v1252, 7
      %v1254 = vsub.s32 %v1183, %v1253
      %v1255 = vrot.slane %v1131, %v1254
      %v1256 = vlaneseq
      %v1257 = vshrl.u32 %v1256, 7
      %v1258 = vsub.s32 %v1183, %v1257
      %v1259 = vrot.slane %v1132, %v1258
      %v1260 = vlaneseq
      %v1261 = vshrl.u32 %v1260, 7
      %v1262 = vsub.s32 %v1183, %v1261
      %v1263 = vrot.slane %v1133, %v1262
      %v1264 = vlaneseq
      %v1265 = vshrl.u32 %v1264, 7
      %v1266 = vsub.s32 %v1183, %v1265
      %v1267 = vrot.slane %v1134, %v1266
      %v1268 = vlaneseq
      %v1269 = vshrl.u32 %v1268, 7
      %v1270 = vsub.s32 %v1183, %v1269
      %v1271 = vrot.slane %v1135, %v1270
      %v1272 = vlaneseq
      %v1273 = vshrl.u32 %v1272, 7
      %v1274 = vsub.s32 %v1183, %v1273
      %v1275 = vrot.slane %v1136, %v1274
      %v1276 = vlaneseq
      %v1277 = vshrl.u32 %v1276, 7
      %v1278 = vsub.s32 %v1183, %v1277
      %v1279 = vrot.slane %v1137, %v1278
      %v1280 = vlaneseq
      %v1281 = vshrl.u32 %v1280, 7
      %v1282 = vsub.s32 %v1183, %v1281
      %v1283 = vrot.slane %v1138, %v1282
      %v1284 = vlaneseq
      %v1285 = vshrl.u32 %v1284, 7
      %v1286 = vsub.s32 %v1183, %v1285
      %v1287 = vrot.slane %v1139, %v1286
      %v1288 = vlaneseq
      %v1289 = vshrl.u32 %v1288, 7
      %v1290 = vsub.s32 %v1183, %v1289
      %v1291 = vrot.slane %v1140, %v1290
      %v1292 = vlaneseq
      %v1293 = vshrl.u32 %v1292, 7
      %v1294 = vsub.s32 %v1183, %v1293
      %v1295 = vrot.slane %v1141, %v1294
      %v1296 = vlaneseq
      %v1297 = vshrl.u32 %v1296, 7
      %v1298 = vsub.s32 %v1183, %v1297
      %v1299 = vrot.slane %v1142, %v1298
      %v1300 = vlaneseq
      %v1301 = vshrl.u32 %v1300, 7
      %v1302 = vsub.s32 %v1183, %v1301
      %v1303 = vrot.slane %v1143, %v1302
      %v1304 = vlaneseq
      %v1305 = vshrl.u32 %v1304, 7
      %v1306 = vsub.s32 %v1183, %v1305
      %v1307 = vrot.slane %v1144, %v1306
      %v1308 = vlaneseq
      %v1309 = vshrl.u32 %v1308, 7
      %v1310 = vsub.s32 %v1183, %v1309
      %v1311 = vrot.slane %v1145, %v1310
      %vm1312 = vcmask 1041409
      %v1313 = vsel %vm1312, %v1191, %v1187
      %vm1314 = vcmask 1042434
      %v1315 = vsel %vm1314, %v1195, %v1313
      %vm1316 = vcmask 1043459
      %v1317 = vsel %vm1316, %v1199, %v1315
      %vm1318 = vcmask 1044484
      %v1319 = vsel %vm1318, %v1203, %v1317
      %vm1320 = vcmask 1045509
      %v1321 = vsel %vm1320, %v1207, %v1319
      %vm1322 = vcmask 1046534
      %v1323 = vsel %vm1322, %v1211, %v1321
      %vm1324 = vcmask 1047559
      %v1325 = vsel %vm1324, %v1215, %v1323
      %v1326 = vsel %vm1312, %v1223, %v1219
      %v1327 = vsel %vm1314, %v1227, %v1326
      %v1328 = vsel %vm1316, %v1231, %v1327
      %v1329 = vsel %vm1318, %v1235, %v1328
      %v1330 = vsel %vm1320, %v1239, %v1329
      %v1331 = vsel %vm1322, %v1243, %v1330
      %v1332 = vsel %vm1324, %v1247, %v1331
      %v1333 = vsel %vm1312, %v1255, %v1251
      %v1334 = vsel %vm1314, %v1259, %v1333
      %v1335 = vsel %vm1316, %v1263, %v1334
      %v1336 = vsel %vm1318, %v1267, %v1335
      %v1337 = vsel %vm1320, %v1271, %v1336
      %v1338 = vsel %vm1322, %v1275, %v1337
      %v1339 = vsel %vm1324, %v1279, %v1338
      %v1340 = vsel %vm1312, %v1287, %v1283
      %v1341 = vsel %vm1314, %v1291, %v1340
      %v1342 = vsel %vm1316, %v1295, %v1341
      %v1343 = vsel %vm1318, %v1299, %v1342
      %v1344 = vsel %vm1320, %v1303, %v1343
      %v1345 = vsel %vm1322, %v1307, %v1344
      %v1346 = vsel %vm1324, %v1311, %v1345
      %vm1351 = vcmask 64512
      %v1352 = vsel %vm1351, %v1325, -inf
      %1353 = vmax.xlane.f32.xlu0 %v1352
      %v1354 = vpop.xlane.xlu0 %1353
      %v1355 = vsel %vm1351, %v1332, -inf
      %1356 = vmax.xlane.f32.xlu0 %v1355
      %v1357 = vpop.xlane.xlu0 %1356
      %v1358 = vsel %vm1351, %v1339, -inf
      %1359 = vmax.xlane.f32.xlu0 %v1358
      %v1360 = vpop.xlane.xlu0 %1359
      %v1361 = vsel %vm1351, %v1346, -inf
      %1362 = vmax.xlane.f32.xlu0 %v1361
      %v1363 = vpop.xlane.xlu0 %1362
      %v1364 = vmax.f32 %v1354, 0.0
      %v1365 = vmax.f32 %v1357, 0.0
      %v1366 = vmax.f32 %v1360, 0.0
      %v1367 = vmax.f32 %v1363, 0.0
      %v1372 = vlaneseq
      %v1373 = vshrl.u32 %v1372, 7
      %v1374 = vsub.s32 0, %v1373
      %v1375 = vrot.slane %v1364, %v1374
      %v1376 = vlaneseq
      %v1377 = vshrl.u32 %v1376, 7
      %v1378 = vsub.s32 1, %v1377
      %v1379 = vrot.slane %v1364, %v1378
      %v1380 = vlaneseq
      %v1381 = vshrl.u32 %v1380, 7
      %v1382 = vsub.s32 2, %v1381
      %v1383 = vrot.slane %v1364, %v1382
      %v1384 = vlaneseq
      %v1385 = vshrl.u32 %v1384, 7
      %v1386 = vsub.s32 3, %v1385
      %v1387 = vrot.slane %v1364, %v1386
      %v1388 = vlaneseq
      %v1389 = vshrl.u32 %v1388, 7
      %v1390 = vsub.s32 4, %v1389
      %v1391 = vrot.slane %v1364, %v1390
      %v1392 = vlaneseq
      %v1393 = vshrl.u32 %v1392, 7
      %v1394 = vsub.s32 5, %v1393
      %v1395 = vrot.slane %v1364, %v1394
      %v1396 = vlaneseq
      %v1397 = vshrl.u32 %v1396, 7
      %v1398 = vsub.s32 6, %v1397
      %v1399 = vrot.slane %v1364, %v1398
      %v1400 = vlaneseq
      %v1401 = vshrl.u32 %v1400, 7
      %v1402 = vsub.s32 7, %v1401
      %v1403 = vrot.slane %v1364, %v1402
      %v1404 = vlaneseq
      %v1405 = vshrl.u32 %v1404, 7
      %v1406 = vsub.s32 0, %v1405
      %v1407 = vrot.slane %v1365, %v1406
      %v1408 = vlaneseq
      %v1409 = vshrl.u32 %v1408, 7
      %v1410 = vsub.s32 1, %v1409
      %v1411 = vrot.slane %v1365, %v1410
      %v1412 = vlaneseq
      %v1413 = vshrl.u32 %v1412, 7
      %v1414 = vsub.s32 2, %v1413
      %v1415 = vrot.slane %v1365, %v1414
      %v1416 = vlaneseq
      %v1417 = vshrl.u32 %v1416, 7
      %v1418 = vsub.s32 3, %v1417
      %v1419 = vrot.slane %v1365, %v1418
      %v1420 = vlaneseq
      %v1421 = vshrl.u32 %v1420, 7
      %v1422 = vsub.s32 4, %v1421
      %v1423 = vrot.slane %v1365, %v1422
      %v1424 = vlaneseq
      %v1425 = vshrl.u32 %v1424, 7
      %v1426 = vsub.s32 5, %v1425
      %v1427 = vrot.slane %v1365, %v1426
      %v1428 = vlaneseq
      %v1429 = vshrl.u32 %v1428, 7
      %v1430 = vsub.s32 6, %v1429
      %v1431 = vrot.slane %v1365, %v1430
      %v1432 = vlaneseq
      %v1433 = vshrl.u32 %v1432, 7
      %v1434 = vsub.s32 7, %v1433
      %v1435 = vrot.slane %v1365, %v1434
      %v1436 = vlaneseq
      %v1437 = vshrl.u32 %v1436, 7
      %v1438 = vsub.s32 0, %v1437
      %v1439 = vrot.slane %v1366, %v1438
      %v1440 = vlaneseq
      %v1441 = vshrl.u32 %v1440, 7
      %v1442 = vsub.s32 1, %v1441
      %v1443 = vrot.slane %v1366, %v1442
      %v1444 = vlaneseq
      %v1445 = vshrl.u32 %v1444, 7
      %v1446 = vsub.s32 2, %v1445
      %v1447 = vrot.slane %v1366, %v1446
      %v1448 = vlaneseq
      %v1449 = vshrl.u32 %v1448, 7
      %v1450 = vsub.s32 3, %v1449
      %v1451 = vrot.slane %v1366, %v1450
      %v1452 = vlaneseq
      %v1453 = vshrl.u32 %v1452, 7
      %v1454 = vsub.s32 4, %v1453
      %v1455 = vrot.slane %v1366, %v1454
      %v1456 = vlaneseq
      %v1457 = vshrl.u32 %v1456, 7
      %v1458 = vsub.s32 5, %v1457
      %v1459 = vrot.slane %v1366, %v1458
      %v1460 = vlaneseq
      %v1461 = vshrl.u32 %v1460, 7
      %v1462 = vsub.s32 6, %v1461
      %v1463 = vrot.slane %v1366, %v1462
      %v1464 = vlaneseq
      %v1465 = vshrl.u32 %v1464, 7
      %v1466 = vsub.s32 7, %v1465
      %v1467 = vrot.slane %v1366, %v1466
      %v1468 = vlaneseq
      %v1469 = vshrl.u32 %v1468, 7
      %v1470 = vsub.s32 0, %v1469
      %v1471 = vrot.slane %v1367, %v1470
      %v1472 = vlaneseq
      %v1473 = vshrl.u32 %v1472, 7
      %v1474 = vsub.s32 1, %v1473
      %v1475 = vrot.slane %v1367, %v1474
      %v1476 = vlaneseq
      %v1477 = vshrl.u32 %v1476, 7
      %v1478 = vsub.s32 2, %v1477
      %v1479 = vrot.slane %v1367, %v1478
      %v1480 = vlaneseq
      %v1481 = vshrl.u32 %v1480, 7
      %v1482 = vsub.s32 3, %v1481
      %v1483 = vrot.slane %v1367, %v1482
      %v1484 = vlaneseq
      %v1485 = vshrl.u32 %v1484, 7
      %v1486 = vsub.s32 4, %v1485
      %v1487 = vrot.slane %v1367, %v1486
      %v1488 = vlaneseq
      %v1489 = vshrl.u32 %v1488, 7
      %v1490 = vsub.s32 5, %v1489
      %v1491 = vrot.slane %v1367, %v1490
      %v1492 = vlaneseq
      %v1493 = vshrl.u32 %v1492, 7
      %v1494 = vsub.s32 6, %v1493
      %v1495 = vrot.slane %v1367, %v1494
      %v1496 = vlaneseq
      %v1497 = vshrl.u32 %v1496, 7
      %v1498 = vsub.s32 7, %v1497
      %v1499 = vrot.slane %v1367, %v1498
      %v1532 = vsub.f32 %v1114, %v1375
      %v1533 = vsub.f32 %v1115, %v1379
      %v1534 = vsub.f32 %v1116, %v1383
      %v1535 = vsub.f32 %v1117, %v1387
      %v1536 = vsub.f32 %v1118, %v1391
      %v1537 = vsub.f32 %v1119, %v1395
      %v1538 = vsub.f32 %v1120, %v1399
      %v1539 = vsub.f32 %v1121, %v1403
      %v1540 = vsub.f32 %v1122, %v1407
      %v1541 = vsub.f32 %v1123, %v1411
      %v1542 = vsub.f32 %v1124, %v1415
      %v1543 = vsub.f32 %v1125, %v1419
      %v1544 = vsub.f32 %v1126, %v1423
      %v1545 = vsub.f32 %v1127, %v1427
      %v1546 = vsub.f32 %v1128, %v1431
      %v1547 = vsub.f32 %v1129, %v1435
      %v1548 = vsub.f32 %v1130, %v1439
      %v1549 = vsub.f32 %v1131, %v1443
      %v1550 = vsub.f32 %v1132, %v1447
      %v1551 = vsub.f32 %v1133, %v1451
      %v1552 = vsub.f32 %v1134, %v1455
      %v1553 = vsub.f32 %v1135, %v1459
      %v1554 = vsub.f32 %v1136, %v1463
      %v1555 = vsub.f32 %v1137, %v1467
      %v1556 = vsub.f32 %v1138, %v1471
      %v1557 = vsub.f32 %v1139, %v1475
      %v1558 = vsub.f32 %v1140, %v1479
      %v1559 = vsub.f32 %v1141, %v1483
      %v1560 = vsub.f32 %v1142, %v1487
      %v1561 = vsub.f32 %v1143, %v1491
      %v1562 = vsub.f32 %v1144, %v1495
      %v1563 = vsub.f32 %v1145, %v1499
      %v1564 = vmul.f32 %v1532, 1.442695
      %v1565 = vpow.pop %v1564
      %v1566 = vmul.f32 %v1533, 1.442695
      %v1567 = vpow.pop %v1566
      %v1568 = vmul.f32 %v1534, 1.442695
      %v1569 = vpow.pop %v1568
      %v1570 = vmul.f32 %v1535, 1.442695
      %v1571 = vpow.pop %v1570
      %v1572 = vmul.f32 %v1536, 1.442695
      %v1573 = vpow.pop %v1572
      %v1574 = vmul.f32 %v1537, 1.442695
      %v1575 = vpow.pop %v1574
      %v1576 = vmul.f32 %v1538, 1.442695
      %v1577 = vpow.pop %v1576
      %v1578 = vmul.f32 %v1539, 1.442695
      %v1579 = vpow.pop %v1578
      %v1580 = vmul.f32 %v1540, 1.442695
      %v1581 = vpow.pop %v1580
      %v1582 = vmul.f32 %v1541, 1.442695
      %v1583 = vpow.pop %v1582
      %v1584 = vmul.f32 %v1542, 1.442695
      %v1585 = vpow.pop %v1584
      %v1586 = vmul.f32 %v1543, 1.442695
      %v1587 = vpow.pop %v1586
      %v1588 = vmul.f32 %v1544, 1.442695
      %v1589 = vpow.pop %v1588
      %v1590 = vmul.f32 %v1545, 1.442695
      %v1591 = vpow.pop %v1590
      %v1592 = vmul.f32 %v1546, 1.442695
      %v1593 = vpow.pop %v1592
      %v1594 = vmul.f32 %v1547, 1.442695
      %v1595 = vpow.pop %v1594
      %v1596 = vmul.f32 %v1548, 1.442695
      %v1597 = vpow.pop %v1596
      %v1598 = vmul.f32 %v1549, 1.442695
      %v1599 = vpow.pop %v1598
      %v1600 = vmul.f32 %v1550, 1.442695
      %v1601 = vpow.pop %v1600
      %v1602 = vmul.f32 %v1551, 1.442695
      %v1603 = vpow.pop %v1602
      %v1604 = vmul.f32 %v1552, 1.442695
      %v1605 = vpow.pop %v1604
      %v1606 = vmul.f32 %v1553, 1.442695
      %v1607 = vpow.pop %v1606
      %v1608 = vmul.f32 %v1554, 1.442695
      %v1609 = vpow.pop %v1608
      %v1610 = vmul.f32 %v1555, 1.442695
      %v1611 = vpow.pop %v1610
      %v1612 = vmul.f32 %v1556, 1.442695
      %v1613 = vpow.pop %v1612
      %v1614 = vmul.f32 %v1557, 1.442695
      %v1615 = vpow.pop %v1614
      %v1616 = vmul.f32 %v1558, 1.442695
      %v1617 = vpow.pop %v1616
      %v1618 = vmul.f32 %v1559, 1.442695
      %v1619 = vpow.pop %v1618
      %v1620 = vmul.f32 %v1560, 1.442695
      %v1621 = vpow.pop %v1620
      %v1622 = vmul.f32 %v1561, 1.442695
      %v1623 = vpow.pop %v1622
      %v1624 = vmul.f32 %v1562, 1.442695
      %v1625 = vpow.pop %v1624
      %v1626 = vmul.f32 %v1563, 1.442695
      %v1627 = vpow.pop %v1626
      %v1632 = vlaneseq
      %v1633 = vshrl.u32 %v1632, 7
      %v1634 = vsub.s32 0, %v1633
      %v1635 = vrot.slane %v1146, %v1634
      %1637 = vbcast.lane.b32.xlu0 %v1635, 256
      %v1638 = vpop.permute.xlu0 %1637
      %v1639 = vlaneseq
      %v1640 = vshrl.u32 %v1639, 7
      %v1641 = vsub.s32 1, %v1640
      %v1642 = vrot.slane %v1146, %v1641
      %1644 = vbcast.lane.b32.xlu0 %v1642, 256
      %v1645 = vpop.permute.xlu0 %1644
      %v1646 = vlaneseq
      %v1647 = vshrl.u32 %v1646, 7
      %v1648 = vsub.s32 2, %v1647
      %v1649 = vrot.slane %v1146, %v1648
      %1651 = vbcast.lane.b32.xlu0 %v1649, 256
      %v1652 = vpop.permute.xlu0 %1651
      %v1653 = vlaneseq
      %v1654 = vshrl.u32 %v1653, 7
      %v1655 = vsub.s32 3, %v1654
      %v1656 = vrot.slane %v1146, %v1655
      %1658 = vbcast.lane.b32.xlu0 %v1656, 256
      %v1659 = vpop.permute.xlu0 %1658
      %v1660 = vlaneseq
      %v1661 = vshrl.u32 %v1660, 7
      %v1662 = vsub.s32 4, %v1661
      %v1663 = vrot.slane %v1146, %v1662
      %1665 = vbcast.lane.b32.xlu0 %v1663, 256
      %v1666 = vpop.permute.xlu0 %1665
      %v1667 = vlaneseq
      %v1668 = vshrl.u32 %v1667, 7
      %v1669 = vsub.s32 5, %v1668
      %v1670 = vrot.slane %v1146, %v1669
      %1672 = vbcast.lane.b32.xlu0 %v1670, 256
      %v1673 = vpop.permute.xlu0 %1672
      %v1674 = vlaneseq
      %v1675 = vshrl.u32 %v1674, 7
      %v1676 = vsub.s32 6, %v1675
      %v1677 = vrot.slane %v1146, %v1676
      %1679 = vbcast.lane.b32.xlu0 %v1677, 256
      %v1680 = vpop.permute.xlu0 %1679
      %v1681 = vlaneseq
      %v1682 = vshrl.u32 %v1681, 7
      %v1683 = vsub.s32 7, %v1682
      %v1684 = vrot.slane %v1146, %v1683
      %1686 = vbcast.lane.b32.xlu0 %v1684, 256
      %v1687 = vpop.permute.xlu0 %1686
      %v1688 = vlaneseq
      %v1689 = vshrl.u32 %v1688, 7
      %v1690 = vsub.s32 0, %v1689
      %v1691 = vrot.slane %v1147, %v1690
      %1693 = vbcast.lane.b32.xlu0 %v1691, 256
      %v1694 = vpop.permute.xlu0 %1693
      %v1695 = vlaneseq
      %v1696 = vshrl.u32 %v1695, 7
      %v1697 = vsub.s32 1, %v1696
      %v1698 = vrot.slane %v1147, %v1697
      %1700 = vbcast.lane.b32.xlu0 %v1698, 256
      %v1701 = vpop.permute.xlu0 %1700
      %v1702 = vlaneseq
      %v1703 = vshrl.u32 %v1702, 7
      %v1704 = vsub.s32 2, %v1703
      %v1705 = vrot.slane %v1147, %v1704
      %1707 = vbcast.lane.b32.xlu0 %v1705, 256
      %v1708 = vpop.permute.xlu0 %1707
      %v1709 = vlaneseq
      %v1710 = vshrl.u32 %v1709, 7
      %v1711 = vsub.s32 3, %v1710
      %v1712 = vrot.slane %v1147, %v1711
      %1714 = vbcast.lane.b32.xlu0 %v1712, 256
      %v1715 = vpop.permute.xlu0 %1714
      %v1716 = vlaneseq
      %v1717 = vshrl.u32 %v1716, 7
      %v1718 = vsub.s32 4, %v1717
      %v1719 = vrot.slane %v1147, %v1718
      %1721 = vbcast.lane.b32.xlu0 %v1719, 256
      %v1722 = vpop.permute.xlu0 %1721
      %v1723 = vlaneseq
      %v1724 = vshrl.u32 %v1723, 7
      %v1725 = vsub.s32 5, %v1724
      %v1726 = vrot.slane %v1147, %v1725
      %1728 = vbcast.lane.b32.xlu0 %v1726, 256
      %v1729 = vpop.permute.xlu0 %1728
      %v1730 = vlaneseq
      %v1731 = vshrl.u32 %v1730, 7
      %v1732 = vsub.s32 6, %v1731
      %v1733 = vrot.slane %v1147, %v1732
      %1735 = vbcast.lane.b32.xlu0 %v1733, 256
      %v1736 = vpop.permute.xlu0 %1735
      %v1737 = vlaneseq
      %v1738 = vshrl.u32 %v1737, 7
      %v1739 = vsub.s32 7, %v1738
      %v1740 = vrot.slane %v1147, %v1739
      %1742 = vbcast.lane.b32.xlu0 %v1740, 256
      %v1743 = vpop.permute.xlu0 %1742
      %v1744 = vlaneseq
      %v1745 = vshrl.u32 %v1744, 7
      %v1746 = vsub.s32 0, %v1745
      %v1747 = vrot.slane %v1148, %v1746
      %1749 = vbcast.lane.b32.xlu0 %v1747, 256
      %v1750 = vpop.permute.xlu0 %1749
      %v1751 = vlaneseq
      %v1752 = vshrl.u32 %v1751, 7
      %v1753 = vsub.s32 1, %v1752
      %v1754 = vrot.slane %v1148, %v1753
      %1756 = vbcast.lane.b32.xlu0 %v1754, 256
      %v1757 = vpop.permute.xlu0 %1756
      %v1758 = vlaneseq
      %v1759 = vshrl.u32 %v1758, 7
      %v1760 = vsub.s32 2, %v1759
      %v1761 = vrot.slane %v1148, %v1760
      %1763 = vbcast.lane.b32.xlu0 %v1761, 256
      %v1764 = vpop.permute.xlu0 %1763
      %v1765 = vlaneseq
      %v1766 = vshrl.u32 %v1765, 7
      %v1767 = vsub.s32 3, %v1766
      %v1768 = vrot.slane %v1148, %v1767
      %1770 = vbcast.lane.b32.xlu0 %v1768, 256
      %v1771 = vpop.permute.xlu0 %1770
      %v1772 = vlaneseq
      %v1773 = vshrl.u32 %v1772, 7
      %v1774 = vsub.s32 4, %v1773
      %v1775 = vrot.slane %v1148, %v1774
      %1777 = vbcast.lane.b32.xlu0 %v1775, 256
      %v1778 = vpop.permute.xlu0 %1777
      %v1779 = vlaneseq
      %v1780 = vshrl.u32 %v1779, 7
      %v1781 = vsub.s32 5, %v1780
      %v1782 = vrot.slane %v1148, %v1781
      %1784 = vbcast.lane.b32.xlu0 %v1782, 256
      %v1785 = vpop.permute.xlu0 %1784
      %v1786 = vlaneseq
      %v1787 = vshrl.u32 %v1786, 7
      %v1788 = vsub.s32 6, %v1787
      %v1789 = vrot.slane %v1148, %v1788
      %1791 = vbcast.lane.b32.xlu0 %v1789, 256
      %v1792 = vpop.permute.xlu0 %1791
      %v1793 = vlaneseq
      %v1794 = vshrl.u32 %v1793, 7
      %v1795 = vsub.s32 7, %v1794
      %v1796 = vrot.slane %v1148, %v1795
      %1798 = vbcast.lane.b32.xlu0 %v1796, 256
      %v1799 = vpop.permute.xlu0 %1798
      %v1800 = vlaneseq
      %v1801 = vshrl.u32 %v1800, 7
      %v1802 = vsub.s32 0, %v1801
      %v1803 = vrot.slane %v1149, %v1802
      %1805 = vbcast.lane.b32.xlu0 %v1803, 256
      %v1806 = vpop.permute.xlu0 %1805
      %v1807 = vlaneseq
      %v1808 = vshrl.u32 %v1807, 7
      %v1809 = vsub.s32 1, %v1808
      %v1810 = vrot.slane %v1149, %v1809
      %1812 = vbcast.lane.b32.xlu0 %v1810, 256
      %v1813 = vpop.permute.xlu0 %1812
      %v1814 = vlaneseq
      %v1815 = vshrl.u32 %v1814, 7
      %v1816 = vsub.s32 2, %v1815
      %v1817 = vrot.slane %v1149, %v1816
      %1819 = vbcast.lane.b32.xlu0 %v1817, 256
      %v1820 = vpop.permute.xlu0 %1819
      %v1821 = vlaneseq
      %v1822 = vshrl.u32 %v1821, 7
      %v1823 = vsub.s32 3, %v1822
      %v1824 = vrot.slane %v1149, %v1823
      %1826 = vbcast.lane.b32.xlu0 %v1824, 256
      %v1827 = vpop.permute.xlu0 %1826
      %v1828 = vlaneseq
      %v1829 = vshrl.u32 %v1828, 7
      %v1830 = vsub.s32 4, %v1829
      %v1831 = vrot.slane %v1149, %v1830
      %1833 = vbcast.lane.b32.xlu0 %v1831, 256
      %v1834 = vpop.permute.xlu0 %1833
      %v1835 = vlaneseq
      %v1836 = vshrl.u32 %v1835, 7
      %v1837 = vsub.s32 5, %v1836
      %v1838 = vrot.slane %v1149, %v1837
      %1840 = vbcast.lane.b32.xlu0 %v1838, 256
      %v1841 = vpop.permute.xlu0 %1840
      %v1842 = vlaneseq
      %v1843 = vshrl.u32 %v1842, 7
      %v1844 = vsub.s32 6, %v1843
      %v1845 = vrot.slane %v1149, %v1844
      %1847 = vbcast.lane.b32.xlu0 %v1845, 256
      %v1848 = vpop.permute.xlu0 %1847
      %v1849 = vlaneseq
      %v1850 = vshrl.u32 %v1849, 7
      %v1851 = vsub.s32 7, %v1850
      %v1852 = vrot.slane %v1149, %v1851
      %1854 = vbcast.lane.b32.xlu0 %v1852, 256
      %v1855 = vpop.permute.xlu0 %1854
      %v1888 = vmul.f32 %v1565, %v1638
      %v1889 = vmul.f32 %v1567, %v1645
      %v1890 = vmul.f32 %v1569, %v1652
      %v1891 = vmul.f32 %v1571, %v1659
      %v1892 = vmul.f32 %v1573, %v1666
      %v1893 = vmul.f32 %v1575, %v1673
      %v1894 = vmul.f32 %v1577, %v1680
      %v1895 = vmul.f32 %v1579, %v1687
      %v1896 = vmul.f32 %v1581, %v1694
      %v1897 = vmul.f32 %v1583, %v1701
      %v1898 = vmul.f32 %v1585, %v1708
      %v1899 = vmul.f32 %v1587, %v1715
      %v1900 = vmul.f32 %v1589, %v1722
      %v1901 = vmul.f32 %v1591, %v1729
      %v1902 = vmul.f32 %v1593, %v1736
      %v1903 = vmul.f32 %v1595, %v1743
      %v1904 = vmul.f32 %v1597, %v1750
      %v1905 = vmul.f32 %v1599, %v1757
      %v1906 = vmul.f32 %v1601, %v1764
      %v1907 = vmul.f32 %v1603, %v1771
      %v1908 = vmul.f32 %v1605, %v1778
      %v1909 = vmul.f32 %v1607, %v1785
      %v1910 = vmul.f32 %v1609, %v1792
      %v1911 = vmul.f32 %v1611, %v1799
      %v1912 = vmul.f32 %v1613, %v1806
      %v1913 = vmul.f32 %v1615, %v1813
      %v1914 = vmul.f32 %v1617, %v1820
      %v1915 = vmul.f32 %v1619, %v1827
      %v1916 = vmul.f32 %v1621, %v1834
      %v1917 = vmul.f32 %v1623, %v1841
      %v1918 = vmul.f32 %v1625, %v1848
      %v1919 = vmul.f32 %v1627, %v1855
      %1952 = vset.pattern.permute.xlu0 0
      %1953 = vperm.xlu0 %1952, %v1888
      %v1954 = vpop.permute.xlu0 %1953
      %1955 = vset.pattern.permute.xlu0 0
      %1956 = vperm.xlu0 %1955, %v1889
      %v1957 = vpop.permute.xlu0 %1956
      %1958 = vset.pattern.permute.xlu0 0
      %1959 = vperm.xlu0 %1958, %v1890
      %v1960 = vpop.permute.xlu0 %1959
      %1961 = vset.pattern.permute.xlu0 0
      %1962 = vperm.xlu0 %1961, %v1891
      %v1963 = vpop.permute.xlu0 %1962
      %1964 = vset.pattern.permute.xlu0 0
      %1965 = vperm.xlu0 %1964, %v1892
      %v1966 = vpop.permute.xlu0 %1965
      %1967 = vset.pattern.permute.xlu0 0
      %1968 = vperm.xlu0 %1967, %v1893
      %v1969 = vpop.permute.xlu0 %1968
      %1970 = vset.pattern.permute.xlu0 0
      %1971 = vperm.xlu0 %1970, %v1894
      %v1972 = vpop.permute.xlu0 %1971
      %1973 = vset.pattern.permute.xlu0 0
      %1974 = vperm.xlu0 %1973, %v1895
      %v1975 = vpop.permute.xlu0 %1974
      %1976 = vset.pattern.permute.xlu0 0
      %1977 = vperm.xlu0 %1976, %v1896
      %v1978 = vpop.permute.xlu0 %1977
      %1979 = vset.pattern.permute.xlu0 0
      %1980 = vperm.xlu0 %1979, %v1897
      %v1981 = vpop.permute.xlu0 %1980
      %1982 = vset.pattern.permute.xlu0 0
      %1983 = vperm.xlu0 %1982, %v1898
      %v1984 = vpop.permute.xlu0 %1983
      %1985 = vset.pattern.permute.xlu0 0
      %1986 = vperm.xlu0 %1985, %v1899
      %v1987 = vpop.permute.xlu0 %1986
      %1988 = vset.pattern.permute.xlu0 0
      %1989 = vperm.xlu0 %1988, %v1900
      %v1990 = vpop.permute.xlu0 %1989
      %1991 = vset.pattern.permute.xlu0 0
      %1992 = vperm.xlu0 %1991, %v1901
      %v1993 = vpop.permute.xlu0 %1992
      %1994 = vset.pattern.permute.xlu0 0
      %1995 = vperm.xlu0 %1994, %v1902
      %v1996 = vpop.permute.xlu0 %1995
      %1997 = vset.pattern.permute.xlu0 0
      %1998 = vperm.xlu0 %1997, %v1903
      %v1999 = vpop.permute.xlu0 %1998
      %2000 = vset.pattern.permute.xlu0 0
      %2001 = vperm.xlu0 %2000, %v1904
      %v2002 = vpop.permute.xlu0 %2001
      %2003 = vset.pattern.permute.xlu0 0
      %2004 = vperm.xlu0 %2003, %v1905
      %v2005 = vpop.permute.xlu0 %2004
      %2006 = vset.pattern.permute.xlu0 0
      %2007 = vperm.xlu0 %2006, %v1906
      %v2008 = vpop.permute.xlu0 %2007
      %2009 = vset.pattern.permute.xlu0 0
      %2010 = vperm.xlu0 %2009, %v1907
      %v2011 = vpop.permute.xlu0 %2010
      %2012 = vset.pattern.permute.xlu0 0
      %2013 = vperm.xlu0 %2012, %v1908
      %v2014 = vpop.permute.xlu0 %2013
      %2015 = vset.pattern.permute.xlu0 0
      %2016 = vperm.xlu0 %2015, %v1909
      %v2017 = vpop.permute.xlu0 %2016
      %2018 = vset.pattern.permute.xlu0 0
      %2019 = vperm.xlu0 %2018, %v1910
      %v2020 = vpop.permute.xlu0 %2019
      %2021 = vset.pattern.permute.xlu0 0
      %2022 = vperm.xlu0 %2021, %v1911
      %v2023 = vpop.permute.xlu0 %2022
      %2024 = vset.pattern.permute.xlu0 0
      %2025 = vperm.xlu0 %2024, %v1912
      %v2026 = vpop.permute.xlu0 %2025
      %2027 = vset.pattern.permute.xlu0 0
      %2028 = vperm.xlu0 %2027, %v1913
      %v2029 = vpop.permute.xlu0 %2028
      %2030 = vset.pattern.permute.xlu0 0
      %2031 = vperm.xlu0 %2030, %v1914
      %v2032 = vpop.permute.xlu0 %2031
      %2033 = vset.pattern.permute.xlu0 0
      %2034 = vperm.xlu0 %2033, %v1915
      %v2035 = vpop.permute.xlu0 %2034
      %2036 = vset.pattern.permute.xlu0 0
      %2037 = vperm.xlu0 %2036, %v1916
      %v2038 = vpop.permute.xlu0 %2037
      %2039 = vset.pattern.permute.xlu0 0
      %2040 = vperm.xlu0 %2039, %v1917
      %v2041 = vpop.permute.xlu0 %2040
      %2042 = vset.pattern.permute.xlu0 0
      %2043 = vperm.xlu0 %2042, %v1918
      %v2044 = vpop.permute.xlu0 %2043
      %2045 = vset.pattern.permute.xlu0 0
      %2046 = vperm.xlu0 %2045, %v1919
      %v2047 = vpop.permute.xlu0 %2046
      %v2048 = vlaneseq
      %v2049 = vshrl.u32 %v2048, 7
      %v2050 = vsub.s32 %v1183, %v2049
      %v2051 = vrot.slane %v1954, %v2050
      %v2052 = vlaneseq
      %v2053 = vshrl.u32 %v2052, 7
      %v2054 = vsub.s32 %v1183, %v2053
      %v2055 = vrot.slane %v1957, %v2054
      %v2056 = vlaneseq
      %v2057 = vshrl.u32 %v2056, 7
      %v2058 = vsub.s32 %v1183, %v2057
      %v2059 = vrot.slane %v1960, %v2058
      %v2060 = vlaneseq
      %v2061 = vshrl.u32 %v2060, 7
      %v2062 = vsub.s32 %v1183, %v2061
      %v2063 = vrot.slane %v1963, %v2062
      %v2064 = vlaneseq
      %v2065 = vshrl.u32 %v2064, 7
      %v2066 = vsub.s32 %v1183, %v2065
      %v2067 = vrot.slane %v1966, %v2066
      %v2068 = vlaneseq
      %v2069 = vshrl.u32 %v2068, 7
      %v2070 = vsub.s32 %v1183, %v2069
      %v2071 = vrot.slane %v1969, %v2070
      %v2072 = vlaneseq
      %v2073 = vshrl.u32 %v2072, 7
      %v2074 = vsub.s32 %v1183, %v2073
      %v2075 = vrot.slane %v1972, %v2074
      %v2076 = vlaneseq
      %v2077 = vshrl.u32 %v2076, 7
      %v2078 = vsub.s32 %v1183, %v2077
      %v2079 = vrot.slane %v1975, %v2078
      %v2080 = vlaneseq
      %v2081 = vshrl.u32 %v2080, 7
      %v2082 = vsub.s32 %v1183, %v2081
      %v2083 = vrot.slane %v1978, %v2082
      %v2084 = vlaneseq
      %v2085 = vshrl.u32 %v2084, 7
      %v2086 = vsub.s32 %v1183, %v2085
      %v2087 = vrot.slane %v1981, %v2086
      %v2088 = vlaneseq
      %v2089 = vshrl.u32 %v2088, 7
      %v2090 = vsub.s32 %v1183, %v2089
      %v2091 = vrot.slane %v1984, %v2090
      %v2092 = vlaneseq
      %v2093 = vshrl.u32 %v2092, 7
      %v2094 = vsub.s32 %v1183, %v2093
      %v2095 = vrot.slane %v1987, %v2094
      %v2096 = vlaneseq
      %v2097 = vshrl.u32 %v2096, 7
      %v2098 = vsub.s32 %v1183, %v2097
      %v2099 = vrot.slane %v1990, %v2098
      %v2100 = vlaneseq
      %v2101 = vshrl.u32 %v2100, 7
      %v2102 = vsub.s32 %v1183, %v2101
      %v2103 = vrot.slane %v1993, %v2102
      %v2104 = vlaneseq
      %v2105 = vshrl.u32 %v2104, 7
      %v2106 = vsub.s32 %v1183, %v2105
      %v2107 = vrot.slane %v1996, %v2106
      %v2108 = vlaneseq
      %v2109 = vshrl.u32 %v2108, 7
      %v2110 = vsub.s32 %v1183, %v2109
      %v2111 = vrot.slane %v1999, %v2110
      %v2112 = vlaneseq
      %v2113 = vshrl.u32 %v2112, 7
      %v2114 = vsub.s32 %v1183, %v2113
      %v2115 = vrot.slane %v2002, %v2114
      %v2116 = vlaneseq
      %v2117 = vshrl.u32 %v2116, 7
      %v2118 = vsub.s32 %v1183, %v2117
      %v2119 = vrot.slane %v2005, %v2118
      %v2120 = vlaneseq
      %v2121 = vshrl.u32 %v2120, 7
      %v2122 = vsub.s32 %v1183, %v2121
      %v2123 = vrot.slane %v2008, %v2122
      %v2124 = vlaneseq
      %v2125 = vshrl.u32 %v2124, 7
      %v2126 = vsub.s32 %v1183, %v2125
      %v2127 = vrot.slane %v2011, %v2126
      %v2128 = vlaneseq
      %v2129 = vshrl.u32 %v2128, 7
      %v2130 = vsub.s32 %v1183, %v2129
      %v2131 = vrot.slane %v2014, %v2130
      %v2132 = vlaneseq
      %v2133 = vshrl.u32 %v2132, 7
      %v2134 = vsub.s32 %v1183, %v2133
      %v2135 = vrot.slane %v2017, %v2134
      %v2136 = vlaneseq
      %v2137 = vshrl.u32 %v2136, 7
      %v2138 = vsub.s32 %v1183, %v2137
      %v2139 = vrot.slane %v2020, %v2138
      %v2140 = vlaneseq
      %v2141 = vshrl.u32 %v2140, 7
      %v2142 = vsub.s32 %v1183, %v2141
      %v2143 = vrot.slane %v2023, %v2142
      %v2144 = vlaneseq
      %v2145 = vshrl.u32 %v2144, 7
      %v2146 = vsub.s32 %v1183, %v2145
      %v2147 = vrot.slane %v2026, %v2146
      %v2148 = vlaneseq
      %v2149 = vshrl.u32 %v2148, 7
      %v2150 = vsub.s32 %v1183, %v2149
      %v2151 = vrot.slane %v2029, %v2150
      %v2152 = vlaneseq
      %v2153 = vshrl.u32 %v2152, 7
      %v2154 = vsub.s32 %v1183, %v2153
      %v2155 = vrot.slane %v2032, %v2154
      %v2156 = vlaneseq
      %v2157 = vshrl.u32 %v2156, 7
      %v2158 = vsub.s32 %v1183, %v2157
      %v2159 = vrot.slane %v2035, %v2158
      %v2160 = vlaneseq
      %v2161 = vshrl.u32 %v2160, 7
      %v2162 = vsub.s32 %v1183, %v2161
      %v2163 = vrot.slane %v2038, %v2162
      %v2164 = vlaneseq
      %v2165 = vshrl.u32 %v2164, 7
      %v2166 = vsub.s32 %v1183, %v2165
      %v2167 = vrot.slane %v2041, %v2166
      %v2168 = vlaneseq
      %v2169 = vshrl.u32 %v2168, 7
      %v2170 = vsub.s32 %v1183, %v2169
      %v2171 = vrot.slane %v2044, %v2170
      %v2172 = vlaneseq
      %v2173 = vshrl.u32 %v2172, 7
      %v2174 = vsub.s32 %v1183, %v2173
      %v2175 = vrot.slane %v2047, %v2174
      %v2176 = vsel %vm1312, %v2055, %v2051
      %v2177 = vsel %vm1314, %v2059, %v2176
      %v2178 = vsel %vm1316, %v2063, %v2177
      %v2179 = vsel %vm1318, %v2067, %v2178
      %v2180 = vsel %vm1320, %v2071, %v2179
      %v2181 = vsel %vm1322, %v2075, %v2180
      %v2182 = vsel %vm1324, %v2079, %v2181
      %v2183 = vsel %vm1312, %v2087, %v2083
      %v2184 = vsel %vm1314, %v2091, %v2183
      %v2185 = vsel %vm1316, %v2095, %v2184
      %v2186 = vsel %vm1318, %v2099, %v2185
      %v2187 = vsel %vm1320, %v2103, %v2186
      %v2188 = vsel %vm1322, %v2107, %v2187
      %v2189 = vsel %vm1324, %v2111, %v2188
      %v2190 = vsel %vm1312, %v2119, %v2115
      %v2191 = vsel %vm1314, %v2123, %v2190
      %v2192 = vsel %vm1316, %v2127, %v2191
      %v2193 = vsel %vm1318, %v2131, %v2192
      %v2194 = vsel %vm1320, %v2135, %v2193
      %v2195 = vsel %vm1322, %v2139, %v2194
      %v2196 = vsel %vm1324, %v2143, %v2195
      %v2197 = vsel %vm1312, %v2151, %v2147
      %v2198 = vsel %vm1314, %v2155, %v2197
      %v2199 = vsel %vm1316, %v2159, %v2198
      %v2200 = vsel %vm1318, %v2163, %v2199
      %v2201 = vsel %vm1320, %v2167, %v2200
      %v2202 = vsel %vm1322, %v2171, %v2201
      %v2203 = vsel %vm1324, %v2175, %v2202
      %v2208 = vsel %vm1351, %v2182, 0.0
      %2209 = vadd.xlane.f32.xlu0 %v2208
      %v2210 = vpop.xlane.xlu0 %2209
      %v2211 = vsel %vm1351, %v2189, 0.0
      %2212 = vadd.xlane.f32.xlu0 %v2211
      %v2213 = vpop.xlane.xlu0 %2212
      %v2214 = vsel %vm1351, %v2196, 0.0
      %2215 = vadd.xlane.f32.xlu0 %v2214
      %v2216 = vpop.xlane.xlu0 %2215
      %v2217 = vsel %vm1351, %v2203, 0.0
      %2218 = vadd.xlane.f32.xlu0 %v2217
      %v2219 = vpop.xlane.xlu0 %2218
      %v2220 = vsub.f32 0.0, %v1364
      %v2221 = vsub.f32 0.0, %v1365
      %v2222 = vsub.f32 0.0, %v1366
      %v2223 = vsub.f32 0.0, %v1367
      %v2224 = vmul.f32 %v2220, 1.442695
      %v2225 = vpow.pop %v2224
      %v2226 = vmul.f32 %v2221, 1.442695
      %v2227 = vpow.pop %v2226
      %v2228 = vmul.f32 %v2222, 1.442695
      %v2229 = vpow.pop %v2228
      %v2230 = vmul.f32 %v2223, 1.442695
      %v2231 = vpow.pop %v2230
      %v2232 = vmul.f32 %v2225, 1e-10
      %v2233 = vmul.f32 %v2227, 1e-10
      %v2234 = vmul.f32 %v2229, 1e-10
      %v2235 = vmul.f32 %v2231, 1e-10
      %v2236 = vadd.f32 %v2210, %v2232
      %v2237 = vadd.f32 %v2213, %v2233
      %v2238 = vadd.f32 %v2216, %v2234
      %v2239 = vadd.f32 %v2219, %v2235
      %v2244 = vlaneseq
      %v2245 = vshrl.u32 %v2244, 7
      %v2246 = vsub.s32 0, %v2245
      %v2247 = vrot.slane %v2236, %v2246
      %v2248 = vlaneseq
      %v2249 = vshrl.u32 %v2248, 7
      %v2250 = vsub.s32 1, %v2249
      %v2251 = vrot.slane %v2236, %v2250
      %v2252 = vlaneseq
      %v2253 = vshrl.u32 %v2252, 7
      %v2254 = vsub.s32 2, %v2253
      %v2255 = vrot.slane %v2236, %v2254
      %v2256 = vlaneseq
      %v2257 = vshrl.u32 %v2256, 7
      %v2258 = vsub.s32 3, %v2257
      %v2259 = vrot.slane %v2236, %v2258
      %v2260 = vlaneseq
      %v2261 = vshrl.u32 %v2260, 7
      %v2262 = vsub.s32 4, %v2261
      %v2263 = vrot.slane %v2236, %v2262
      %v2264 = vlaneseq
      %v2265 = vshrl.u32 %v2264, 7
      %v2266 = vsub.s32 5, %v2265
      %v2267 = vrot.slane %v2236, %v2266
      %v2268 = vlaneseq
      %v2269 = vshrl.u32 %v2268, 7
      %v2270 = vsub.s32 6, %v2269
      %v2271 = vrot.slane %v2236, %v2270
      %v2272 = vlaneseq
      %v2273 = vshrl.u32 %v2272, 7
      %v2274 = vsub.s32 7, %v2273
      %v2275 = vrot.slane %v2236, %v2274
      %v2276 = vlaneseq
      %v2277 = vshrl.u32 %v2276, 7
      %v2278 = vsub.s32 0, %v2277
      %v2279 = vrot.slane %v2237, %v2278
      %v2280 = vlaneseq
      %v2281 = vshrl.u32 %v2280, 7
      %v2282 = vsub.s32 1, %v2281
      %v2283 = vrot.slane %v2237, %v2282
      %v2284 = vlaneseq
      %v2285 = vshrl.u32 %v2284, 7
      %v2286 = vsub.s32 2, %v2285
      %v2287 = vrot.slane %v2237, %v2286
      %v2288 = vlaneseq
      %v2289 = vshrl.u32 %v2288, 7
      %v2290 = vsub.s32 3, %v2289
      %v2291 = vrot.slane %v2237, %v2290
      %v2292 = vlaneseq
      %v2293 = vshrl.u32 %v2292, 7
      %v2294 = vsub.s32 4, %v2293
      %v2295 = vrot.slane %v2237, %v2294
      %v2296 = vlaneseq
      %v2297 = vshrl.u32 %v2296, 7
      %v2298 = vsub.s32 5, %v2297
      %v2299 = vrot.slane %v2237, %v2298
      %v2300 = vlaneseq
      %v2301 = vshrl.u32 %v2300, 7
      %v2302 = vsub.s32 6, %v2301
      %v2303 = vrot.slane %v2237, %v2302
      %v2304 = vlaneseq
      %v2305 = vshrl.u32 %v2304, 7
      %v2306 = vsub.s32 7, %v2305
      %v2307 = vrot.slane %v2237, %v2306
      %v2308 = vlaneseq
      %v2309 = vshrl.u32 %v2308, 7
      %v2310 = vsub.s32 0, %v2309
      %v2311 = vrot.slane %v2238, %v2310
      %v2312 = vlaneseq
      %v2313 = vshrl.u32 %v2312, 7
      %v2314 = vsub.s32 1, %v2313
      %v2315 = vrot.slane %v2238, %v2314
      %v2316 = vlaneseq
      %v2317 = vshrl.u32 %v2316, 7
      %v2318 = vsub.s32 2, %v2317
      %v2319 = vrot.slane %v2238, %v2318
      %v2320 = vlaneseq
      %v2321 = vshrl.u32 %v2320, 7
      %v2322 = vsub.s32 3, %v2321
      %v2323 = vrot.slane %v2238, %v2322
      %v2324 = vlaneseq
      %v2325 = vshrl.u32 %v2324, 7
      %v2326 = vsub.s32 4, %v2325
      %v2327 = vrot.slane %v2238, %v2326
      %v2328 = vlaneseq
      %v2329 = vshrl.u32 %v2328, 7
      %v2330 = vsub.s32 5, %v2329
      %v2331 = vrot.slane %v2238, %v2330
      %v2332 = vlaneseq
      %v2333 = vshrl.u32 %v2332, 7
      %v2334 = vsub.s32 6, %v2333
      %v2335 = vrot.slane %v2238, %v2334
      %v2336 = vlaneseq
      %v2337 = vshrl.u32 %v2336, 7
      %v2338 = vsub.s32 7, %v2337
      %v2339 = vrot.slane %v2238, %v2338
      %v2340 = vlaneseq
      %v2341 = vshrl.u32 %v2340, 7
      %v2342 = vsub.s32 0, %v2341
      %v2343 = vrot.slane %v2239, %v2342
      %v2344 = vlaneseq
      %v2345 = vshrl.u32 %v2344, 7
      %v2346 = vsub.s32 1, %v2345
      %v2347 = vrot.slane %v2239, %v2346
      %v2348 = vlaneseq
      %v2349 = vshrl.u32 %v2348, 7
      %v2350 = vsub.s32 2, %v2349
      %v2351 = vrot.slane %v2239, %v2350
      %v2352 = vlaneseq
      %v2353 = vshrl.u32 %v2352, 7
      %v2354 = vsub.s32 3, %v2353
      %v2355 = vrot.slane %v2239, %v2354
      %v2356 = vlaneseq
      %v2357 = vshrl.u32 %v2356, 7
      %v2358 = vsub.s32 4, %v2357
      %v2359 = vrot.slane %v2239, %v2358
      %v2360 = vlaneseq
      %v2361 = vshrl.u32 %v2360, 7
      %v2362 = vsub.s32 5, %v2361
      %v2363 = vrot.slane %v2239, %v2362
      %v2364 = vlaneseq
      %v2365 = vshrl.u32 %v2364, 7
      %v2366 = vsub.s32 6, %v2365
      %v2367 = vrot.slane %v2239, %v2366
      %v2368 = vlaneseq
      %v2369 = vshrl.u32 %v2368, 7
      %v2370 = vsub.s32 7, %v2369
      %v2371 = vrot.slane %v2239, %v2370
      %v2404 = vrcp.pop %v2247
      %v2405 = vmul.f32 %v1888, %v2404
      %v2406 = vrcp.pop %v2251
      %v2407 = vmul.f32 %v1889, %v2406
      %v2408 = vrcp.pop %v2255
      %v2409 = vmul.f32 %v1890, %v2408
      %v2410 = vrcp.pop %v2259
      %v2411 = vmul.f32 %v1891, %v2410
      %v2412 = vrcp.pop %v2263
      %v2413 = vmul.f32 %v1892, %v2412
      %v2414 = vrcp.pop %v2267
      %v2415 = vmul.f32 %v1893, %v2414
      %v2416 = vrcp.pop %v2271
      %v2417 = vmul.f32 %v1894, %v2416
      %v2418 = vrcp.pop %v2275
      %v2419 = vmul.f32 %v1895, %v2418
      %v2420 = vrcp.pop %v2279
      %v2421 = vmul.f32 %v1896, %v2420
      %v2422 = vrcp.pop %v2283
      %v2423 = vmul.f32 %v1897, %v2422
      %v2424 = vrcp.pop %v2287
      %v2425 = vmul.f32 %v1898, %v2424
      %v2426 = vrcp.pop %v2291
      %v2427 = vmul.f32 %v1899, %v2426
      %v2428 = vrcp.pop %v2295
      %v2429 = vmul.f32 %v1900, %v2428
      %v2430 = vrcp.pop %v2299
      %v2431 = vmul.f32 %v1901, %v2430
      %v2432 = vrcp.pop %v2303
      %v2433 = vmul.f32 %v1902, %v2432
      %v2434 = vrcp.pop %v2307
      %v2435 = vmul.f32 %v1903, %v2434
      %v2436 = vrcp.pop %v2311
      %v2437 = vmul.f32 %v1904, %v2436
      %v2438 = vrcp.pop %v2315
      %v2439 = vmul.f32 %v1905, %v2438
      %v2440 = vrcp.pop %v2319
      %v2441 = vmul.f32 %v1906, %v2440
      %v2442 = vrcp.pop %v2323
      %v2443 = vmul.f32 %v1907, %v2442
      %v2444 = vrcp.pop %v2327
      %v2445 = vmul.f32 %v1908, %v2444
      %v2446 = vrcp.pop %v2331
      %v2447 = vmul.f32 %v1909, %v2446
      %v2448 = vrcp.pop %v2335
      %v2449 = vmul.f32 %v1910, %v2448
      %v2450 = vrcp.pop %v2339
      %v2451 = vmul.f32 %v1911, %v2450
      %v2452 = vrcp.pop %v2343
      %v2453 = vmul.f32 %v1912, %v2452
      %v2454 = vrcp.pop %v2347
      %v2455 = vmul.f32 %v1913, %v2454
      %v2456 = vrcp.pop %v2351
      %v2457 = vmul.f32 %v1914, %v2456
      %v2458 = vrcp.pop %v2355
      %v2459 = vmul.f32 %v1915, %v2458
      %v2460 = vrcp.pop %v2359
      %v2461 = vmul.f32 %v1916, %v2460
      %v2462 = vrcp.pop %v2363
      %v2463 = vmul.f32 %v1917, %v2462
      %v2464 = vrcp.pop %v2367
      %v2465 = vmul.f32 %v1918, %v2464
      %v2466 = vrcp.pop %v2371
      %v2467 = vmul.f32 %v1919, %v2466
      %2469 = vset.pattern.permute.xlu0 0
      %2470 = vperm.xlu0 %2469, %v2405
      %v2471 = vpop.permute.xlu0 %2470
      %2474 = vset.pattern.permute.xlu0 0
      %2475 = vperm.xlu0 %2474, %v2407
      %v2476 = vpop.permute.xlu0 %2475
      %2479 = vset.pattern.permute.xlu0 0
      %2480 = vperm.xlu0 %2479, %v2409
      %v2481 = vpop.permute.xlu0 %2480
      %2484 = vset.pattern.permute.xlu0 0
      %2485 = vperm.xlu0 %2484, %v2411
      %v2486 = vpop.permute.xlu0 %2485
      %2489 = vset.pattern.permute.xlu0 0
      %2490 = vperm.xlu0 %2489, %v2413
      %v2491 = vpop.permute.xlu0 %2490
      %2494 = vset.pattern.permute.xlu0 0
      %2495 = vperm.xlu0 %2494, %v2415
      %v2496 = vpop.permute.xlu0 %2495
      %2499 = vset.pattern.permute.xlu0 0
      %2500 = vperm.xlu0 %2499, %v2417
      %v2501 = vpop.permute.xlu0 %2500
      %2504 = vset.pattern.permute.xlu0 0
      %2505 = vperm.xlu0 %2504, %v2419
      %v2506 = vpop.permute.xlu0 %2505
      %2509 = vset.pattern.permute.xlu0 0
      %2510 = vperm.xlu0 %2509, %v2421
      %v2511 = vpop.permute.xlu0 %2510
      %2514 = vset.pattern.permute.xlu0 0
      %2515 = vperm.xlu0 %2514, %v2423
      %v2516 = vpop.permute.xlu0 %2515
      %2519 = vset.pattern.permute.xlu0 0
      %2520 = vperm.xlu0 %2519, %v2425
      %v2521 = vpop.permute.xlu0 %2520
      %2524 = vset.pattern.permute.xlu0 0
      %2525 = vperm.xlu0 %2524, %v2427
      %v2526 = vpop.permute.xlu0 %2525
      %2529 = vset.pattern.permute.xlu0 0
      %2530 = vperm.xlu0 %2529, %v2429
      %v2531 = vpop.permute.xlu0 %2530
      %2534 = vset.pattern.permute.xlu0 0
      %2535 = vperm.xlu0 %2534, %v2431
      %v2536 = vpop.permute.xlu0 %2535
      %2539 = vset.pattern.permute.xlu0 0
      %2540 = vperm.xlu0 %2539, %v2433
      %v2541 = vpop.permute.xlu0 %2540
      %2544 = vset.pattern.permute.xlu0 0
      %2545 = vperm.xlu0 %2544, %v2435
      %v2546 = vpop.permute.xlu0 %2545
      %2549 = vset.pattern.permute.xlu0 0
      %2550 = vperm.xlu0 %2549, %v2437
      %v2551 = vpop.permute.xlu0 %2550
      %2554 = vset.pattern.permute.xlu0 0
      %2555 = vperm.xlu0 %2554, %v2439
      %v2556 = vpop.permute.xlu0 %2555
      %2559 = vset.pattern.permute.xlu0 0
      %2560 = vperm.xlu0 %2559, %v2441
      %v2561 = vpop.permute.xlu0 %2560
      %2564 = vset.pattern.permute.xlu0 0
      %2565 = vperm.xlu0 %2564, %v2443
      %v2566 = vpop.permute.xlu0 %2565
      %2569 = vset.pattern.permute.xlu0 0
      %2570 = vperm.xlu0 %2569, %v2445
      %v2571 = vpop.permute.xlu0 %2570
      %2574 = vset.pattern.permute.xlu0 0
      %2575 = vperm.xlu0 %2574, %v2447
      %v2576 = vpop.permute.xlu0 %2575
      %2579 = vset.pattern.permute.xlu0 0
      %2580 = vperm.xlu0 %2579, %v2449
      %v2581 = vpop.permute.xlu0 %2580
      %2584 = vset.pattern.permute.xlu0 0
      %2585 = vperm.xlu0 %2584, %v2451
      %v2586 = vpop.permute.xlu0 %2585
      %2589 = vset.pattern.permute.xlu0 0
      %2590 = vperm.xlu0 %2589, %v2453
      %v2591 = vpop.permute.xlu0 %2590
      %2594 = vset.pattern.permute.xlu0 0
      %2595 = vperm.xlu0 %2594, %v2455
      %v2596 = vpop.permute.xlu0 %2595
      %2599 = vset.pattern.permute.xlu0 0
      %2600 = vperm.xlu0 %2599, %v2457
      %v2601 = vpop.permute.xlu0 %2600
      %2604 = vset.pattern.permute.xlu0 0
      %2605 = vperm.xlu0 %2604, %v2459
      %v2606 = vpop.permute.xlu0 %2605
      %2609 = vset.pattern.permute.xlu0 0
      %2610 = vperm.xlu0 %2609, %v2461
      %v2611 = vpop.permute.xlu0 %2610
      %2614 = vset.pattern.permute.xlu0 0
      %2615 = vperm.xlu0 %2614, %v2463
      %v2616 = vpop.permute.xlu0 %2615
      %2619 = vset.pattern.permute.xlu0 0
      %2620 = vperm.xlu0 %2619, %v2465
      %v2621 = vpop.permute.xlu0 %2620
      %2624 = vset.pattern.permute.xlu0 0
      %2625 = vperm.xlu0 %2624, %v2467
      %v2626 = vpop.permute.xlu0 %2625
      %v2628 = vmul.f32 %v2471, %v415
      %v2629 = vmul.f32 %v2476, %v416
      %v2630 = vmul.f32 %v2481, %v417
      %v2631 = vmul.f32 %v2486, %v418
      %v2632 = vmul.f32 %v2491, %v419
      %v2633 = vmul.f32 %v2496, %v420
      %v2634 = vmul.f32 %v2501, %v421
      %v2635 = vmul.f32 %v2506, %v422
      %v2636 = vmul.f32 %v2511, %v423
      %v2637 = vmul.f32 %v2516, %v424
      %v2638 = vmul.f32 %v2521, %v425
      %v2639 = vmul.f32 %v2526, %v426
      %v2640 = vmul.f32 %v2531, %v427
      %v2641 = vmul.f32 %v2536, %v428
      %v2642 = vmul.f32 %v2541, %v429
      %v2643 = vmul.f32 %v2546, %v430
      %v2644 = vmul.f32 %v2551, %v431
      %v2645 = vmul.f32 %v2556, %v432
      %v2646 = vmul.f32 %v2561, %v433
      %v2647 = vmul.f32 %v2566, %v434
      %v2648 = vmul.f32 %v2571, %v435
      %v2649 = vmul.f32 %v2576, %v436
      %v2650 = vmul.f32 %v2581, %v437
      %v2651 = vmul.f32 %v2586, %v438
      %v2652 = vmul.f32 %v2591, %v439
      %v2653 = vmul.f32 %v2596, %v440
      %v2654 = vmul.f32 %v2601, %v441
      %v2655 = vmul.f32 %v2606, %v442
      %v2656 = vmul.f32 %v2611, %v443
      %v2657 = vmul.f32 %v2616, %v444
      %v2658 = vmul.f32 %v2621, %v445
      %v2659 = vmul.f32 %v2626, %v446
      %v2660 = vsel %vm639, %v2628, 0.0
      %v2661 = vrot.slane %v2660, 4
      %v2662 = vadd.f32 %v2660, %v2661
      %v2663 = vrot.slane %v2662, 2
      %v2664 = vadd.f32 %v2662, %v2663
      %v2665 = vrot.slane %v2664, 1
      %v2666 = vadd.f32 %v2664, %v2665
      %v2667 = vsel %vm639, %v2629, 0.0
      %v2668 = vrot.slane %v2667, 4
      %v2669 = vadd.f32 %v2667, %v2668
      %v2670 = vrot.slane %v2669, 2
      %v2671 = vadd.f32 %v2669, %v2670
      %v2672 = vrot.slane %v2671, 1
      %v2673 = vadd.f32 %v2671, %v2672
      %v2674 = vsel %vm639, %v2630, 0.0
      %v2675 = vrot.slane %v2674, 4
      %v2676 = vadd.f32 %v2674, %v2675
      %v2677 = vrot.slane %v2676, 2
      %v2678 = vadd.f32 %v2676, %v2677
      %v2679 = vrot.slane %v2678, 1
      %v2680 = vadd.f32 %v2678, %v2679
      %v2681 = vsel %vm639, %v2631, 0.0
      %v2682 = vrot.slane %v2681, 4
      %v2683 = vadd.f32 %v2681, %v2682
      %v2684 = vrot.slane %v2683, 2
      %v2685 = vadd.f32 %v2683, %v2684
      %v2686 = vrot.slane %v2685, 1
      %v2687 = vadd.f32 %v2685, %v2686
      %v2688 = vsel %vm639, %v2632, 0.0
      %v2689 = vrot.slane %v2688, 4
      %v2690 = vadd.f32 %v2688, %v2689
      %v2691 = vrot.slane %v2690, 2
      %v2692 = vadd.f32 %v2690, %v2691
      %v2693 = vrot.slane %v2692, 1
      %v2694 = vadd.f32 %v2692, %v2693
      %v2695 = vsel %vm639, %v2633, 0.0
      %v2696 = vrot.slane %v2695, 4
      %v2697 = vadd.f32 %v2695, %v2696
      %v2698 = vrot.slane %v2697, 2
      %v2699 = vadd.f32 %v2697, %v2698
      %v2700 = vrot.slane %v2699, 1
      %v2701 = vadd.f32 %v2699, %v2700
      %v2702 = vsel %vm639, %v2634, 0.0
      %v2703 = vrot.slane %v2702, 4
      %v2704 = vadd.f32 %v2702, %v2703
      %v2705 = vrot.slane %v2704, 2
      %v2706 = vadd.f32 %v2704, %v2705
      %v2707 = vrot.slane %v2706, 1
      %v2708 = vadd.f32 %v2706, %v2707
      %v2709 = vsel %vm639, %v2635, 0.0
      %v2710 = vrot.slane %v2709, 4
      %v2711 = vadd.f32 %v2709, %v2710
      %v2712 = vrot.slane %v2711, 2
      %v2713 = vadd.f32 %v2711, %v2712
      %v2714 = vrot.slane %v2713, 1
      %v2715 = vadd.f32 %v2713, %v2714
      %v2716 = vsel %vm639, %v2636, 0.0
      %v2717 = vrot.slane %v2716, 4
      %v2718 = vadd.f32 %v2716, %v2717
      %v2719 = vrot.slane %v2718, 2
      %v2720 = vadd.f32 %v2718, %v2719
      %v2721 = vrot.slane %v2720, 1
      %v2722 = vadd.f32 %v2720, %v2721
      %v2723 = vsel %vm639, %v2637, 0.0
      %v2724 = vrot.slane %v2723, 4
      %v2725 = vadd.f32 %v2723, %v2724
      %v2726 = vrot.slane %v2725, 2
      %v2727 = vadd.f32 %v2725, %v2726
      %v2728 = vrot.slane %v2727, 1
      %v2729 = vadd.f32 %v2727, %v2728
      %v2730 = vsel %vm639, %v2638, 0.0
      %v2731 = vrot.slane %v2730, 4
      %v2732 = vadd.f32 %v2730, %v2731
      %v2733 = vrot.slane %v2732, 2
      %v2734 = vadd.f32 %v2732, %v2733
      %v2735 = vrot.slane %v2734, 1
      %v2736 = vadd.f32 %v2734, %v2735
      %v2737 = vsel %vm639, %v2639, 0.0
      %v2738 = vrot.slane %v2737, 4
      %v2739 = vadd.f32 %v2737, %v2738
      %v2740 = vrot.slane %v2739, 2
      %v2741 = vadd.f32 %v2739, %v2740
      %v2742 = vrot.slane %v2741, 1
      %v2743 = vadd.f32 %v2741, %v2742
      %v2744 = vsel %vm639, %v2640, 0.0
      %v2745 = vrot.slane %v2744, 4
      %v2746 = vadd.f32 %v2744, %v2745
      %v2747 = vrot.slane %v2746, 2
      %v2748 = vadd.f32 %v2746, %v2747
      %v2749 = vrot.slane %v2748, 1
      %v2750 = vadd.f32 %v2748, %v2749
      %v2751 = vsel %vm639, %v2641, 0.0
      %v2752 = vrot.slane %v2751, 4
      %v2753 = vadd.f32 %v2751, %v2752
      %v2754 = vrot.slane %v2753, 2
      %v2755 = vadd.f32 %v2753, %v2754
      %v2756 = vrot.slane %v2755, 1
      %v2757 = vadd.f32 %v2755, %v2756
      %v2758 = vsel %vm639, %v2642, 0.0
      %v2759 = vrot.slane %v2758, 4
      %v2760 = vadd.f32 %v2758, %v2759
      %v2761 = vrot.slane %v2760, 2
      %v2762 = vadd.f32 %v2760, %v2761
      %v2763 = vrot.slane %v2762, 1
      %v2764 = vadd.f32 %v2762, %v2763
      %v2765 = vsel %vm639, %v2643, 0.0
      %v2766 = vrot.slane %v2765, 4
      %v2767 = vadd.f32 %v2765, %v2766
      %v2768 = vrot.slane %v2767, 2
      %v2769 = vadd.f32 %v2767, %v2768
      %v2770 = vrot.slane %v2769, 1
      %v2771 = vadd.f32 %v2769, %v2770
      %v2772 = vsel %vm639, %v2644, 0.0
      %v2773 = vrot.slane %v2772, 4
      %v2774 = vadd.f32 %v2772, %v2773
      %v2775 = vrot.slane %v2774, 2
      %v2776 = vadd.f32 %v2774, %v2775
      %v2777 = vrot.slane %v2776, 1
      %v2778 = vadd.f32 %v2776, %v2777
      %v2779 = vsel %vm639, %v2645, 0.0
      %v2780 = vrot.slane %v2779, 4
      %v2781 = vadd.f32 %v2779, %v2780
      %v2782 = vrot.slane %v2781, 2
      %v2783 = vadd.f32 %v2781, %v2782
      %v2784 = vrot.slane %v2783, 1
      %v2785 = vadd.f32 %v2783, %v2784
      %v2786 = vsel %vm639, %v2646, 0.0
      %v2787 = vrot.slane %v2786, 4
      %v2788 = vadd.f32 %v2786, %v2787
      %v2789 = vrot.slane %v2788, 2
      %v2790 = vadd.f32 %v2788, %v2789
      %v2791 = vrot.slane %v2790, 1
      %v2792 = vadd.f32 %v2790, %v2791
      %v2793 = vsel %vm639, %v2647, 0.0
      %v2794 = vrot.slane %v2793, 4
      %v2795 = vadd.f32 %v2793, %v2794
      %v2796 = vrot.slane %v2795, 2
      %v2797 = vadd.f32 %v2795, %v2796
      %v2798 = vrot.slane %v2797, 1
      %v2799 = vadd.f32 %v2797, %v2798
      %v2800 = vsel %vm639, %v2648, 0.0
      %v2801 = vrot.slane %v2800, 4
      %v2802 = vadd.f32 %v2800, %v2801
      %v2803 = vrot.slane %v2802, 2
      %v2804 = vadd.f32 %v2802, %v2803
      %v2805 = vrot.slane %v2804, 1
      %v2806 = vadd.f32 %v2804, %v2805
      %v2807 = vsel %vm639, %v2649, 0.0
      %v2808 = vrot.slane %v2807, 4
      %v2809 = vadd.f32 %v2807, %v2808
      %v2810 = vrot.slane %v2809, 2
      %v2811 = vadd.f32 %v2809, %v2810
      %v2812 = vrot.slane %v2811, 1
      %v2813 = vadd.f32 %v2811, %v2812
      %v2814 = vsel %vm639, %v2650, 0.0
      %v2815 = vrot.slane %v2814, 4
      %v2816 = vadd.f32 %v2814, %v2815
      %v2817 = vrot.slane %v2816, 2
      %v2818 = vadd.f32 %v2816, %v2817
      %v2819 = vrot.slane %v2818, 1
      %v2820 = vadd.f32 %v2818, %v2819
      %v2821 = vsel %vm639, %v2651, 0.0
      %v2822 = vrot.slane %v2821, 4
      %v2823 = vadd.f32 %v2821, %v2822
      %v2824 = vrot.slane %v2823, 2
      %v2825 = vadd.f32 %v2823, %v2824
      %v2826 = vrot.slane %v2825, 1
      %v2827 = vadd.f32 %v2825, %v2826
      %v2828 = vsel %vm639, %v2652, 0.0
      %v2829 = vrot.slane %v2828, 4
      %v2830 = vadd.f32 %v2828, %v2829
      %v2831 = vrot.slane %v2830, 2
      %v2832 = vadd.f32 %v2830, %v2831
      %v2833 = vrot.slane %v2832, 1
      %v2834 = vadd.f32 %v2832, %v2833
      %v2835 = vsel %vm639, %v2653, 0.0
      %v2836 = vrot.slane %v2835, 4
      %v2837 = vadd.f32 %v2835, %v2836
      %v2838 = vrot.slane %v2837, 2
      %v2839 = vadd.f32 %v2837, %v2838
      %v2840 = vrot.slane %v2839, 1
      %v2841 = vadd.f32 %v2839, %v2840
      %v2842 = vsel %vm639, %v2654, 0.0
      %v2843 = vrot.slane %v2842, 4
      %v2844 = vadd.f32 %v2842, %v2843
      %v2845 = vrot.slane %v2844, 2
      %v2846 = vadd.f32 %v2844, %v2845
      %v2847 = vrot.slane %v2846, 1
      %v2848 = vadd.f32 %v2846, %v2847
      %v2849 = vsel %vm639, %v2655, 0.0
      %v2850 = vrot.slane %v2849, 4
      %v2851 = vadd.f32 %v2849, %v2850
      %v2852 = vrot.slane %v2851, 2
      %v2853 = vadd.f32 %v2851, %v2852
      %v2854 = vrot.slane %v2853, 1
      %v2855 = vadd.f32 %v2853, %v2854
      %v2856 = vsel %vm639, %v2656, 0.0
      %v2857 = vrot.slane %v2856, 4
      %v2858 = vadd.f32 %v2856, %v2857
      %v2859 = vrot.slane %v2858, 2
      %v2860 = vadd.f32 %v2858, %v2859
      %v2861 = vrot.slane %v2860, 1
      %v2862 = vadd.f32 %v2860, %v2861
      %v2863 = vsel %vm639, %v2657, 0.0
      %v2864 = vrot.slane %v2863, 4
      %v2865 = vadd.f32 %v2863, %v2864
      %v2866 = vrot.slane %v2865, 2
      %v2867 = vadd.f32 %v2865, %v2866
      %v2868 = vrot.slane %v2867, 1
      %v2869 = vadd.f32 %v2867, %v2868
      %v2870 = vsel %vm639, %v2658, 0.0
      %v2871 = vrot.slane %v2870, 4
      %v2872 = vadd.f32 %v2870, %v2871
      %v2873 = vrot.slane %v2872, 2
      %v2874 = vadd.f32 %v2872, %v2873
      %v2875 = vrot.slane %v2874, 1
      %v2876 = vadd.f32 %v2874, %v2875
      %v2877 = vsel %vm639, %v2659, 0.0
      %v2878 = vrot.slane %v2877, 4
      %v2879 = vadd.f32 %v2877, %v2878
      %v2880 = vrot.slane %v2879, 2
      %v2881 = vadd.f32 %v2879, %v2880
      %v2882 = vrot.slane %v2881, 1
      %v2883 = vadd.f32 %v2881, %v2882
      %v2884 = vpack.c.bf16 %v2666, %v2666
      %v2885 = vpack.c.bf16 %v2673, %v2673
      %v2886 = vpack.c.bf16 %v2680, %v2680
      %v2887 = vpack.c.bf16 %v2687, %v2687
      %v2888 = vpack.c.bf16 %v2694, %v2694
      %v2889 = vpack.c.bf16 %v2701, %v2701
      %v2890 = vpack.c.bf16 %v2708, %v2708
      %v2891 = vpack.c.bf16 %v2715, %v2715
      %v2892 = vpack.c.bf16 %v2722, %v2722
      %v2893 = vpack.c.bf16 %v2729, %v2729
      %v2894 = vpack.c.bf16 %v2736, %v2736
      %v2895 = vpack.c.bf16 %v2743, %v2743
      %v2896 = vpack.c.bf16 %v2750, %v2750
      %v2897 = vpack.c.bf16 %v2757, %v2757
      %v2898 = vpack.c.bf16 %v2764, %v2764
      %v2899 = vpack.c.bf16 %v2771, %v2771
      %v2900 = vpack.c.bf16 %v2778, %v2778
      %v2901 = vpack.c.bf16 %v2785, %v2785
      %v2902 = vpack.c.bf16 %v2792, %v2792
      %v2903 = vpack.c.bf16 %v2799, %v2799
      %v2904 = vpack.c.bf16 %v2806, %v2806
      %v2905 = vpack.c.bf16 %v2813, %v2813
      %v2906 = vpack.c.bf16 %v2820, %v2820
      %v2907 = vpack.c.bf16 %v2827, %v2827
      %v2908 = vpack.c.bf16 %v2834, %v2834
      %v2909 = vpack.c.bf16 %v2841, %v2841
      %v2910 = vpack.c.bf16 %v2848, %v2848
      %v2911 = vpack.c.bf16 %v2855, %v2855
      %v2912 = vpack.c.bf16 %v2862, %v2862
      %v2913 = vpack.c.bf16 %v2869, %v2869
      %v2914 = vpack.c.bf16 %v2876, %v2876
      %v2915 = vpack.c.bf16 %v2883, %v2883
      %v2916 = vld [vmem:[%s7] sm:$0xf]
      %v2917 = vld [vmem:[%s7 + $0x4] sm:$0xf]
      %v2918 = vld [vmem:[%s7 + $0x8] sm:$0xf]
      %v2919 = vld [vmem:[%s7 + $0xc] sm:$0xf]
      %v2920 = vld [vmem:[%s8] sm:$0x1]
      %v2922 = vlaneseq
      %v2923 = vshrl.u32 %v2922, 7
      %v2924 = vsub.s32 0, %v2923
      %v2925 = vrot.slane %v2920, %v2924
      %v2959 = vunpack.c.l.b16 %v2884
      %v2960 = vunpack.c.l.b16 %v2885
      %v2961 = vunpack.c.l.b16 %v2886
      %v2962 = vunpack.c.l.b16 %v2887
      %v2963 = vunpack.c.l.b16 %v2888
      %v2964 = vunpack.c.l.b16 %v2889
      %v2965 = vunpack.c.l.b16 %v2890
      %v2966 = vunpack.c.l.b16 %v2891
      %v2967 = vunpack.c.l.b16 %v2892
      %v2968 = vunpack.c.l.b16 %v2893
      %v2969 = vunpack.c.l.b16 %v2894
      %v2970 = vunpack.c.l.b16 %v2895
      %v2971 = vunpack.c.l.b16 %v2896
      %v2972 = vunpack.c.l.b16 %v2897
      %v2973 = vunpack.c.l.b16 %v2898
      %v2974 = vunpack.c.l.b16 %v2899
      %v2975 = vunpack.c.l.b16 %v2900
      %v2976 = vunpack.c.l.b16 %v2901
      %v2977 = vunpack.c.l.b16 %v2902
      %v2978 = vunpack.c.l.b16 %v2903
      %v2979 = vunpack.c.l.b16 %v2904
      %v2980 = vunpack.c.l.b16 %v2905
      %v2981 = vunpack.c.l.b16 %v2906
      %v2982 = vunpack.c.l.b16 %v2907
      %v2983 = vunpack.c.l.b16 %v2908
      %v2984 = vunpack.c.l.b16 %v2909
      %v2985 = vunpack.c.l.b16 %v2910
      %v2986 = vunpack.c.l.b16 %v2911
      %v2987 = vunpack.c.l.b16 %v2912
      %v2988 = vunpack.c.l.b16 %v2913
      %v2989 = vunpack.c.l.b16 %v2914
      %v2990 = vunpack.c.l.b16 %v2915
      %v2991 = vsel %vm1312, %v2960, %v2959
      %v2992 = vsel %vm1314, %v2961, %v2991
      %v2993 = vsel %vm1316, %v2962, %v2992
      %v2994 = vsel %vm1318, %v2963, %v2993
      %v2995 = vsel %vm1320, %v2964, %v2994
      %v2996 = vsel %vm1322, %v2965, %v2995
      %v2997 = vsel %vm1324, %v2966, %v2996
      %v2998 = vsel %vm1312, %v2968, %v2967
      %v2999 = vsel %vm1314, %v2969, %v2998
      %v3000 = vsel %vm1316, %v2970, %v2999
      %v3001 = vsel %vm1318, %v2971, %v3000
      %v3002 = vsel %vm1320, %v2972, %v3001
      %v3003 = vsel %vm1322, %v2973, %v3002
      %v3004 = vsel %vm1324, %v2974, %v3003
      %v3005 = vsel %vm1312, %v2976, %v2975
      %v3006 = vsel %vm1314, %v2977, %v3005
      %v3007 = vsel %vm1316, %v2978, %v3006
      %v3008 = vsel %vm1318, %v2979, %v3007
      %v3009 = vsel %vm1320, %v2980, %v3008
      %v3010 = vsel %vm1322, %v2981, %v3009
      %v3011 = vsel %vm1324, %v2982, %v3010
      %v3012 = vsel %vm1312, %v2984, %v2983
      %v3013 = vsel %vm1314, %v2985, %v3012
      %v3014 = vsel %vm1316, %v2986, %v3013
      %v3015 = vsel %vm1318, %v2987, %v3014
      %v3016 = vsel %vm1320, %v2988, %v3015
      %v3017 = vsel %vm1322, %v2989, %v3016
      %v3018 = vsel %vm1324, %v2990, %v3017
      %v3019 = vpack.c.b16 %v3004, %v2997
      %v3020 = vpack.c.b16 %v3018, %v3011
      %v3025 = vunpack.c.l.b16 %v2916
      %v3026 = vunpack.c.l.b16 %v2917
      %v3027 = vunpack.c.l.b16 %v2918
      %v3028 = vunpack.c.l.b16 %v2919
      %v3029 = vpack.c.b16 %v3026, %v3025
      %v3030 = vpack.c.b16 %v3028, %v3027
      %v3034 = vsel %vm639, %v3019, 0
      %v3037 = vsel %vm639, %v3020, 0
      %3039 = vmatprep.subr.bf16.mxu0 0
      %3040 = vmatpush1.bf16.msra.mxu0 0
      %3041 = vmatprep.subr.bf16.mxu0 0
      %3042 = vmatpush1.bf16.msra.mxu0 0
      %3043 = vmatprep.subr.bf16.mxu0 0
      %3044 = vmatpush1.bf16.msra.mxu0 0
      %3045 = vmatprep.subr.bf16.mxu0 0
      %3046 = vmatpush1.bf16.msra.mxu0 0
      %3047 = vmatprep.subr.bf16.mxu0 0
      %3048 = vmatpush1.bf16.msra.mxu0 0
      %3049 = vmatprep.subr.bf16.mxu0 0
      %3050 = vmatpush1.bf16.msra.mxu0 0
      %3051 = vmatprep.subr.bf16.mxu0 0
      %3052 = vmatpush1.bf16.msra.mxu0 %v3030
      %3053 = vmatprep.subr.bf16.mxu0 0
      %3054 = vmatpush1.bf16.msra.mxu0 %v3029
      %3055 = vmatprep.subr.bf16.mxu0 0
      %3056 = vmatpush2.bf16.msra.mxu0 0
      %3057 = vmatprep.subr.bf16.mxu0 0
      %3058 = vmatpush2.bf16.msra.mxu0 0
      %3059 = vmatprep.subr.bf16.mxu0 0
      %3060 = vmatpush2.bf16.msra.mxu0 0
      %3061 = vmatprep.subr.bf16.mxu0 0
      %3062 = vmatpush2.bf16.msra.mxu0 0
      %3063 = vmatprep.subr.bf16.mxu0 0
      %3064 = vmatpush2.bf16.msra.mxu0 0
      %3065 = vmatprep.subr.bf16.mxu0 0
      %3066 = vmatpush2.bf16.msra.mxu0 0
      %3067 = vmatprep.subr.bf16.mxu0 0
      %3068 = vmatpush2.bf16.msra.mxu0 0
      %3069 = vmatprep.subr.bf16.mxu0 0
      %3070 = vmatpush2.bf16.msra.mxu0 0
      %3071 = vmatprep.mubr.bf16.mxu0 0
      %3072 = vmatmul.mubr.bf16.gmra.mxu0 %v3034
      %v3073 = vpop.f32.mrf.mxu0
      %v3074 = vadd.f32 %v2925, %v3073
      %v3075 = vpop.f32.mrf.mxu0
      %v3076 = vpop.f32.mrf.mxu0
      %v3077 = vadd.f32 %v2925, %v3076
      %v3078 = vpop.f32.mrf.mxu0
      %3079 = vmatprep.mubr.bf16.mxu0 0
      %3080 = vmatmul.mubr.bf16.gmra.mxu0 %v3037
      %v3081 = vpop.f32.mrf.mxu0
      %v3082 = vadd.f32 %v2925, %v3081
      %v3083 = vpop.f32.mrf.mxu0
      %v3084 = vpop.f32.mrf.mxu0
      %v3085 = vadd.f32 %v2925, %v3084
      %v3086 = vpop.f32.mrf.mxu0
      %3087 = vdwg.mxu0
      %v3088 = vmax.f32 %v3074, 0.0
      %v3089 = vmax.f32 %v3077, 0.0
      %v3090 = vmax.f32 %v3082, 0.0
      %v3091 = vmax.f32 %v3085, 0.0
      %v3092 = vpack.c.bf16 %v3089, %v3088
      %v3093 = vpack.c.bf16 %v3091, %v3090
      %v3096 = vunpack.c.l.b16 %v3092
      %v3097 = vunpack.c.h.b16 %v3092
      %v3098 = vunpack.c.l.b16 %v3093
      %v3099 = vunpack.c.h.b16 %v3093
      %v3100 = vpack.c.b16 %v3096, %v3096
      %v3101 = vpack.c.b16 %v3097, %v3097
      %v3102 = vpack.c.b16 %v3098, %v3098
      %v3103 = vpack.c.b16 %v3099, %v3099
      %vm3108 = vcmask 257024
      %3109 = vst.msk [vmem:[%s380] sm:$0xf] %vm3108, %v3100
      %3110 = vst.msk [vmem:[%s380 + $0x4] sm:$0xf] %vm3108, %v3101
      %3111 = vst.msk [vmem:[%s380 + $0x8] sm:$0xf] %vm3108, %v3102
      %3112 = vst.msk [vmem:[%s380 + $0xc] sm:$0xf] %vm3108, %v3103
      %s3113 = smul.u32 4, %s22
      %p3114 = scmp.lt.s32.totalorder %s3113, 7
      %s3115 = scalar_select %p3114, %s3113, 7
      %s3116 = smul.addr %s3115, 4
      %s3117 = scalar_lea.vmem %s9, %s3116
      // Predicated region
      $region57: #{graphrec_forward.7} parent=55 // pred_check
        %p3118 = pneg %p244
      $region58: #{graphrec_forward.7} parent=55 // pred_check_branch
        %3120 = sbr.rel (%p3118) target = $region60
      $region59: #{graphrec_forward.7} parent=55 // pred_region
        %s3121 = smul.u32 4, %s22
      $region60: #{graphrec_forward.7} parent=55 // pred_fallthru
        _
    $region56: #{graphrec_forward.7} parent=5 // pred_fallthru
      _
    %p3122 = scmp.le.s32.totalorder 2, %s17
    // Predicated region
    $region61: #{graphrec_forward.7} parent=5 // pred_check
      %p3123 = pneg %p3122
    $region62: #{graphrec_forward.7} parent=5 // pred_check_branch
      %3125 = sbr.rel (%p3123) target = $region64
    $region63: #{graphrec_forward.7} parent=5 // pred_region
      %s3126 = ssub.s32 %s17, 2
      // Predicated region
      $region65: #{graphrec_forward.7} parent=63 // pred_check
        %p3127 = pneg %p250
      $region66: #{graphrec_forward.7} parent=63 // pred_check_branch
        %3129 = sbr.rel (%p3127) target = $region68
      $region67: #{graphrec_forward.7} parent=63 // pred_region
        %s3130 = smul.u32 4, %s23
        %p3131 = scmp.lt.s32.totalorder %s3130, 7
        %s3132 = scalar_select %p3131, %s3130, 7
        %s3133 = smul.addr %s3132, 4
        %s3134 = scalar_lea.vmem %s9, %s3133
      $region68: #{graphrec_forward.7} parent=63 // pred_fallthru
        _
    $region64: #{graphrec_forward.7} parent=5 // pred_fallthru
      _
  $region6: #{graphrec_forward.7} parent=0 // loop_footer
    %s21 = sadd.s32 1, %s17
  $region7: #{graphrec_forward.7} parent=0 // loop_footer_branch
    %16 = sbr.rel target = $region3
  $region8: #{graphrec_forward.7} parent=0 // loop_exit
    _

</llo_original>
